<compile_context>
chip_gen: v7x
topology: tpu7x:2x2x1
jax: 0.10.0
libtpu: 0.0.40
codegen_flags: <defaults>
</compile_context>

<pallas_src>
import functools

import jax
import jax.numpy as jnp
from jax import lax
from jax.experimental import pallas as pl
from jax.experimental.pallas import tpu as pltpu


def _round_up(x, m):
    return (x + m - 1) // m * m


def _default_fuse_hh():
    """Fuse the per-step fwd/bwd recurrent matmuls into one K=2Hp block-diag
    matmul on v6e/v7x (256x256 MXU); keep two independent K=Hp matmuls on v5e
    (4 independent 128x128 MXUs)."""
    try:
        kind = jax.devices()[0].device_kind.lower()
    except Exception:  # pragma: no cover
        return True
    return "v5" not in kind


def encoder_kernel(embf_ref, embb_ref, wih_f_ref, wih_b_ref, bxf_ref, bxb_ref,
                   whh_ref, bhhn_f_ref, bhhn_b_ref,
                   wfc_f_ref, wfc_b_ref, bfc_ref,
                   outf_ref, outb_ref, hid_ref,
                   gxf_ref, gxb_ref, h_ref,
                   *, fuse_hh, unroll):
    Ts, Bp, Hp = outf_ref.shape
    Ep = embf_ref.shape[-1]
    mat_dt = wih_f_ref.dtype

    g = pl.program_id(0)
    last = pl.num_programs(0) - 1

    @pl.when(g == 0)
    def _():
        h_ref[...] = jnp.zeros_like(h_ref)
        hid_ref[...] = jnp.zeros_like(hid_ref)

    # ---- time-parallel per-chunk input projections (MXU, off the serial path).
    # bx already contains b_ih (all gates) + b_hh (r,z gates); b_hn stays inside
    # the r-multiply.
    embf = embf_ref[...].reshape(Ts * Bp, Ep)
    embb = embb_ref[...].reshape(Ts * Bp, Ep)
    gxf = jnp.dot(embf, wih_f_ref[...],
                  preferred_element_type=jnp.float32) + bxf_ref[...]
    gxb = jnp.dot(embb, wih_b_ref[...],
                  preferred_element_type=jnp.float32) + bxb_ref[...]
    gxf_ref[...] = gxf.reshape(Ts, Bp, 3 * Hp)
    gxb_ref[...] = gxb.reshape(Ts, Bp, 3 * Hp)

    # Hoisted bias broadcasts (tiny; avoids a broadcast_in_dim per loop iter).
    bhhn_f = jnp.broadcast_to(bhhn_f_ref[...], (Bp, Hp))
    bhhn_b = jnp.broadcast_to(bhhn_b_ref[...], (Bp, Hp))

    def gru_update(gx, gh, h, bhhn):
        # PyTorch gate order r, z, n; gate slices are 128-lane aligned.
        rz = jax.nn.sigmoid(gx[:, :2 * Hp] + gh[:, :2 * Hp])      # fused r,z
        r, z = rz[:, :Hp], rz[:, Hp:]
        n = jnp.tanh(gx[:, 2 * Hp:] + r * (gh[:, 2 * Hp:] + bhhn))
        return n + z * (h - n)                                    # == (1-z)n + zh

    # ---- interleaved fwd/bwd recurrence over this time chunk -----------------
    def body(t, carry):
        h_f, h_b = carry
        tb = Ts - 1 - t
        gx_f = gxf_ref[t]                 # (Bp, 3Hp)
        gx_b = gxb_ref[tb]
        if fuse_hh:
            hcat = jnp.concatenate([h_f, h_b], axis=1).astype(mat_dt)
            gh = jnp.dot(hcat, whh_ref[...],
                         preferred_element_type=jnp.float32)      # (Bp, 6Hp)
            gh_f, gh_b = gh[:, :3 * Hp], gh[:, 3 * Hp:]
        else:
            gh_f = jnp.dot(h_f.astype(mat_dt), whh_ref[0],
                           preferred_element_type=jnp.float32)
            gh_b = jnp.dot(h_b.astype(mat_dt), whh_ref[1],
                           preferred_element_type=jnp.float32)
        h_f = gru_update(gx_f, gh_f, h_f, bhhn_f)
        h_b = gru_update(gx_b, gh_b, h_b, bhhn_b)
        outf_ref[t] = h_f                 # lane-dense, 128-aligned stores
        outb_ref[tb] = h_b
        return (h_f, h_b)

    h_f0 = h_ref[:, :Hp]
    h_b0 = h_ref[:, Hp:]
    h_f, h_b = lax.fori_loop(0, Ts, body, (h_f0, h_b0), unroll=unroll)
    h_ref[:, :Hp] = h_f
    h_ref[:, Hp:] = h_b

    # ---- fc + tanh on the final hidden states (last grid step only) ----------
    @pl.when(g == last)
    def _():
        hid = (jnp.dot(h_f.astype(mat_dt), wfc_f_ref[...],
                       preferred_element_type=jnp.float32)
               + jnp.dot(h_b.astype(mat_dt), wfc_b_ref[...],
                         preferred_element_type=jnp.float32)
               + bfc_ref[...])
        hid_ref[...] = jnp.tanh(hid)


def init_params(key, input_dim, embedding_dim, enc_hidden, dec_hidden):
    """Deterministic synthetic parameters.  GRU weights are stored transposed
    relative to PyTorch (kernel computes x @ W), gate order r, z, n."""
    ks = jax.random.split(key, 12)
    E, H, D = embedding_dim, enc_hidden, dec_hidden

    def u(k, shape, scale=0.1):
        return jax.random.uniform(k, shape, jnp.float32, -scale, scale)

    return {
        "embedding": u(ks[0], (input_dim, E)),
        "wih_f": u(ks[1], (E, 3 * H)), "whh_f": u(ks[2], (H, 3 * H)),
        "bih_f": u(ks[3], (1, 3 * H)), "bhh_f": u(ks[4], (1, 3 * H)),
        "wih_b": u(ks[5], (E, 3 * H)), "whh_b": u(ks[6], (H, 3 * H)),
        "bih_b": u(ks[7], (1, 3 * H)), "bhh_b": u(ks[8], (1, 3 * H)),
        "wfc": u(ks[9], (2 * H, D)), "bfc": u(ks[10], (1, D)),
    }


def pack_params(p, *, fuse_hh=True, mat_dtype=jnp.bfloat16):
    """Pad/pack parameters into TPU-tile-aligned kernel operands.

    Matmul weights are stored in `mat_dtype` (bf16) with f32 accumulation in
    the kernel; biases stay f32.  Zero padding keeps padded hidden *lanes*
    identically zero through the recurrence (sigmoid(0)=0.5 but n=0 and h=0);
    padded batch *rows* do evolve (they still see the bias) but are sliced off
    by the wrapper, so they never affect real rows.
    """
    E, H3 = p["wih_f"].shape
    H = H3 // 3
    D = p["wfc"].shape[1]
    Ep, Hp, Dp = _round_up(E, 128), _round_up(H, 128), _round_up(D, 128)

    def pad2(x, rows, cols):
        return jnp.pad(x, ((0, rows - x.shape[0]), (0, cols - x.shape[1])))

    def pad_gates(w, rows_p):
        # (rows, 3H) -> (rows_p, 3Hp): each gate block padded independently so
        # in-kernel gate slices land on 128-lane boundaries.
        return jnp.concatenate(
            [pad2(w[:, g * H:(g + 1) * H], rows_p, Hp) for g in range(3)], axis=1)

    def fold_bias(bih, bhh):
        # b_ih for all gates + b_hh for r,z only (b_hn stays inside the r-mul).
        b = bih + jnp.concatenate(
            [bhh[:, :2 * H], jnp.zeros((1, H), jnp.float32)], axis=1)
        return pad_gates(b, 1)

    whh_f_p = pad_gates(p["whh_f"], Hp).astype(mat_dtype)
    whh_b_p = pad_gates(p["whh_b"], Hp).astype(mat_dtype)
    if fuse_hh:
        z = jnp.zeros((Hp, 3 * Hp), mat_dtype)
        whh = jnp.concatenate(
            [jnp.concatenate([whh_f_p, z], axis=1),
             jnp.concatenate([z, whh_b_p], axis=1)], axis=0)     # (2Hp, 6Hp)
    else:
        whh = jnp.stack([whh_f_p, whh_b_p], axis=0)              # (2, Hp, 3Hp)

    return {
        "embedding": pad2(p["embedding"], p["embedding"].shape[0],
                          Ep).astype(mat_dtype),
        "wih_f": pad_gates(p["wih_f"], Ep).astype(mat_dtype),
        "wih_b": pad_gates(p["wih_b"], Ep).astype(mat_dtype),
        "bx_f": fold_bias(p["bih_f"], p["bhh_f"]),
        "bx_b": fold_bias(p["bih_b"], p["bhh_b"]),
        "whh": whh,
        "bhhn_f": pad2(p["bhh_f"][:, 2 * H:], 1, Hp),
        "bhhn_b": pad2(p["bhh_b"][:, 2 * H:], 1, Hp),
        "wfc_f": pad2(p["wfc"][:H], Hp, Dp).astype(mat_dtype),
        "wfc_b": pad2(p["wfc"][H:], Hp, Dp).astype(mat_dtype),
        "bfc": pad2(p["bfc"], 1, Dp),
    }


def _kernel_vmem_bytes(packed, ts, Bp, Ep, Hp, Dp):
    """Approximate kernel VMEM residency for a given time-chunk size."""
    weights = sum(int(v.size) * v.dtype.itemsize
                  for k, v in packed.items() if k != "embedding")
    emb_isz = packed["embedding"].dtype.itemsize
    pipelined = 2 * (2 * ts * Bp * Ep * emb_isz        # emb fwd + bwd blocks (x2 buf)
                     + 2 * ts * Bp * Hp * 4            # out fwd + bwd blocks (x2 buf)
                     + Bp * Dp * 4)                    # hid block
    scratch = 2 * ts * Bp * 3 * Hp * 4 + Bp * 2 * Hp * 4
    return weights + pipelined + scratch


def _choose_time_chunk(packed, S, Bp, Ep, Hp, Dp, budget):
    for ts in sorted((d for d in range(1, S + 1) if S % d == 0), reverse=True):
        if _kernel_vmem_bytes(packed, ts, Bp, Ep, Hp, Dp) <= budget:
            return ts
    return 1


def encoder_forward(src, packed, *, H, D, ts=None, fuse_hh=True, unroll=4,
                    vmem_budget_bytes=40 * 1024 * 1024):
    """src: (S, B) int32.  Returns (outputs (S, B, 2H), hidden (B, D))."""
    S, B = src.shape
    Bp = _round_up(B, 8)
    Hp = packed["bhhn_f"].shape[1]
    Dp = packed["wfc_f"].shape[1]
    Ep = packed["embedding"].shape[1]

    # Embedding gather is JAX glue; dropout == identity in inference mode.
    emb = jnp.take(packed["embedding"], src, axis=0)          # (S, B, Ep) bf16
    if Bp != B:
        emb = jnp.pad(emb, ((0, 0), (0, Bp - B), (0, 0)))

    if ts is None:
        ts = _choose_time_chunk(packed, S, Bp, Ep, Hp, Dp, vmem_budget_bytes)
    assert S % ts == 0, (S, ts)
    N = S // ts
    unroll_eff = max(1, min(unroll, ts))

    res = _kernel_vmem_bytes(packed, ts, Bp, Ep, Hp, Dp)
    vmem_limit = int(min(max(res + (8 << 20), 16 << 20), 96 << 20))

    def wspec(x):
        return pl.BlockSpec(x.shape, lambda g: (0,) * x.ndim)

    inputs = (emb, emb,
              packed["wih_f"], packed["wih_b"], packed["bx_f"], packed["bx_b"],
              packed["whh"], packed["bhhn_f"], packed["bhhn_b"],
              packed["wfc_f"], packed["wfc_b"], packed["bfc"])

    in_specs = [
        pl.BlockSpec((ts, Bp, Ep), lambda g: (g, 0, 0)),          # fwd chunk
        pl.BlockSpec((ts, Bp, Ep), lambda g: (N - 1 - g, 0, 0)),  # bwd chunk
    ] + [wspec(x) for x in inputs[2:]]

    out_shapes = (
        jax.ShapeDtypeStruct((S, Bp, Hp), jnp.float32),           # fwd outputs
        jax.ShapeDtypeStruct((S, Bp, Hp), jnp.float32),           # bwd outputs
        jax.ShapeDtypeStruct((Bp, Dp), jnp.float32),              # tanh(fc(h_f,h_b))
    )
    out_specs = (
        pl.BlockSpec((ts, Bp, Hp), lambda g: (g, 0, 0)),
        pl.BlockSpec((ts, Bp, Hp), lambda g: (N - 1 - g, 0, 0)),
        pl.BlockSpec((Bp, Dp), lambda g: (0, 0)),                 # resident accumulator
    )
    scratch = [
        pltpu.VMEM((ts, Bp, 3 * Hp), jnp.float32),                # gx forward
        pltpu.VMEM((ts, Bp, 3 * Hp), jnp.float32),                # gx backward
        pltpu.VMEM((Bp, 2 * Hp), jnp.float32),                    # carried h_f|h_b
    ]

    kernel = functools.partial(encoder_kernel, fuse_hh=fuse_hh, unroll=unroll_eff)

    out_f, out_b, hid_p = pl.pallas_call(
        kernel,
        out_shape=out_shapes,
        grid_spec=pltpu.PrefetchScalarGridSpec(
            num_scalar_prefetch=0,
            grid=(N,),
            in_specs=in_specs,
            out_specs=out_specs,
            scratch_shapes=scratch),
        compiler_params=pltpu.CompilerParams(
            dimension_semantics=("arbitrary",),        # serial recurrence carry
            vmem_limit_bytes=vmem_limit),
    )(*inputs)

    outputs = jnp.concatenate([out_f[:, :B, :H], out_b[:, :B, :H]], axis=-1)
    hidden = hid_p[:B, :D]
    return outputs, hidden


def encoder_reference(src, p, *, mat_dtype=jnp.bfloat16):
    """Pure-JAX reference with PyTorch bidirectional-GRU semantics, using the
    same bf16-matmul-input / f32-accumulation convention as the kernel."""
    H = p["whh_f"].shape[0]

    def mm(a, b):
        return jnp.dot(a.astype(mat_dtype), b.astype(mat_dtype),
                       preferred_element_type=jnp.float32)

    emb = jnp.take(p["embedding"].astype(mat_dtype), src, axis=0)   # (S, B, E)
    S, B, _E = emb.shape

    def cell(x, h, wih, whh, bih, bhh):
        gx = mm(x, wih) + bih
        gh = mm(h, whh)
        r = jax.nn.sigmoid(gx[:, :H] + gh[:, :H] + bhh[:, :H])
        z = jax.nn.sigmoid(gx[:, H:2 * H] + gh[:, H:2 * H] + bhh[:, H:2 * H])
        n = jnp.tanh(gx[:, 2 * H:] + r * (gh[:, 2 * H:] + bhh[:, 2 * H:]))
        return (1.0 - z) * n + z * h

    h_f = jnp.zeros((B, H), jnp.float32)
    h_b = jnp.zeros((B, H), jnp.float32)
    outs_f, outs_b = [], []
    for t in range(S):
        h_f = cell(emb[t], h_f, p["wih_f"], p["whh_f"], p["bih_f"], p["bhh_f"])
        outs_f.append(h_f)
    for t in range(S - 1, -1, -1):
        h_b = cell(emb[t], h_b, p["wih_b"], p["whh_b"], p["bih_b"], p["bhh_b"])
        outs_b.append(h_b)
    outputs = jnp.concatenate(
        [jnp.stack(outs_f), jnp.stack(outs_b[::-1])], axis=-1)
    cat = jnp.concatenate([h_f, h_b], axis=-1)
    hidden = jnp.tanh(mm(cat, p["wfc"]) + p["bfc"])
    return outputs, hidden


if __name__ == "__main__":
    # Small shapes: vocab=50, emb=16, enc_hidden=32, dec_hidden=32, seq=8, batch=2
    INPUT_DIM, EMB_DIM, ENC_H, DEC_H = 50, 16, 32, 32
    SEQ, BATCH = 8, 2

    key = jax.random.PRNGKey(0)
    k_params, k_src = jax.random.split(key)
    params = init_params(k_params, INPUT_DIM, EMB_DIM, ENC_H, DEC_H)

    fuse_hh = _default_fuse_hh()
    packed = pack_params(params, fuse_hh=fuse_hh)
    src = jax.random.randint(k_src, (SEQ, BATCH), 0, INPUT_DIM, dtype=jnp.int32)

    # ts=2 -> grid of 4 time chunks, exercising the VMEM-carried hidden state.
    fwd = jax.jit(functools.partial(encoder_forward, H=ENC_H, D=DEC_H,
                                    ts=2, fuse_hh=fuse_hh, unroll=4))
    outputs, hidden = fwd(src, packed)
    jax.block_until_ready((outputs, hidden))

    assert outputs.shape == (SEQ, BATCH, 2 * ENC_H), outputs.shape
    assert hidden.shape == (BATCH, DEC_H), hidden.shape
    assert jnp.all(jnp.isfinite(outputs)) and jnp.all(jnp.isfinite(hidden))

    ref_out, ref_hid = encoder_reference(src, params)
    assert jnp.allclose(outputs, ref_out, atol=2e-3, rtol=2e-3), (
        float(jnp.max(jnp.abs(outputs - ref_out))))
    assert jnp.allclose(hidden, ref_hid, atol=2e-3, rtol=2e-3), (
        float(jnp.max(jnp.abs(hidden - ref_hid))))

    print("KERNEL_OK")
</pallas_src>

<mosaic_0001>
module attributes {stable_mosaic.version = 11 : i64} {
  func.func @encoder_kernel(%arg0: i32, %arg1: memref<2x8x128xbf16, #tpu.memory_space<vmem>>, %arg2: memref<2x8x128xbf16, #tpu.memory_space<vmem>>, %arg3: memref<128x384xbf16, #tpu.memory_space<vmem>>, %arg4: memref<128x384xbf16, #tpu.memory_space<vmem>>, %arg5: memref<1x384xf32, #tpu.memory_space<vmem>>, %arg6: memref<1x384xf32, #tpu.memory_space<vmem>>, %arg7: memref<256x768xbf16, #tpu.memory_space<vmem>>, %arg8: memref<1x128xf32, #tpu.memory_space<vmem>>, %arg9: memref<1x128xf32, #tpu.memory_space<vmem>>, %arg10: memref<128x128xbf16, #tpu.memory_space<vmem>>, %arg11: memref<128x128xbf16, #tpu.memory_space<vmem>>, %arg12: memref<1x128xf32, #tpu.memory_space<vmem>>, %arg13: memref<2x8x128xf32, #tpu.memory_space<vmem>>, %arg14: memref<2x8x128xf32, #tpu.memory_space<vmem>>, %arg15: memref<8x128xf32, #tpu.memory_space<vmem>>, %arg16: memref<2x8x384xf32, #tpu.memory_space<vmem>>, %arg17: memref<2x8x384xf32, #tpu.memory_space<vmem>>, %arg18: memref<8x256xf32, #tpu.memory_space<vmem>>) attributes {dimension_semantics = [#tpu.dimension_semantics<arbitrary>], iteration_bounds = array<i64: 4>, scalar_prefetch = 0 : i64, scratch_operands = 3 : i64, tpu.core_type = #tpu.core_type<tc>, window_params = [{transform_indices = @transform_0, window_bounds = array<i64: 2, 8, 128>}, {transform_indices = @transform_1, window_bounds = array<i64: 2, 8, 128>}, {pipeline_mode = #tpu.pipeline_mode<synchronous>, transform_indices = @transform_2, window_bounds = array<i64: 128, 384>}, {pipeline_mode = #tpu.pipeline_mode<synchronous>, transform_indices = @transform_3, window_bounds = array<i64: 128, 384>}, {pipeline_mode = #tpu.pipeline_mode<synchronous>, transform_indices = @transform_4, window_bounds = array<i64: 1, 384>}, {pipeline_mode = #tpu.pipeline_mode<synchronous>, transform_indices = @transform_5, window_bounds = array<i64: 1, 384>}, {pipeline_mode = #tpu.pipeline_mode<synchronous>, transform_indices = @transform_6, window_bounds = array<i64: 256, 768>}, {pipeline_mode = #tpu.pipeline_mode<synchronous>, transform_indices = @transform_7, window_bounds = array<i64: 1, 128>}, {pipeline_mode = #tpu.pipeline_mode<synchronous>, transform_indices = @transform_8, window_bounds = array<i64: 1, 128>}, {pipeline_mode = #tpu.pipeline_mode<synchronous>, transform_indices = @transform_9, window_bounds = array<i64: 128, 128>}, {pipeline_mode = #tpu.pipeline_mode<synchronous>, transform_indices = @transform_10, window_bounds = array<i64: 128, 128>}, {pipeline_mode = #tpu.pipeline_mode<synchronous>, transform_indices = @transform_11, window_bounds = array<i64: 1, 128>}, {transform_indices = @transform_12, window_bounds = array<i64: 2, 8, 128>}, {transform_indices = @transform_13, window_bounds = array<i64: 2, 8, 128>}, {pipeline_mode = #tpu.pipeline_mode<synchronous>, transform_indices = @transform_14, window_bounds = array<i64: 8, 128>}]} {
    %c0_i32 = arith.constant 0 : i32
    %0 = arith.cmpi eq, %arg0, %c0_i32 : i32
    %1 = arith.extui %0 : i1 to i32
    %c0_i32_0 = arith.constant 0 : i32
    %2 = arith.cmpi ne, %1, %c0_i32_0 : i32
    scf.if %2 {
      %cst_62 = arith.constant 0.000000e+00 : f32
      %152 = vector.broadcast %cst_62 : f32 to vector<8x256xf32>
      %c0_63 = arith.constant 0 : index
      %c0_64 = arith.constant 0 : index
      %153 = vector.load %arg18[%c0_63, %c0_64] : memref<8x256xf32, #tpu.memory_space<vmem>>, vector<8x256xf32>
      tpu.vector_store %arg18[%c0_63, %c0_64], %152 {strides = array<i32>} : memref<8x256xf32, #tpu.memory_space<vmem>>, vector<8x256xf32>,
      %cst_65 = arith.constant 0.000000e+00 : f32
      %154 = vector.broadcast %cst_65 : f32 to vector<8x128xf32>
      %c0_66 = arith.constant 0 : index
      %c0_67 = arith.constant 0 : index
      %155 = vector.load %arg15[%c0_66, %c0_67] : memref<8x128xf32, #tpu.memory_space<vmem>>, vector<8x128xf32>
      tpu.vector_store %arg15[%c0_66, %c0_67], %154 {strides = array<i32>} : memref<8x128xf32, #tpu.memory_space<vmem>>, vector<8x128xf32>,
    } else {
    }
    %c0 = arith.constant 0 : index
    %c0_1 = arith.constant 0 : index
    %c0_2 = arith.constant 0 : index
    %3 = vector.load %arg1[%c0, %c0_1, %c0_2] : memref<2x8x128xbf16, #tpu.memory_space<vmem>>, vector<2x8x128xbf16>
    %4 = vector.shape_cast %3 : vector<2x8x128xbf16> to vector<16x128xbf16>
    %c0_3 = arith.constant 0 : index
    %c0_4 = arith.constant 0 : index
    %c0_5 = arith.constant 0 : index
    %5 = vector.load %arg2[%c0_3, %c0_4, %c0_5] : memref<2x8x128xbf16, #tpu.memory_space<vmem>>, vector<2x8x128xbf16>
    %6 = vector.shape_cast %5 : vector<2x8x128xbf16> to vector<16x128xbf16>
    %c0_6 = arith.constant 0 : index
    %c0_7 = arith.constant 0 : index
    %7 = vector.load %arg3[%c0_6, %c0_7] : memref<128x384xbf16, #tpu.memory_space<vmem>>, vector<128x384xbf16>
    %cst = arith.constant dense<0.000000e+00> : vector<16x384xf32>
    %8 = tpu.matmul %4, %7, %cst {dimension_numbers = #tpu.dot_dimension_numbers<[1], [0], [0], [1], [0, 0, 1, 1], [], []>} : vector<16x128xbf16>, vector<128x384xbf16>, vector<16x384xf32> -> vector<16x384xf32>
    %c0_8 = arith.constant 0 : index
    %c0_9 = arith.constant 0 : index
    %9 = vector.load %arg5[%c0_8, %c0_9] : memref<1x384xf32, #tpu.memory_space<vmem>>, vector<1x384xf32>
    %10 = vector.broadcast %9 : vector<1x384xf32> to vector<16x384xf32>
    %11 = arith.addf %8, %10 : vector<16x384xf32>
    %c0_10 = arith.constant 0 : index
    %c0_11 = arith.constant 0 : index
    %12 = vector.load %arg4[%c0_10, %c0_11] : memref<128x384xbf16, #tpu.memory_space<vmem>>, vector<128x384xbf16>
    %cst_12 = arith.constant dense<0.000000e+00> : vector<16x384xf32>
    %13 = tpu.matmul %6, %12, %cst_12 {dimension_numbers = #tpu.dot_dimension_numbers<[1], [0], [0], [1], [0, 0, 1, 1], [], []>} : vector<16x128xbf16>, vector<128x384xbf16>, vector<16x384xf32> -> vector<16x384xf32>
    %c0_13 = arith.constant 0 : index
    %c0_14 = arith.constant 0 : index
    %14 = vector.load %arg6[%c0_13, %c0_14] : memref<1x384xf32, #tpu.memory_space<vmem>>, vector<1x384xf32>
    %15 = vector.broadcast %14 : vector<1x384xf32> to vector<16x384xf32>
    %16 = arith.addf %13, %15 : vector<16x384xf32>
    %17 = vector.shape_cast %11 : vector<16x384xf32> to vector<2x8x384xf32>
    %c0_15 = arith.constant 0 : index
    %c0_16 = arith.constant 0 : index
    %c0_17 = arith.constant 0 : index
    %18 = vector.load %arg16[%c0_15, %c0_16, %c0_17] : memref<2x8x384xf32, #tpu.memory_space<vmem>>, vector<2x8x384xf32>
    tpu.vector_store %arg16[%c0_15, %c0_16, %c0_17], %17 {strides = array<i32>} : memref<2x8x384xf32, #tpu.memory_space<vmem>>, vector<2x8x384xf32>,
    %19 = vector.shape_cast %16 : vector<16x384xf32> to vector<2x8x384xf32>
    %c0_18 = arith.constant 0 : index
    %c0_19 = arith.constant 0 : index
    %c0_20 = arith.constant 0 : index
    %20 = vector.load %arg17[%c0_18, %c0_19, %c0_20] : memref<2x8x384xf32, #tpu.memory_space<vmem>>, vector<2x8x384xf32>
    tpu.vector_store %arg17[%c0_18, %c0_19, %c0_20], %19 {strides = array<i32>} : memref<2x8x384xf32, #tpu.memory_space<vmem>>, vector<2x8x384xf32>,
    %c0_21 = arith.constant 0 : index
    %c0_22 = arith.constant 0 : index
    %21 = vector.load %arg8[%c0_21, %c0_22] : memref<1x128xf32, #tpu.memory_space<vmem>>, vector<1x128xf32>
    %22 = vector.shape_cast %21 : vector<1x128xf32> to vector<1x128xf32>
    %23 = vector.broadcast %22 : vector<1x128xf32> to vector<8x128xf32>
    %c0_23 = arith.constant 0 : index
    %c0_24 = arith.constant 0 : index
    %24 = vector.load %arg9[%c0_23, %c0_24] : memref<1x128xf32, #tpu.memory_space<vmem>>, vector<1x128xf32>
    %25 = vector.shape_cast %24 : vector<1x128xf32> to vector<1x128xf32>
    %26 = vector.broadcast %25 : vector<1x128xf32> to vector<8x128xf32>
    %c0_25 = arith.constant 0 : index
    %c0_26 = arith.constant 0 : index
    %27 = vector.load %arg18[%c0_25, %c0_26] : memref<8x256xf32, #tpu.memory_space<vmem>>, vector<8x128xf32>
    %c0_27 = arith.constant 0 : index
    %c128 = arith.constant 128 : index
    %28 = vector.load %arg18[%c0_27, %c128] : memref<8x256xf32, #tpu.memory_space<vmem>>, vector<8x128xf32>
    %c0_i32_28 = arith.constant 0 : i32
    %c1_i32 = arith.constant 1 : i32
    %29 = arith.subi %c1_i32, %c0_i32_28 : i32
    %30 = arith.index_cast %c0_i32_28 : i32 to index
    %c0_29 = arith.constant 0 : index
    %c0_30 = arith.constant 0 : index
    %31 = vector.load %arg16[%30, %c0_29, %c0_30] : memref<2x8x384xf32, #tpu.memory_space<vmem>>, vector<1x8x384xf32>
    %32 = vector.shape_cast %31 : vector<1x8x384xf32> to vector<8x384xf32>
    %33 = arith.index_cast %29 : i32 to index
    %c0_31 = arith.constant 0 : index
    %c0_32 = arith.constant 0 : index
    %34 = vector.load %arg17[%33, %c0_31, %c0_32] : memref<2x8x384xf32, #tpu.memory_space<vmem>>, vector<1x8x384xf32>
    %35 = vector.shape_cast %34 : vector<1x8x384xf32> to vector<8x384xf32>
    %36 = tpu.concatenate %27, %28 in 1 : vector<8x128xf32>, vector<8x128xf32> -> vector<8x256xf32>
    %37 = arith.truncf %36 : vector<8x256xf32> to vector<8x256xbf16>
    %c0_33 = arith.constant 0 : index
    %c0_34 = arith.constant 0 : index
    %38 = vector.load %arg7[%c0_33, %c0_34] : memref<256x768xbf16, #tpu.memory_space<vmem>>, vector<256x768xbf16>
    %cst_35 = arith.constant dense<0.000000e+00> : vector<8x768xf32>
    %39 = tpu.matmul %37, %38, %cst_35 {dimension_numbers = #tpu.dot_dimension_numbers<[1], [0], [0], [1], [0, 0, 1, 1], [], []>} : vector<8x256xbf16>, vector<256x768xbf16>, vector<8x768xf32> -> vector<8x768xf32>
    %40 = vector.extract_strided_slice %39 {offsets = [0, 0], sizes = [8, 384], strides = [1, 1]} : vector<8x768xf32> to vector<8x384xf32>
    %41 = vector.extract_strided_slice %39 {offsets = [0, 384], sizes = [8, 384], strides = [1, 1]} : vector<8x768xf32> to vector<8x384xf32>
    %42 = vector.extract_strided_slice %32 {offsets = [0, 0], sizes = [8, 256], strides = [1, 1]} : vector<8x384xf32> to vector<8x256xf32>
    %43 = vector.extract_strided_slice %40 {offsets = [0, 0], sizes = [8, 256], strides = [1, 1]} : vector<8x384xf32> to vector<8x256xf32>
    %44 = arith.addf %42, %43 : vector<8x256xf32>
    %45 = arith.negf %44 : vector<8x256xf32>
    %46 = math.exp %45 : vector<8x256xf32>
    %cst_36 = arith.constant 1.000000e+00 : f32
    %47 = vector.broadcast %cst_36 : f32 to vector<8x256xf32>
    %48 = arith.addf %47, %46 : vector<8x256xf32>
    %49 = arith.divf %47, %48 : vector<8x256xf32>
    %50 = vector.extract_strided_slice %49 {offsets = [0, 0], sizes = [8, 128], strides = [1, 1]} : vector<8x256xf32> to vector<8x128xf32>
    %51 = vector.extract_strided_slice %49 {offsets = [0, 128], sizes = [8, 128], strides = [1, 1]} : vector<8x256xf32> to vector<8x128xf32>
    %52 = vector.extract_strided_slice %32 {offsets = [0, 256], sizes = [8, 128], strides = [1, 1]} : vector<8x384xf32> to vector<8x128xf32>
    %53 = vector.extract_strided_slice %40 {offsets = [0, 256], sizes = [8, 128], strides = [1, 1]} : vector<8x384xf32> to vector<8x128xf32>
    %54 = arith.addf %53, %23 : vector<8x128xf32>
    %55 = arith.mulf %50, %54 : vector<8x128xf32>
    %56 = arith.addf %52, %55 : vector<8x128xf32>
    %57 = math.tanh %56 : vector<8x128xf32>
    %58 = arith.subf %27, %57 : vector<8x128xf32>
    %59 = arith.mulf %51, %58 : vector<8x128xf32>
    %60 = arith.addf %57, %59 : vector<8x128xf32>
    %61 = vector.extract_strided_slice %35 {offsets = [0, 0], sizes = [8, 256], strides = [1, 1]} : vector<8x384xf32> to vector<8x256xf32>
    %62 = vector.extract_strided_slice %41 {offsets = [0, 0], sizes = [8, 256], strides = [1, 1]} : vector<8x384xf32> to vector<8x256xf32>
    %63 = arith.addf %61, %62 : vector<8x256xf32>
    %64 = arith.negf %63 : vector<8x256xf32>
    %65 = math.exp %64 : vector<8x256xf32>
    %cst_37 = arith.constant 1.000000e+00 : f32
    %66 = vector.broadcast %cst_37 : f32 to vector<8x256xf32>
    %67 = arith.addf %66, %65 : vector<8x256xf32>
    %68 = arith.divf %66, %67 : vector<8x256xf32>
    %69 = vector.extract_strided_slice %68 {offsets = [0, 0], sizes = [8, 128], strides = [1, 1]} : vector<8x256xf32> to vector<8x128xf32>
    %70 = vector.extract_strided_slice %68 {offsets = [0, 128], sizes = [8, 128], strides = [1, 1]} : vector<8x256xf32> to vector<8x128xf32>
    %71 = vector.extract_strided_slice %35 {offsets = [0, 256], sizes = [8, 128], strides = [1, 1]} : vector<8x384xf32> to vector<8x128xf32>
    %72 = vector.extract_strided_slice %41 {offsets = [0, 256], sizes = [8, 128], strides = [1, 1]} : vector<8x384xf32> to vector<8x128xf32>
    %73 = arith.addf %72, %26 : vector<8x128xf32>
    %74 = arith.mulf %69, %73 : vector<8x128xf32>
    %75 = arith.addf %71, %74 : vector<8x128xf32>
    %76 = math.tanh %75 : vector<8x128xf32>
    %77 = arith.subf %28, %76 : vector<8x128xf32>
    %78 = arith.mulf %70, %77 : vector<8x128xf32>
    %79 = arith.addf %76, %78 : vector<8x128xf32>
    %80 = arith.index_cast %c0_i32_28 : i32 to index
    %c0_38 = arith.constant 0 : index
    %c0_39 = arith.constant 0 : index
    %81 = vector.load %arg13[%80, %c0_38, %c0_39] : memref<2x8x128xf32, #tpu.memory_space<vmem>>, vector<1x8x128xf32>
    %82 = vector.shape_cast %81 : vector<1x8x128xf32> to vector<8x128xf32>
    %83 = vector.shape_cast %60 : vector<8x128xf32> to vector<1x8x128xf32>
    tpu.vector_store %arg13[%80, %c0_38, %c0_39], %83 {strides = array<i32>} : memref<2x8x128xf32, #tpu.memory_space<vmem>>, vector<1x8x128xf32>,
    %84 = arith.index_cast %29 : i32 to index
    %c0_40 = arith.constant 0 : index
    %c0_41 = arith.constant 0 : index
    %85 = vector.load %arg14[%84, %c0_40, %c0_41] : memref<2x8x128xf32, #tpu.memory_space<vmem>>, vector<1x8x128xf32>
    %86 = vector.shape_cast %85 : vector<1x8x128xf32> to vector<8x128xf32>
    %87 = vector.shape_cast %79 : vector<8x128xf32> to vector<1x8x128xf32>
    tpu.vector_store %arg14[%84, %c0_40, %c0_41], %87 {strides = array<i32>} : memref<2x8x128xf32, #tpu.memory_space<vmem>>, vector<1x8x128xf32>,
    %c1_i32_42 = arith.constant 1 : i32
    %c1_i32_43 = arith.constant 1 : i32
    %88 = arith.subi %c1_i32_43, %c1_i32_42 : i32
    %89 = arith.index_cast %c1_i32_42 : i32 to index
    %c0_44 = arith.constant 0 : index
    %c0_45 = arith.constant 0 : index
    %90 = vector.load %arg16[%89, %c0_44, %c0_45] : memref<2x8x384xf32, #tpu.memory_space<vmem>>, vector<1x8x384xf32>
    %91 = vector.shape_cast %90 : vector<1x8x384xf32> to vector<8x384xf32>
    %92 = arith.index_cast %88 : i32 to index
    %c0_46 = arith.constant 0 : index
    %c0_47 = arith.constant 0 : index
    %93 = vector.load %arg17[%92, %c0_46, %c0_47] : memref<2x8x384xf32, #tpu.memory_space<vmem>>, vector<1x8x384xf32>
    %94 = vector.shape_cast %93 : vector<1x8x384xf32> to vector<8x384xf32>
    %95 = tpu.concatenate %60, %79 in 1 : vector<8x128xf32>, vector<8x128xf32> -> vector<8x256xf32>
    %96 = arith.truncf %95 : vector<8x256xf32> to vector<8x256xbf16>
    %c0_48 = arith.constant 0 : index
    %c0_49 = arith.constant 0 : index
    %97 = vector.load %arg7[%c0_48, %c0_49] : memref<256x768xbf16, #tpu.memory_space<vmem>>, vector<256x768xbf16>
    %cst_50 = arith.constant dense<0.000000e+00> : vector<8x768xf32>
    %98 = tpu.matmul %96, %97, %cst_50 {dimension_numbers = #tpu.dot_dimension_numbers<[1], [0], [0], [1], [0, 0, 1, 1], [], []>} : vector<8x256xbf16>, vector<256x768xbf16>, vector<8x768xf32> -> vector<8x768xf32>
    %99 = vector.extract_strided_slice %98 {offsets = [0, 0], sizes = [8, 384], strides = [1, 1]} : vector<8x768xf32> to vector<8x384xf32>
    %100 = vector.extract_strided_slice %98 {offsets = [0, 384], sizes = [8, 384], strides = [1, 1]} : vector<8x768xf32> to vector<8x384xf32>
    %101 = vector.extract_strided_slice %91 {offsets = [0, 0], sizes = [8, 256], strides = [1, 1]} : vector<8x384xf32> to vector<8x256xf32>
    %102 = vector.extract_strided_slice %99 {offsets = [0, 0], sizes = [8, 256], strides = [1, 1]} : vector<8x384xf32> to vector<8x256xf32>
    %103 = arith.addf %101, %102 : vector<8x256xf32>
    %104 = arith.negf %103 : vector<8x256xf32>
    %105 = math.exp %104 : vector<8x256xf32>
    %cst_51 = arith.constant 1.000000e+00 : f32
    %106 = vector.broadcast %cst_51 : f32 to vector<8x256xf32>
    %107 = arith.addf %106, %105 : vector<8x256xf32>
    %108 = arith.divf %106, %107 : vector<8x256xf32>
    %109 = vector.extract_strided_slice %108 {offsets = [0, 0], sizes = [8, 128], strides = [1, 1]} : vector<8x256xf32> to vector<8x128xf32>
    %110 = vector.extract_strided_slice %108 {offsets = [0, 128], sizes = [8, 128], strides = [1, 1]} : vector<8x256xf32> to vector<8x128xf32>
    %111 = vector.extract_strided_slice %91 {offsets = [0, 256], sizes = [8, 128], strides = [1, 1]} : vector<8x384xf32> to vector<8x128xf32>
    %112 = vector.extract_strided_slice %99 {offsets = [0, 256], sizes = [8, 128], strides = [1, 1]} : vector<8x384xf32> to vector<8x128xf32>
    %113 = arith.addf %112, %23 : vector<8x128xf32>
    %114 = arith.mulf %109, %113 : vector<8x128xf32>
    %115 = arith.addf %111, %114 : vector<8x128xf32>
    %116 = math.tanh %115 : vector<8x128xf32>
    %117 = arith.subf %60, %116 : vector<8x128xf32>
    %118 = arith.mulf %110, %117 : vector<8x128xf32>
    %119 = arith.addf %116, %118 : vector<8x128xf32>
    %120 = vector.extract_strided_slice %94 {offsets = [0, 0], sizes = [8, 256], strides = [1, 1]} : vector<8x384xf32> to vector<8x256xf32>
    %121 = vector.extract_strided_slice %100 {offsets = [0, 0], sizes = [8, 256], strides = [1, 1]} : vector<8x384xf32> to vector<8x256xf32>
    %122 = arith.addf %120, %121 : vector<8x256xf32>
    %123 = arith.negf %122 : vector<8x256xf32>
    %124 = math.exp %123 : vector<8x256xf32>
    %cst_52 = arith.constant 1.000000e+00 : f32
    %125 = vector.broadcast %cst_52 : f32 to vector<8x256xf32>
    %126 = arith.addf %125, %124 : vector<8x256xf32>
    %127 = arith.divf %125, %126 : vector<8x256xf32>
    %128 = vector.extract_strided_slice %127 {offsets = [0, 0], sizes = [8, 128], strides = [1, 1]} : vector<8x256xf32> to vector<8x128xf32>
    %129 = vector.extract_strided_slice %127 {offsets = [0, 128], sizes = [8, 128], strides = [1, 1]} : vector<8x256xf32> to vector<8x128xf32>
    %130 = vector.extract_strided_slice %94 {offsets = [0, 256], sizes = [8, 128], strides = [1, 1]} : vector<8x384xf32> to vector<8x128xf32>
    %131 = vector.extract_strided_slice %100 {offsets = [0, 256], sizes = [8, 128], strides = [1, 1]} : vector<8x384xf32> to vector<8x128xf32>
    %132 = arith.addf %131, %26 : vector<8x128xf32>
    %133 = arith.mulf %128, %132 : vector<8x128xf32>
    %134 = arith.addf %130, %133 : vector<8x128xf32>
    %135 = math.tanh %134 : vector<8x128xf32>
    %136 = arith.subf %79, %135 : vector<8x128xf32>
    %137 = arith.mulf %129, %136 : vector<8x128xf32>
    %138 = arith.addf %135, %137 : vector<8x128xf32>
    %139 = arith.index_cast %c1_i32_42 : i32 to index
    %c0_53 = arith.constant 0 : index
    %c0_54 = arith.constant 0 : index
    %140 = vector.load %arg13[%139, %c0_53, %c0_54] : memref<2x8x128xf32, #tpu.memory_space<vmem>>, vector<1x8x128xf32>
    %141 = vector.shape_cast %140 : vector<1x8x128xf32> to vector<8x128xf32>
    %142 = vector.shape_cast %119 : vector<8x128xf32> to vector<1x8x128xf32>
    tpu.vector_store %arg13[%139, %c0_53, %c0_54], %142 {strides = array<i32>} : memref<2x8x128xf32, #tpu.memory_space<vmem>>, vector<1x8x128xf32>,
    %143 = arith.index_cast %88 : i32 to index
    %c0_55 = arith.constant 0 : index
    %c0_56 = arith.constant 0 : index
    %144 = vector.load %arg14[%143, %c0_55, %c0_56] : memref<2x8x128xf32, #tpu.memory_space<vmem>>, vector<1x8x128xf32>
    %145 = vector.shape_cast %144 : vector<1x8x128xf32> to vector<8x128xf32>
    %146 = vector.shape_cast %138 : vector<8x128xf32> to vector<1x8x128xf32>
    tpu.vector_store %arg14[%143, %c0_55, %c0_56], %146 {strides = array<i32>} : memref<2x8x128xf32, #tpu.memory_space<vmem>>, vector<1x8x128xf32>,
    %c2_i32 = arith.constant 2 : i32
    %c0_57 = arith.constant 0 : index
    %c0_58 = arith.constant 0 : index
    %147 = vector.load %arg18[%c0_57, %c0_58] : memref<8x256xf32, #tpu.memory_space<vmem>>, vector<8x128xf32>
    tpu.vector_store %arg18[%c0_57, %c0_58], %119 {strides = array<i32>} : memref<8x256xf32, #tpu.memory_space<vmem>>, vector<8x128xf32>,
    %c0_59 = arith.constant 0 : index
    %c128_60 = arith.constant 128 : index
    %148 = vector.load %arg18[%c0_59, %c128_60] : memref<8x256xf32, #tpu.memory_space<vmem>>, vector<8x128xf32>
    tpu.vector_store %arg18[%c0_59, %c128_60], %138 {strides = array<i32>} : memref<8x256xf32, #tpu.memory_space<vmem>>, vector<8x128xf32>,
    %c3_i32 = arith.constant 3 : i32
    %149 = arith.cmpi eq, %arg0, %c3_i32 : i32
    %150 = arith.extui %149 : i1 to i32
    %c0_i32_61 = arith.constant 0 : i32
    %151 = arith.cmpi ne, %150, %c0_i32_61 : i32
    scf.if %151 {
      %152 = arith.truncf %119 : vector<8x128xf32> to vector<8x128xbf16>
      %c0_62 = arith.constant 0 : index
      %c0_63 = arith.constant 0 : index
      %153 = vector.load %arg10[%c0_62, %c0_63] : memref<128x128xbf16, #tpu.memory_space<vmem>>, vector<128x128xbf16>
      %cst_64 = arith.constant dense<0.000000e+00> : vector<8x128xf32>
      %154 = tpu.matmul %152, %153, %cst_64 {dimension_numbers = #tpu.dot_dimension_numbers<[1], [0], [0], [1], [0, 0, 1, 1], [], []>} : vector<8x128xbf16>, vector<128x128xbf16>, vector<8x128xf32> -> vector<8x128xf32>
      %155 = arith.truncf %138 : vector<8x128xf32> to vector<8x128xbf16>
      %c0_65 = arith.constant 0 : index
      %c0_66 = arith.constant 0 : index
      %156 = vector.load %arg11[%c0_65, %c0_66] : memref<128x128xbf16, #tpu.memory_space<vmem>>, vector<128x128xbf16>
      %cst_67 = arith.constant dense<0.000000e+00> : vector<8x128xf32>
      %157 = tpu.matmul %155, %156, %cst_67 {dimension_numbers = #tpu.dot_dimension_numbers<[1], [0], [0], [1], [0, 0, 1, 1], [], []>} : vector<8x128xbf16>, vector<128x128xbf16>, vector<8x128xf32> -> vector<8x128xf32>
      %158 = arith.addf %154, %157 : vector<8x128xf32>
      %c0_68 = arith.constant 0 : index
      %c0_69 = arith.constant 0 : index
      %159 = vector.load %arg12[%c0_68, %c0_69] : memref<1x128xf32, #tpu.memory_space<vmem>>, vector<1x128xf32>
      %160 = vector.broadcast %159 : vector<1x128xf32> to vector<8x128xf32>
      %161 = arith.addf %158, %160 : vector<8x128xf32>
      %162 = math.tanh %161 : vector<8x128xf32>
      %c0_70 = arith.constant 0 : index
      %c0_71 = arith.constant 0 : index
      %163 = vector.load %arg15[%c0_70, %c0_71] : memref<8x128xf32, #tpu.memory_space<vmem>>, vector<8x128xf32>
      tpu.vector_store %arg15[%c0_70, %c0_71], %162 {strides = array<i32>} : memref<8x128xf32, #tpu.memory_space<vmem>>, vector<8x128xf32>,
    } else {
    }
    return
  }
  func.func @transform_0(%arg0: i32) -> (i32, i32, i32) {
    %c0_i32 = arith.constant 0 : i32
    %c0_i32_0 = arith.constant 0 : i32
    %c0_i32_1 = arith.constant 0 : i32
    return %arg0, %c0_i32, %c0_i32_0 : i32, i32, i32
  }
  func.func @transform_1(%arg0: i32) -> (i32, i32, i32) {
    %c3_i32 = arith.constant 3 : i32
    %0 = arith.subi %c3_i32, %arg0 : i32
    %c0_i32 = arith.constant 0 : i32
    %c0_i32_0 = arith.constant 0 : i32
    %c0_i32_1 = arith.constant 0 : i32
    return %0, %c0_i32, %c0_i32_0 : i32, i32, i32
  }
  func.func @transform_2(%arg0: i32) -> (i32, i32) {
    %c0_i32 = arith.constant 0 : i32
    %c0_i32_0 = arith.constant 0 : i32
    %c0_i32_1 = arith.constant 0 : i32
    return %c0_i32, %c0_i32_0 : i32, i32
  }
  func.func @transform_3(%arg0: i32) -> (i32, i32) {
    %c0_i32 = arith.constant 0 : i32
    %c0_i32_0 = arith.constant 0 : i32
    %c0_i32_1 = arith.constant 0 : i32
    return %c0_i32, %c0_i32_0 : i32, i32
  }
  func.func @transform_4(%arg0: i32) -> (i32, i32) {
    %c0_i32 = arith.constant 0 : i32
    %c0_i32_0 = arith.constant 0 : i32
    %c0_i32_1 = arith.constant 0 : i32
    return %c0_i32, %c0_i32_0 : i32, i32
  }
  func.func @transform_5(%arg0: i32) -> (i32, i32) {
    %c0_i32 = arith.constant 0 : i32
    %c0_i32_0 = arith.constant 0 : i32
    %c0_i32_1 = arith.constant 0 : i32
    return %c0_i32, %c0_i32_0 : i32, i32
  }
  func.func @transform_6(%arg0: i32) -> (i32, i32) {
    %c0_i32 = arith.constant 0 : i32
    %c0_i32_0 = arith.constant 0 : i32
    %c0_i32_1 = arith.constant 0 : i32
    return %c0_i32, %c0_i32_0 : i32, i32
  }
  func.func @transform_7(%arg0: i32) -> (i32, i32) {
    %c0_i32 = arith.constant 0 : i32
    %c0_i32_0 = arith.constant 0 : i32
    %c0_i32_1 = arith.constant 0 : i32
    return %c0_i32, %c0_i32_0 : i32, i32
  }
  func.func @transform_8(%arg0: i32) -> (i32, i32) {
    %c0_i32 = arith.constant 0 : i32
    %c0_i32_0 = arith.constant 0 : i32
    %c0_i32_1 = arith.constant 0 : i32
    return %c0_i32, %c0_i32_0 : i32, i32
  }
  func.func @transform_9(%arg0: i32) -> (i32, i32) {
    %c0_i32 = arith.constant 0 : i32
    %c0_i32_0 = arith.constant 0 : i32
    %c0_i32_1 = arith.constant 0 : i32
    return %c0_i32, %c0_i32_0 : i32, i32
  }
  func.func @transform_10(%arg0: i32) -> (i32, i32) {
    %c0_i32 = arith.constant 0 : i32
    %c0_i32_0 = arith.constant 0 : i32
    %c0_i32_1 = arith.constant 0 : i32
    return %c0_i32, %c0_i32_0 : i32, i32
  }
  func.func @transform_11(%arg0: i32) -> (i32, i32) {
    %c0_i32 = arith.constant 0 : i32
    %c0_i32_0 = arith.constant 0 : i32
    %c0_i32_1 = arith.constant 0 : i32
    return %c0_i32, %c0_i32_0 : i32, i32
  }
  func.func @transform_12(%arg0: i32) -> (i32, i32, i32) {
    %c0_i32 = arith.constant 0 : i32
    %c0_i32_0 = arith.constant 0 : i32
    %c0_i32_1 = arith.constant 0 : i32
    return %arg0, %c0_i32, %c0_i32_0 : i32, i32, i32
  }
  func.func @transform_13(%arg0: i32) -> (i32, i32, i32) {
    %c3_i32 = arith.constant 3 : i32
    %0 = arith.subi %c3_i32, %arg0 : i32
    %c0_i32 = arith.constant 0 : i32
    %c0_i32_0 = arith.constant 0 : i32
    %c0_i32_1 = arith.constant 0 : i32
    return %0, %c0_i32, %c0_i32_0 : i32, i32, i32
  }
  func.func @transform_14(%arg0: i32) -> (i32, i32) {
    %c0_i32 = arith.constant 0 : i32
    %c0_i32_0 = arith.constant 0 : i32
    %c0_i32_1 = arith.constant 0 : i32
    return %c0_i32, %c0_i32_0 : i32, i32
  }
}

</mosaic_0001>

<llo_original>
// kernel: encoder_forward.1
$region0: #{encoder_forward.1}
  #allocation0 [shape = 'u32[]', space=smem, size = 0x4, offset = 0x4, fixed_abs, tag = 'smem constant byte address 0x4 - core index']
  #allocation1 [shape = 'u32[144,128]{1,0:T(1,128)}', space=vmem, size = 0x12000, scoped, tag = 'internal scratch']
  #allocation2 [shape = 'f32[2,8,384]{2,1,0:T(8,128)}', space=vmem, size = 0x6000, scoped, tag = 'scratch operand']
  #allocation3 [shape = 'f32[2,8,384]{2,1,0:T(8,128)}', space=vmem, size = 0x6000, scoped, tag = 'scratch operand']
  #allocation4 [shape = 'f32[8,256]{1,0:T(8,128)}', space=vmem, size = 0x2000, scoped, tag = 'scratch operand']
  %s0 = inlined_call_operand.vmem [shape: bf16[8,8,128], index: 0, kind: input, shape index: {}, may-alias: {0,1}]
  %s1 = inlined_call_operand.vmem [shape: bf16[8,8,128], index: 1, kind: input, shape index: {}, may-alias: {0,1}]
  %s2 = inlined_call_operand.vmem [shape: bf16[128,384], index: 2, kind: input, shape index: {}]
  %s3 = inlined_call_operand.hbm [shape: bf16[128,384], index: 3, kind: input, shape index: {}]
  %s4 = inlined_call_operand.vmem [shape: f32[1,384], index: 4, kind: input, shape index: {}]
  %s5 = inlined_call_operand.vmem [shape: f32[1,384], index: 5, kind: input, shape index: {}]
  %s6 = inlined_call_operand.hbm [shape: bf16[256,768], index: 6, kind: input, shape index: {}]
  %s7 = inlined_call_operand.vmem [shape: f32[1,128], index: 7, kind: input, shape index: {}]
  %s8 = inlined_call_operand.vmem [shape: f32[1,128], index: 8, kind: input, shape index: {}]
  %s9 = inlined_call_operand.hbm [shape: bf16[128,128], index: 9, kind: input, shape index: {}]
  %s10 = inlined_call_operand.hbm [shape: bf16[128,128], index: 10, kind: input, shape index: {}]
  %s11 = inlined_call_operand.vmem [shape: f32[1,128], index: 11, kind: input, shape index: {}]
  %s12 = inlined_call_operand.vmem [shape: f32[8,8,128], index: 12, kind: output, shape index: {0}]
  %s13 = inlined_call_operand.vmem [shape: f32[8,8,128], index: 13, kind: output, shape index: {1}]
  %s14 = inlined_call_operand.vmem [shape: f32[8,128], index: 14, kind: output, shape index: {2}]
  %15 = xla_tuple %s12, %s13, %s14
  %s16 = sld [smem:[#allocation0]]
  $region121: #{encoder_forward.1} parent=0
    _
  %s18 = ssub.s32 1, %s16
  %s19 = scalar_select 0, %s18, %s16
  $region1: #{encoder_forward.1} parent=0
    #allocation5 [shape = 'u8[98304]{0}', space=vmem, size = 0x18000, scoped, tag = 'input window, operand 3, single buffered']
    #allocation6 [shape = 's32[2]{0}', space=sflag, size = 0x8, scoped, tag = 'scoped memory for encoder_forward.1']
    #allocation7 [shape = 'u8[393216]{0}', space=vmem, size = 0x60000, scoped, tag = 'input window, operand 6, single buffered']
    #allocation8 [shape = 's32[1]{0}', space=sflag, size = 0x4, scoped, tag = 'scoped memory for encoder_forward.1']
    #allocation9 [shape = 'u8[32768]{0}', space=vmem, size = 0x8000, scoped, tag = 'input window, operand 9, single buffered']
    #allocation10 [shape = 'u8[32768]{0}', space=vmem, size = 0x8000, scoped, tag = 'input window, operand 10, single buffered']
    #allocation11 [shape = 's32[1]{0}', space=sflag, size = 0x4, scoped, tag = 'scoped memory for encoder_forward.1']
    %20 = vsyncpa [#allocation6], 0
    %21 = vsyncpa [#allocation8], 0
    %22 = vsyncpa [#allocation11], 0
    loop: start=0, step=1, limit=6
    $region2: #{encoder_forward.1} parent=1 // loop_pre_header
      _
    $region3: #{encoder_forward.1} parent=1 // loop_header
      %s24 = sphi 0, %s28
      %p25 = scmp.ge.s32.totalorder %s24, 6
      %s34 = sphi 0, %s36
      %s37 = sphi 0, %s34
      %s38 = sphi 0, %s37
      %s54 = sphi 0, %s38
      %s62 = sphi 0, %s64
      %s65 = sphi 0, %s62
      %s66 = sphi 0, %s65
      %s82 = sphi 0, %s66
      %s86 = sphi 0, %s86
      %s88 = sphi 0, %s86
      %s89 = sphi 0, %s88
      %s103 = sphi 0, %s89
      %s107 = sphi 0, %s107
      %s109 = sphi 0, %s107
      %s110 = sphi 0, %s109
      %s124 = sphi 0, %s110
      %s128 = sphi 0, %s128
      %s130 = sphi 0, %s128
      %s131 = sphi 0, %s130
      %s145 = sphi 0, %s131
      %s149 = sphi 0, %s149
      %s151 = sphi 0, %s149
      %s152 = sphi 0, %s151
      %s166 = sphi 0, %s152
      %s170 = sphi 0, %s170
      %s172 = sphi 0, %s170
      %s173 = sphi 0, %s172
      %s187 = sphi 0, %s173
      %s191 = sphi 0, %s191
      %s193 = sphi 0, %s191
      %s194 = sphi 0, %s193
      %s208 = sphi 0, %s194
      %s212 = sphi 0, %s212
      %s214 = sphi 0, %s212
      %s215 = sphi 0, %s214
      %s229 = sphi 0, %s215
      %s233 = sphi 0, %s233
      %s235 = sphi 0, %s233
      %s236 = sphi 0, %s235
      %s250 = sphi 0, %s236
      %s254 = sphi 0, %s254
      %s256 = sphi 0, %s254
      %s257 = sphi 0, %s256
      %s271 = sphi 0, %s257
      %s275 = sphi 0, %s275
      %s277 = sphi 0, %s275
      %s278 = sphi 0, %s277
      %s292 = sphi 0, %s278
      %s298 = sphi 0, %s300
      %s301 = sphi 0, %s298
      %s302 = sphi 0, %s301
      %s318 = sphi 0, %s302
      %s326 = sphi 0, %s328
      %s329 = sphi 0, %s326
      %s330 = sphi 0, %s329
      %s346 = sphi 0, %s330
      %s350 = sphi 0, %s350
      %s352 = sphi 0, %s350
      %s353 = sphi 0, %s352
      %s367 = sphi 0, %s353
    $region4: #{encoder_forward.1} parent=1 // loop_header_branch
      %27 = sbr.rel (%p25) target = $region8
    $region5: #{encoder_forward.1} parent=1 // loop_body
      %s29 = ssub.s32 %s24, 1
      %s30 = ssub.s32 %s24, 2
      %s31 = sadd.s32 %s24, 1
      %s32 = ssub.s32 %s24, %s31
      %p33 = scmp.eq.s32.totalorder %s32, 0
      %s35 = sadd.s32 %s34, 1
      %s36 = scalar_select %p33, %s34, %s35
      %p39 = pneg %p33
      %p40 = scmp.eq.s32.totalorder %s24, 3
      %p41 = por %p39, %p40
      %p42 = scmp.ne.s32.totalorder %s34, %s37
      %p43 = scmp.eq.s32.totalorder %s24, 0
      %p44 = por %p42, %p43
      %p45 = scmp.ne.s32.totalorder %s34, %s37
      %p46 = scmp.eq.s32.totalorder %s29, 3
      %p47 = por %p45, %p46
      %p48 = scmp.ne.s32.totalorder %s37, %s38
      %p49 = scmp.eq.s32.totalorder %s29, 0
      %p50 = por %p48, %p49
      %p51 = scmp.ne.s32.totalorder %s37, %s38
      %p52 = scmp.eq.s32.totalorder %s30, 3
      %p53 = por %p51, %p52
      %p55 = scmp.ne.s32.totalorder %s38, %s54
      %p56 = scmp.eq.s32.totalorder %s30, 0
      %p57 = por %p55, %p56
      %s58 = ssub.s32 3, %s24
      %s59 = ssub.s32 3, %s31
      %s60 = ssub.s32 %s58, %s59
      %p61 = scmp.eq.s32.totalorder %s60, 0
      %s63 = sadd.s32 %s62, 1
      %s64 = scalar_select %p61, %s62, %s63
      %p67 = pneg %p61
      %p68 = scmp.eq.s32.totalorder %s24, 3
      %p69 = por %p67, %p68
      %p70 = scmp.ne.s32.totalorder %s62, %s65
      %p71 = scmp.eq.s32.totalorder %s24, 0
      %p72 = por %p70, %p71
      %p73 = scmp.ne.s32.totalorder %s62, %s65
      %p74 = scmp.eq.s32.totalorder %s29, 3
      %p75 = por %p73, %p74
      %p76 = scmp.ne.s32.totalorder %s65, %s66
      %p77 = scmp.eq.s32.totalorder %s29, 0
      %p78 = por %p76, %p77
      %p79 = scmp.ne.s32.totalorder %s65, %s66
      %p80 = scmp.eq.s32.totalorder %s30, 3
      %p81 = por %p79, %p80
      %p83 = scmp.ne.s32.totalorder %s66, %s82
      %p84 = scmp.eq.s32.totalorder %s30, 0
      %p85 = por %p83, %p84
      %s87 = sadd.s32 %s86, 1
      %p90 = scmp.eq.s32.totalorder %s24, 3
      %p91 = scmp.ne.s32.totalorder %s86, %s88
      %p92 = scmp.eq.s32.totalorder %s24, 0
      %p93 = por %p91, %p92
      %p94 = scmp.ne.s32.totalorder %s86, %s88
      %p95 = scmp.eq.s32.totalorder %s29, 3
      %p96 = por %p94, %p95
      %p97 = scmp.ne.s32.totalorder %s88, %s89
      %p98 = scmp.eq.s32.totalorder %s29, 0
      %p99 = por %p97, %p98
      %p100 = scmp.ne.s32.totalorder %s88, %s89
      %p101 = scmp.eq.s32.totalorder %s30, 3
      %p102 = por %p100, %p101
      %p104 = scmp.ne.s32.totalorder %s89, %s103
      %p105 = scmp.eq.s32.totalorder %s30, 0
      %p106 = por %p104, %p105
      %s108 = sadd.s32 %s107, 1
      %p111 = scmp.eq.s32.totalorder %s24, 3
      %p112 = scmp.ne.s32.totalorder %s107, %s109
      %p113 = scmp.eq.s32.totalorder %s24, 0
      %p114 = por %p112, %p113
      %p115 = scmp.ne.s32.totalorder %s107, %s109
      %p116 = scmp.eq.s32.totalorder %s29, 3
      %p117 = por %p115, %p116
      %p118 = scmp.ne.s32.totalorder %s109, %s110
      %p119 = scmp.eq.s32.totalorder %s29, 0
      %p120 = por %p118, %p119
      %p121 = scmp.ne.s32.totalorder %s109, %s110
      %p122 = scmp.eq.s32.totalorder %s30, 3
      %p123 = por %p121, %p122
      %p125 = scmp.ne.s32.totalorder %s110, %s124
      %p126 = scmp.eq.s32.totalorder %s30, 0
      %p127 = por %p125, %p126
      %s129 = sadd.s32 %s128, 1
      %p132 = scmp.eq.s32.totalorder %s24, 3
      %p133 = scmp.ne.s32.totalorder %s128, %s130
      %p134 = scmp.eq.s32.totalorder %s24, 0
      %p135 = por %p133, %p134
      %p136 = scmp.ne.s32.totalorder %s128, %s130
      %p137 = scmp.eq.s32.totalorder %s29, 3
      %p138 = por %p136, %p137
      %p139 = scmp.ne.s32.totalorder %s130, %s131
      %p140 = scmp.eq.s32.totalorder %s29, 0
      %p141 = por %p139, %p140
      %p142 = scmp.ne.s32.totalorder %s130, %s131
      %p143 = scmp.eq.s32.totalorder %s30, 3
      %p144 = por %p142, %p143
      %p146 = scmp.ne.s32.totalorder %s131, %s145
      %p147 = scmp.eq.s32.totalorder %s30, 0
      %p148 = por %p146, %p147
      %s150 = sadd.s32 %s149, 1
      %p153 = scmp.eq.s32.totalorder %s24, 3
      %p154 = scmp.ne.s32.totalorder %s149, %s151
      %p155 = scmp.eq.s32.totalorder %s24, 0
      %p156 = por %p154, %p155
      %p157 = scmp.ne.s32.totalorder %s149, %s151
      %p158 = scmp.eq.s32.totalorder %s29, 3
      %p159 = por %p157, %p158
      %p160 = scmp.ne.s32.totalorder %s151, %s152
      %p161 = scmp.eq.s32.totalorder %s29, 0
      %p162 = por %p160, %p161
      %p163 = scmp.ne.s32.totalorder %s151, %s152
      %p164 = scmp.eq.s32.totalorder %s30, 3
      %p165 = por %p163, %p164
      %p167 = scmp.ne.s32.totalorder %s152, %s166
      %p168 = scmp.eq.s32.totalorder %s30, 0
      %p169 = por %p167, %p168
      %s171 = sadd.s32 %s170, 1
      %p174 = scmp.eq.s32.totalorder %s24, 3
      %p175 = scmp.ne.s32.totalorder %s170, %s172
      %p176 = scmp.eq.s32.totalorder %s24, 0
      %p177 = por %p175, %p176
      %p178 = scmp.ne.s32.totalorder %s170, %s172
      %p179 = scmp.eq.s32.totalorder %s29, 3
      %p180 = por %p178, %p179
      %p181 = scmp.ne.s32.totalorder %s172, %s173
      %p182 = scmp.eq.s32.totalorder %s29, 0
      %p183 = por %p181, %p182
      %p184 = scmp.ne.s32.totalorder %s172, %s173
      %p185 = scmp.eq.s32.totalorder %s30, 3
      %p186 = por %p184, %p185
      %p188 = scmp.ne.s32.totalorder %s173, %s187
      %p189 = scmp.eq.s32.totalorder %s30, 0
      %p190 = por %p188, %p189
      %s192 = sadd.s32 %s191, 1
      %p195 = scmp.eq.s32.totalorder %s24, 3
      %p196 = scmp.ne.s32.totalorder %s191, %s193
      %p197 = scmp.eq.s32.totalorder %s24, 0
      %p198 = por %p196, %p197
      %p199 = scmp.ne.s32.totalorder %s191, %s193
      %p200 = scmp.eq.s32.totalorder %s29, 3
      %p201 = por %p199, %p200
      %p202 = scmp.ne.s32.totalorder %s193, %s194
      %p203 = scmp.eq.s32.totalorder %s29, 0
      %p204 = por %p202, %p203
      %p205 = scmp.ne.s32.totalorder %s193, %s194
      %p206 = scmp.eq.s32.totalorder %s30, 3
      %p207 = por %p205, %p206
      %p209 = scmp.ne.s32.totalorder %s194, %s208
      %p210 = scmp.eq.s32.totalorder %s30, 0
      %p211 = por %p209, %p210
      %s213 = sadd.s32 %s212, 1
      %p216 = scmp.eq.s32.totalorder %s24, 3
      %p217 = scmp.ne.s32.totalorder %s212, %s214
      %p218 = scmp.eq.s32.totalorder %s24, 0
      %p219 = por %p217, %p218
      %p220 = scmp.ne.s32.totalorder %s212, %s214
      %p221 = scmp.eq.s32.totalorder %s29, 3
      %p222 = por %p220, %p221
      %p223 = scmp.ne.s32.totalorder %s214, %s215
      %p224 = scmp.eq.s32.totalorder %s29, 0
      %p225 = por %p223, %p224
      %p226 = scmp.ne.s32.totalorder %s214, %s215
      %p227 = scmp.eq.s32.totalorder %s30, 3
      %p228 = por %p226, %p227
      %p230 = scmp.ne.s32.totalorder %s215, %s229
      %p231 = scmp.eq.s32.totalorder %s30, 0
      %p232 = por %p230, %p231
      %s234 = sadd.s32 %s233, 1
      %p237 = scmp.eq.s32.totalorder %s24, 3
      %p238 = scmp.ne.s32.totalorder %s233, %s235
      %p239 = scmp.eq.s32.totalorder %s24, 0
      %p240 = por %p238, %p239
      %p241 = scmp.ne.s32.totalorder %s233, %s235
      %p242 = scmp.eq.s32.totalorder %s29, 3
      %p243 = por %p241, %p242
      %p244 = scmp.ne.s32.totalorder %s235, %s236
      %p245 = scmp.eq.s32.totalorder %s29, 0
      %p246 = por %p244, %p245
      %p247 = scmp.ne.s32.totalorder %s235, %s236
      %p248 = scmp.eq.s32.totalorder %s30, 3
      %p249 = por %p247, %p248
      %p251 = scmp.ne.s32.totalorder %s236, %s250
      %p252 = scmp.eq.s32.totalorder %s30, 0
      %p253 = por %p251, %p252
      %s255 = sadd.s32 %s254, 1
      %p258 = scmp.eq.s32.totalorder %s24, 3
      %p259 = scmp.ne.s32.totalorder %s254, %s256
      %p260 = scmp.eq.s32.totalorder %s24, 0
      %p261 = por %p259, %p260
      %p262 = scmp.ne.s32.totalorder %s254, %s256
      %p263 = scmp.eq.s32.totalorder %s29, 3
      %p264 = por %p262, %p263
      %p265 = scmp.ne.s32.totalorder %s256, %s257
      %p266 = scmp.eq.s32.totalorder %s29, 0
      %p267 = por %p265, %p266
      %p268 = scmp.ne.s32.totalorder %s256, %s257
      %p269 = scmp.eq.s32.totalorder %s30, 3
      %p270 = por %p268, %p269
      %p272 = scmp.ne.s32.totalorder %s257, %s271
      %p273 = scmp.eq.s32.totalorder %s30, 0
      %p274 = por %p272, %p273
      %s276 = sadd.s32 %s275, 1
      %p279 = scmp.eq.s32.totalorder %s24, 3
      %p280 = scmp.ne.s32.totalorder %s275, %s277
      %p281 = scmp.eq.s32.totalorder %s24, 0
      %p282 = por %p280, %p281
      %p283 = scmp.ne.s32.totalorder %s275, %s277
      %p284 = scmp.eq.s32.totalorder %s29, 3
      %p285 = por %p283, %p284
      %p286 = scmp.ne.s32.totalorder %s277, %s278
      %p287 = scmp.eq.s32.totalorder %s29, 0
      %p288 = por %p286, %p287
      %p289 = scmp.ne.s32.totalorder %s277, %s278
      %p290 = scmp.eq.s32.totalorder %s30, 3
      %p291 = por %p289, %p290
      %p293 = scmp.ne.s32.totalorder %s278, %s292
      %p294 = scmp.eq.s32.totalorder %s30, 0
      %p295 = por %p293, %p294
      %s296 = ssub.s32 %s24, %s31
      %p297 = scmp.eq.s32.totalorder %s296, 0
      %s299 = sadd.s32 %s298, 1
      %s300 = scalar_select %p297, %s298, %s299
      %p303 = pneg %p297
      %p304 = scmp.eq.s32.totalorder %s24, 3
      %p305 = por %p303, %p304
      %p306 = scmp.ne.s32.totalorder %s298, %s301
      %p307 = scmp.eq.s32.totalorder %s24, 0
      %p308 = por %p306, %p307
      %p309 = scmp.ne.s32.totalorder %s298, %s301
      %p310 = scmp.eq.s32.totalorder %s29, 3
      %p311 = por %p309, %p310
      %p312 = scmp.ne.s32.totalorder %s301, %s302
      %p313 = scmp.eq.s32.totalorder %s29, 0
      %p314 = por %p312, %p313
      %p315 = scmp.ne.s32.totalorder %s301, %s302
      %p316 = scmp.eq.s32.totalorder %s30, 3
      %p317 = por %p315, %p316
      %p319 = scmp.ne.s32.totalorder %s302, %s318
      %p320 = scmp.eq.s32.totalorder %s30, 0
      %p321 = por %p319, %p320
      %s322 = ssub.s32 3, %s24
      %s323 = ssub.s32 3, %s31
      %s324 = ssub.s32 %s322, %s323
      %p325 = scmp.eq.s32.totalorder %s324, 0
      %s327 = sadd.s32 %s326, 1
      %s328 = scalar_select %p325, %s326, %s327
      %p331 = pneg %p325
      %p332 = scmp.eq.s32.totalorder %s24, 3
      %p333 = por %p331, %p332
      %p334 = scmp.ne.s32.totalorder %s326, %s329
      %p335 = scmp.eq.s32.totalorder %s24, 0
      %p336 = por %p334, %p335
      %p337 = scmp.ne.s32.totalorder %s326, %s329
      %p338 = scmp.eq.s32.totalorder %s29, 3
      %p339 = por %p337, %p338
      %p340 = scmp.ne.s32.totalorder %s329, %s330
      %p341 = scmp.eq.s32.totalorder %s29, 0
      %p342 = por %p340, %p341
      %p343 = scmp.ne.s32.totalorder %s329, %s330
      %p344 = scmp.eq.s32.totalorder %s30, 3
      %p345 = por %p343, %p344
      %p347 = scmp.ne.s32.totalorder %s330, %s346
      %p348 = scmp.eq.s32.totalorder %s30, 0
      %p349 = por %p347, %p348
      %s351 = sadd.s32 %s350, 1
      %p354 = scmp.eq.s32.totalorder %s24, 3
      %p355 = scmp.ne.s32.totalorder %s350, %s352
      %p356 = scmp.eq.s32.totalorder %s24, 0
      %p357 = por %p355, %p356
      %p358 = scmp.ne.s32.totalorder %s350, %s352
      %p359 = scmp.eq.s32.totalorder %s29, 3
      %p360 = por %p358, %p359
      %p361 = scmp.ne.s32.totalorder %s352, %s353
      %p362 = scmp.eq.s32.totalorder %s29, 0
      %p363 = por %p361, %p362
      %p364 = scmp.ne.s32.totalorder %s352, %s353
      %p365 = scmp.eq.s32.totalorder %s30, 3
      %p366 = por %p364, %p365
      %p368 = scmp.ne.s32.totalorder %s353, %s367
      %p369 = scmp.eq.s32.totalorder %s30, 0
      %p370 = por %p368, %p369
      %p371 = scmp.le.s32.totalorder 1, %s24
      %p372 = scmp.lt.s32.totalorder %s24, 5
      %p373 = pnand %p371, %p372
      %p374 = pneg %p373
      // Predicated region
      $region9: #{encoder_forward.1} parent=5 // pred_check
        _
      $region10: #{encoder_forward.1} parent=5 // pred_check_branch
        %376 = sbr.rel (%p373) target = $region12
      $region11: #{encoder_forward.1} parent=5 // pred_region
        %s377 = ssub.s32 %s24, 1
        // Predicated region
        $region13: #{encoder_forward.1} parent=11 // pred_check
          %p378 = pneg %p99
        $region14: #{encoder_forward.1} parent=11 // pred_check_branch
          %380 = sbr.rel (%p378) target = $region16
        $region15: #{encoder_forward.1} parent=11 // pred_region
          _
        $region16: #{encoder_forward.1} parent=11 // pred_fallthru
          _
        // Predicated region
        $region17: #{encoder_forward.1} parent=11 // pred_check
          %p381 = pneg %p120
        $region18: #{encoder_forward.1} parent=11 // pred_check_branch
          %383 = sbr.rel (%p381) target = $region20
        $region19: #{encoder_forward.1} parent=11 // pred_region
          %s385 = ssub.s32 3072, 3072
          %386 = vsyncadd [#allocation6], %s385
          %s387 = sshll.u32 [#allocation5], 4
          %s388 = int_to_ptr.vmem [resolvable:$true] %s387
          %393 = dma.hbm_to_vmem [thread:$0]  %s3, 3072, %s388, [#allocation6], 192, 192, 12
        $region20: #{encoder_forward.1} parent=11 // pred_fallthru
          _
        // Predicated region
        $region21: #{encoder_forward.1} parent=11 // pred_check
          %p394 = pneg %p141
        $region22: #{encoder_forward.1} parent=11 // pred_check_branch
          %396 = sbr.rel (%p394) target = $region24
        $region23: #{encoder_forward.1} parent=11 // pred_region
          _
        $region24: #{encoder_forward.1} parent=11 // pred_fallthru
          _
        // Predicated region
        $region25: #{encoder_forward.1} parent=11 // pred_check
          %p397 = pneg %p162
        $region26: #{encoder_forward.1} parent=11 // pred_check_branch
          %399 = sbr.rel (%p397) target = $region28
        $region27: #{encoder_forward.1} parent=11 // pred_region
          _
        $region28: #{encoder_forward.1} parent=11 // pred_fallthru
          _
        // Predicated region
        $region29: #{encoder_forward.1} parent=11 // pred_check
          %p400 = pneg %p183
        $region30: #{encoder_forward.1} parent=11 // pred_check_branch
          %402 = sbr.rel (%p400) target = $region32
        $region31: #{encoder_forward.1} parent=11 // pred_region
          %s404 = ssub.s32 12288, 12288
          %405 = vsyncadd [#allocation8], %s404
          %s406 = sshll.u32 [#allocation7], 4
          %s407 = int_to_ptr.vmem [resolvable:$true] %s406
          %412 = dma.hbm_to_vmem [thread:$0]  %s6, 12288, %s407, [#allocation8], 384, 384, 24
        $region32: #{encoder_forward.1} parent=11 // pred_fallthru
          _
        // Predicated region
        $region33: #{encoder_forward.1} parent=11 // pred_check
          %p413 = pneg %p204
        $region34: #{encoder_forward.1} parent=11 // pred_check_branch
          %415 = sbr.rel (%p413) target = $region36
        $region35: #{encoder_forward.1} parent=11 // pred_region
          _
        $region36: #{encoder_forward.1} parent=11 // pred_fallthru
          _
        // Predicated region
        $region37: #{encoder_forward.1} parent=11 // pred_check
          %p416 = pneg %p225
        $region38: #{encoder_forward.1} parent=11 // pred_check_branch
          %418 = sbr.rel (%p416) target = $region40
        $region39: #{encoder_forward.1} parent=11 // pred_region
          _
        $region40: #{encoder_forward.1} parent=11 // pred_fallthru
          _
        // Predicated region
        $region41: #{encoder_forward.1} parent=11 // pred_check
          %p419 = pneg %p246
        $region42: #{encoder_forward.1} parent=11 // pred_check_branch
          %421 = sbr.rel (%p419) target = $region44
        $region43: #{encoder_forward.1} parent=11 // pred_region
          %s423 = ssub.s32 1024, 1024
          %424 = vsyncadd [#allocation8], %s423
          %s425 = sshll.u32 [#allocation9], 4
          %s426 = int_to_ptr.vmem [resolvable:$true] %s425
          %431 = dma.hbm_to_vmem [thread:$0]  %s9, 1024, %s426, [#allocation8], 64, 64, 4
        $region44: #{encoder_forward.1} parent=11 // pred_fallthru
          _
        // Predicated region
        $region45: #{encoder_forward.1} parent=11 // pred_check
          %p432 = pneg %p267
        $region46: #{encoder_forward.1} parent=11 // pred_check_branch
          %434 = sbr.rel (%p432) target = $region48
        $region47: #{encoder_forward.1} parent=11 // pred_region
          %s436 = ssub.s32 1024, 1024
          %437 = vsyncadd [#allocation11], %s436
          %s438 = sshll.u32 [#allocation10], 4
          %s439 = int_to_ptr.vmem [resolvable:$true] %s438
          %444 = dma.hbm_to_vmem [thread:$0]  %s10, 1024, %s439, [#allocation11], 64, 64, 4
        $region48: #{encoder_forward.1} parent=11 // pred_fallthru
          _
        // Predicated region
        $region49: #{encoder_forward.1} parent=11 // pred_check
          %p445 = pneg %p288
        $region50: #{encoder_forward.1} parent=11 // pred_check_branch
          %447 = sbr.rel (%p445) target = $region52
        $region51: #{encoder_forward.1} parent=11 // pred_region
          _
        $region52: #{encoder_forward.1} parent=11 // pred_fallthru
          _
      $region12: #{encoder_forward.1} parent=5 // pred_fallthru
        _
      %p448 = scmp.lt.s32.totalorder %s24, 4
      // Predicated region
      $region53: #{encoder_forward.1} parent=5 // pred_check
        %p449 = pneg %p448
      $region54: #{encoder_forward.1} parent=5 // pred_check_branch
        %451 = sbr.rel (%p449) target = $region56
      $region55: #{encoder_forward.1} parent=5 // pred_region
        // Predicated region
        $region57: #{encoder_forward.1} parent=55 // pred_check
          %p452 = pneg %p44
        $region58: #{encoder_forward.1} parent=55 // pred_check_branch
          %454 = sbr.rel (%p452) target = $region60
        $region59: #{encoder_forward.1} parent=55 // pred_region
          %s455 = smul.u32 2, %s24
          %p456 = scmp.lt.s32.totalorder %s455, 7
          %s457 = scalar_select %p456, %s455, 7
          %s458 = smul.addr %s457, 4
          %s459 = scalar_lea.vmem %s0, %s458
          %s460 = smul.u32 2, %s24
        $region60: #{encoder_forward.1} parent=55 // pred_fallthru
          _
        // Predicated region
        $region61: #{encoder_forward.1} parent=55 // pred_check
          %p461 = pneg %p72
        $region62: #{encoder_forward.1} parent=55 // pred_check_branch
          %463 = sbr.rel (%p461) target = $region64
        $region63: #{encoder_forward.1} parent=55 // pred_region
          %s464 = ssub.s32 3, %s24
          %s465 = smul.u32 2, %s464
          %p466 = scmp.lt.s32.totalorder %s465, 7
          %s467 = scalar_select %p466, %s465, 7
          %s468 = smul.addr %s467, 4
          %s469 = scalar_lea.vmem %s1, %s468
          %s470 = ssub.s32 3, %s24
          %s471 = smul.u32 2, %s470
        $region64: #{encoder_forward.1} parent=55 // pred_fallthru
          _
      $region56: #{encoder_forward.1} parent=5 // pred_fallthru
        _
      %p472 = scmp.le.s32.totalorder 1, %s24
      %p473 = scmp.lt.s32.totalorder %s24, 5
      %p474 = pnand %p472, %p473
      %p475 = pneg %p474
      // Predicated region
      $region65: #{encoder_forward.1} parent=5 // pred_check
        _
      $region66: #{encoder_forward.1} parent=5 // pred_check_branch
        %477 = sbr.rel (%p474) target = $region68
      $region67: #{encoder_forward.1} parent=5 // pred_region
        %s478 = ssub.s32 %s24, 1
        // Predicated region
        $region69: #{encoder_forward.1} parent=67 // pred_check
          %p479 = pneg %p120
        $region70: #{encoder_forward.1} parent=67 // pred_check_branch
          %481 = sbr.rel (%p479) target = $region72
        $region71: #{encoder_forward.1} parent=67 // pred_region
          %482 = dma.done [#allocation6], 3072
        $region72: #{encoder_forward.1} parent=67 // pred_fallthru
          _
        // Predicated region
        $region73: #{encoder_forward.1} parent=67 // pred_check
          %p483 = pneg %p183
        $region74: #{encoder_forward.1} parent=67 // pred_check_branch
          %485 = sbr.rel (%p483) target = $region76
        $region75: #{encoder_forward.1} parent=67 // pred_region
          %486 = dma.done [#allocation8], 12288
        $region76: #{encoder_forward.1} parent=67 // pred_fallthru
          _
        // Predicated region
        $region77: #{encoder_forward.1} parent=67 // pred_check
          %p487 = pneg %p246
        $region78: #{encoder_forward.1} parent=67 // pred_check_branch
          %489 = sbr.rel (%p487) target = $region80
        $region79: #{encoder_forward.1} parent=67 // pred_region
          %490 = dma.done [#allocation8], 1024
        $region80: #{encoder_forward.1} parent=67 // pred_fallthru
          _
        // Predicated region
        $region81: #{encoder_forward.1} parent=67 // pred_check
          %p491 = pneg %p267
        $region82: #{encoder_forward.1} parent=67 // pred_check_branch
          %493 = sbr.rel (%p491) target = $region84
        $region83: #{encoder_forward.1} parent=67 // pred_region
          %494 = dma.done [#allocation11], 1024
        $region84: #{encoder_forward.1} parent=67 // pred_fallthru
          _
        %s495 = smul.u32 2, %s29
        %p496 = scmp.lt.s32.totalorder %s495, 7
        %s497 = scalar_select %p496, %s495, 7
        %s498 = smul.addr %s497, 4
        %s499 = scalar_lea.vmem %s0, %s498
        %p500 = pneg %p50
        %p501 = pneg %p47
        %s502 = ssub.s32 3, %s29
        %s503 = smul.u32 2, %s502
        %p504 = scmp.lt.s32.totalorder %s503, 7
        %s505 = scalar_select %p504, %s503, 7
        %s506 = smul.addr %s505, 4
        %s507 = scalar_lea.vmem %s1, %s506
        %p508 = pneg %p78
        %p509 = pneg %p75
        %p510 = pneg %p99
        %p511 = pneg %p96
        %p512 = pneg %p120
        %p513 = pneg %p117
        %p514 = pneg %p141
        %p515 = pneg %p138
        %p516 = pneg %p162
        %p517 = pneg %p159
        %p518 = pneg %p183
        %p519 = pneg %p180
        %p520 = pneg %p204
        %p521 = pneg %p201
        %p522 = pneg %p225
        %p523 = pneg %p222
        %p524 = pneg %p246
        %p525 = pneg %p243
        %p526 = pneg %p267
        %p527 = pneg %p264
        %p528 = pneg %p288
        %p529 = pneg %p285
        %p530 = pneg %p314
        %p531 = pneg %p311
        %s532 = smul.u32 2, %s29
        %p533 = scmp.lt.s32.totalorder %s532, 7
        %s534 = scalar_select %p533, %s532, 7
        %s535 = smul.addr %s534, 8
        %s536 = scalar_lea.vmem %s12, %s535
        %p537 = pneg %p342
        %p538 = pneg %p339
        %s539 = ssub.s32 3, %s29
        %s540 = smul.u32 2, %s539
        %p541 = scmp.lt.s32.totalorder %s540, 7
        %s542 = scalar_select %p541, %s540, 7
        %s543 = smul.addr %s542, 8
        %s544 = scalar_lea.vmem %s13, %s543
        %p545 = pneg %p363
        %p546 = pneg %p360
        %s547 = smul.u32 2, %s29
        %p548 = scmp.lt.s32.totalorder %s547, 7
        %s549 = scalar_select %p548, %s547, 7
        %s550 = smul.addr %s549, 4
        %s551 = scalar_lea.vmem %s0, %s550
        %s552 = smul.u32 2, %s29
        %s553 = ssub.s32 3, %s29
        %s554 = smul.u32 2, %s553
        %p555 = scmp.lt.s32.totalorder %s554, 7
        %s556 = scalar_select %p555, %s554, 7
        %s557 = smul.addr %s556, 4
        %s558 = scalar_lea.vmem %s1, %s557
        %s559 = ssub.s32 3, %s29
        %s560 = smul.u32 2, %s559
        %s561 = smul.u32 2, %s29
        %p562 = scmp.lt.s32.totalorder %s561, 7
        %s563 = scalar_select %p562, %s561, 7
        %s564 = smul.addr %s563, 8
        %s565 = scalar_lea.vmem %s12, %s564
        %s566 = smul.u32 2, %s29
        %s567 = ssub.s32 3, %s29
        %s568 = smul.u32 2, %s567
        %p569 = scmp.lt.s32.totalorder %s568, 7
        %s570 = scalar_select %p569, %s568, 7
        %s571 = smul.addr %s570, 8
        %s572 = scalar_lea.vmem %s13, %s571
        %s573 = ssub.s32 3, %s29
        %s574 = smul.u32 2, %s573
        %p576 = scmp.eq.s32.totalorder %s29, 0
        // Predicated region
        $region85: #{encoder_forward.1} parent=67 // pred_check
          %p577 = pneg %p576
        $region86: #{encoder_forward.1} parent=67 // pred_check_branch
          %579 = sbr.rel (%p577) target = $region88
        $region87: #{encoder_forward.1} parent=67 // pred_region
          %580 = vst [vmem:[#allocation4] sm:$0xff] 0.0
          %581 = vst [vmem:[#allocation4 + $0x8] sm:$0xff] 0.0
          %582 = vst [vmem:[%s14] sm:$0xff] 0.0
        $region88: #{encoder_forward.1} parent=67 // pred_fallthru
          _
        %v583 = vld [vmem:[%s551] sm:$0xf]
        %v584 = vld [vmem:[%s551 + $0x4] sm:$0xf]
        %v585 = vld [vmem:[%s558] sm:$0xf]
        %v586 = vld [vmem:[%s558 + $0x4] sm:$0xf]
        %v587 = vld [vmem:[%s2] sm:$0xff]
        %v588 = vld [vmem:[%s2 + $0x8] sm:$0xf]
        %v589 = vld [vmem:[%s2 + $0xc] sm:$0xff]
        %v590 = vld [vmem:[%s2 + $0x14] sm:$0xf]
        %v591 = vld [vmem:[%s2 + $0x18] sm:$0xff]
        %v592 = vld [vmem:[%s2 + $0x20] sm:$0xf]
        %v593 = vld [vmem:[%s2 + $0x24] sm:$0xff]
        %v594 = vld [vmem:[%s2 + $0x2c] sm:$0xf]
        %v595 = vld [vmem:[%s2 + $0x30] sm:$0xff]
        %v596 = vld [vmem:[%s2 + $0x38] sm:$0xf]
        %v597 = vld [vmem:[%s2 + $0x3c] sm:$0xff]
        %v598 = vld [vmem:[%s2 + $0x44] sm:$0xf]
        %v599 = vld [vmem:[%s2 + $0x48] sm:$0xff]
        %v600 = vld [vmem:[%s2 + $0x50] sm:$0xf]
        %v601 = vld [vmem:[%s2 + $0x54] sm:$0xff]
        %v602 = vld [vmem:[%s2 + $0x5c] sm:$0xf]
        %v603 = vld [vmem:[%s2 + $0x60] sm:$0xff]
        %v604 = vld [vmem:[%s2 + $0x68] sm:$0xf]
        %v605 = vld [vmem:[%s2 + $0x6c] sm:$0xff]
        %v606 = vld [vmem:[%s2 + $0x74] sm:$0xf]
        %v607 = vld [vmem:[%s2 + $0x78] sm:$0xff]
        %v608 = vld [vmem:[%s2 + $0x80] sm:$0xf]
        %v609 = vld [vmem:[%s2 + $0x84] sm:$0xff]
        %v610 = vld [vmem:[%s2 + $0x8c] sm:$0xf]
        %v611 = vld [vmem:[%s2 + $0x90] sm:$0xff]
        %v612 = vld [vmem:[%s2 + $0x98] sm:$0xf]
        %v613 = vld [vmem:[%s2 + $0x9c] sm:$0xff]
        %v614 = vld [vmem:[%s2 + $0xa4] sm:$0xf]
        %v615 = vld [vmem:[%s2 + $0xa8] sm:$0xff]
        %v616 = vld [vmem:[%s2 + $0xb0] sm:$0xf]
        %v617 = vld [vmem:[%s2 + $0xb4] sm:$0xff]
        %v618 = vld [vmem:[%s2 + $0xbc] sm:$0xf]
        %v619 = vld [vmem:[%s4] sm:$0x7]
        %v621 = vlaneseq
        %v622 = vshrl.u32 %v621, 7
        %v623 = vsub.s32 0, %v622
        %v624 = vrot.slane %v619, %v623
        %v625 = vlaneseq
        %v626 = vshrl.u32 %v625, 7
        %v627 = vsub.s32 1, %v626
        %v628 = vrot.slane %v619, %v627
        %v629 = vlaneseq
        %v630 = vshrl.u32 %v629, 7
        %v631 = vsub.s32 2, %v630
        %v632 = vrot.slane %v619, %v631
        %v638 = vunpack.c.l.b16 %v583
        %v639 = vunpack.c.l.b16 %v584
        %v640 = vpack.c.b16 %v639, %v638
        %v674 = vunpack.c.l.b16 %v587
        %v675 = vunpack.c.h.b16 %v587
        %v676 = vunpack.c.l.b16 %v588
        %v677 = vunpack.c.l.b16 %v589
        %v678 = vunpack.c.h.b16 %v589
        %v679 = vunpack.c.l.b16 %v590
        %v680 = vunpack.c.l.b16 %v591
        %v681 = vunpack.c.h.b16 %v591
        %v682 = vunpack.c.l.b16 %v592
        %v683 = vunpack.c.l.b16 %v593
        %v684 = vunpack.c.h.b16 %v593
        %v685 = vunpack.c.l.b16 %v594
        %v686 = vunpack.c.l.b16 %v595
        %v687 = vunpack.c.h.b16 %v595
        %v688 = vunpack.c.l.b16 %v596
        %v689 = vunpack.c.l.b16 %v597
        %v690 = vunpack.c.h.b16 %v597
        %v691 = vunpack.c.l.b16 %v598
        %v692 = vunpack.c.l.b16 %v599
        %v693 = vunpack.c.h.b16 %v599
        %v694 = vunpack.c.l.b16 %v600
        %v695 = vunpack.c.l.b16 %v601
        %v696 = vunpack.c.h.b16 %v601
        %v697 = vunpack.c.l.b16 %v602
        %v698 = vunpack.c.l.b16 %v603
        %v699 = vunpack.c.h.b16 %v603
        %v700 = vunpack.c.l.b16 %v604
        %v701 = vunpack.c.l.b16 %v605
        %v702 = vunpack.c.h.b16 %v605
        %v703 = vunpack.c.l.b16 %v606
        %v704 = vunpack.c.l.b16 %v607
        %v705 = vunpack.c.h.b16 %v607
        %v706 = vunpack.c.l.b16 %v608
        %v707 = vunpack.c.l.b16 %v609
        %v708 = vunpack.c.h.b16 %v609
        %v709 = vunpack.c.l.b16 %v610
        %v710 = vunpack.c.l.b16 %v611
        %v711 = vunpack.c.h.b16 %v611
        %v712 = vunpack.c.l.b16 %v612
        %v713 = vunpack.c.l.b16 %v613
        %v714 = vunpack.c.h.b16 %v613
        %v715 = vunpack.c.l.b16 %v614
        %v716 = vunpack.c.l.b16 %v615
        %v717 = vunpack.c.h.b16 %v615
        %v718 = vunpack.c.l.b16 %v616
        %v719 = vunpack.c.l.b16 %v617
        %v720 = vunpack.c.h.b16 %v617
        %v721 = vunpack.c.l.b16 %v618
        %v722 = vpack.c.b16 %v677, %v674
        %v723 = vpack.c.b16 %v678, %v675
        %v724 = vpack.c.b16 %v679, %v676
        %v725 = vpack.c.b16 %v683, %v680
        %v726 = vpack.c.b16 %v684, %v681
        %v727 = vpack.c.b16 %v685, %v682
        %v728 = vpack.c.b16 %v689, %v686
        %v729 = vpack.c.b16 %v690, %v687
        %v730 = vpack.c.b16 %v691, %v688
        %v731 = vpack.c.b16 %v695, %v692
        %v732 = vpack.c.b16 %v696, %v693
        %v733 = vpack.c.b16 %v697, %v694
        %v734 = vpack.c.b16 %v701, %v698
        %v735 = vpack.c.b16 %v702, %v699
        %v736 = vpack.c.b16 %v703, %v700
        %v737 = vpack.c.b16 %v707, %v704
        %v738 = vpack.c.b16 %v708, %v705
        %v739 = vpack.c.b16 %v709, %v706
        %v740 = vpack.c.b16 %v713, %v710
        %v741 = vpack.c.b16 %v714, %v711
        %v742 = vpack.c.b16 %v715, %v712
        %v743 = vpack.c.b16 %v719, %v716
        %v744 = vpack.c.b16 %v720, %v717
        %v745 = vpack.c.b16 %v721, %v718
        %770 = vmatprep.subr.bf16.mxu0 %v723
        %771 = vmatpush1.bf16.msra.mxu0 %v722
        %772 = vmatprep.subr.bf16.mxu0 %v726
        %773 = vmatpush1.bf16.msra.mxu0 %v725
        %774 = vmatprep.subr.bf16.mxu0 %v729
        %775 = vmatpush1.bf16.msra.mxu0 %v728
        %776 = vmatprep.subr.bf16.mxu0 %v732
        %777 = vmatpush1.bf16.msra.mxu0 %v731
        %778 = vmatprep.subr.bf16.mxu0 %v735
        %779 = vmatpush1.bf16.msra.mxu0 %v734
        %780 = vmatprep.subr.bf16.mxu0 %v738
        %781 = vmatpush1.bf16.msra.mxu0 %v737
        %782 = vmatprep.subr.bf16.mxu0 %v741
        %783 = vmatpush1.bf16.msra.mxu0 %v740
        %784 = vmatprep.subr.bf16.mxu0 %v744
        %785 = vmatpush1.bf16.msra.mxu0 %v743
        %786 = vmatprep.subr.bf16.mxu0 0
        %787 = vmatpush1.bf16.msra.mxu0 0
        %788 = vmatprep.subr.bf16.mxu0 0
        %789 = vmatpush1.bf16.msra.mxu0 0
        %790 = vmatprep.subr.bf16.mxu0 0
        %791 = vmatpush1.bf16.msra.mxu0 0
        %792 = vmatprep.subr.bf16.mxu0 0
        %793 = vmatpush1.bf16.msra.mxu0 0
        %794 = vmatprep.subr.bf16.mxu0 0
        %795 = vmatpush1.bf16.msra.mxu0 0
        %796 = vmatprep.subr.bf16.mxu0 0
        %797 = vmatpush1.bf16.msra.mxu0 0
        %798 = vmatprep.subr.bf16.mxu0 0
        %799 = vmatpush1.bf16.msra.mxu0 0
        %800 = vmatprep.subr.bf16.mxu0 0
        %801 = vmatpush1.bf16.msra.mxu0 0
        %802 = vmatprep.mubr.bf16.mxu0 0
        %803 = vmatmul.mubr.bf16.gmra.mrb[0].mxu0 %v640
        %v804 = vpop.f32.mrb[0].mxu0
        %v805 = vadd.f32 %v624, %v804
        %v806 = vpop.f32.mrb[0].mxu0
        %v807 = vadd.f32 %v628, %v806
        %v808 = vpop.f32.mrb[0].mxu0
        %v809 = vadd.f32 %v624, %v808
        %v810 = vpop.f32.mrb[0].mxu0
        %v811 = vadd.f32 %v628, %v810
        %812 = vdwg.mxu0
        %813 = vmatprep.subr.bf16.mxu0 0
        %814 = vmatpush1.bf16.msra.mxu0 %v724
        %815 = vmatprep.subr.bf16.mxu0 0
        %816 = vmatpush1.bf16.msra.mxu0 %v727
        %817 = vmatprep.subr.bf16.mxu0 0
        %818 = vmatpush1.bf16.msra.mxu0 %v730
        %819 = vmatprep.subr.bf16.mxu0 0
        %820 = vmatpush1.bf16.msra.mxu0 %v733
        %821 = vmatprep.subr.bf16.mxu0 0
        %822 = vmatpush1.bf16.msra.mxu0 %v736
        %823 = vmatprep.subr.bf16.mxu0 0
        %824 = vmatpush1.bf16.msra.mxu0 %v739
        %825 = vmatprep.subr.bf16.mxu0 0
        %826 = vmatpush1.bf16.msra.mxu0 %v742
        %827 = vmatprep.subr.bf16.mxu0 0
        %828 = vmatpush1.bf16.msra.mxu0 %v745
        %829 = vmatprep.subr.bf16.mxu0 0
        %830 = vmatpush1.bf16.msra.mxu0 0
        %831 = vmatprep.subr.bf16.mxu0 0
        %832 = vmatpush1.bf16.msra.mxu0 0
        %833 = vmatprep.subr.bf16.mxu0 0
        %834 = vmatpush1.bf16.msra.mxu0 0
        %835 = vmatprep.subr.bf16.mxu0 0
        %836 = vmatpush1.bf16.msra.mxu0 0
        %837 = vmatprep.subr.bf16.mxu0 0
        %838 = vmatpush1.bf16.msra.mxu0 0
        %839 = vmatprep.subr.bf16.mxu0 0
        %840 = vmatpush1.bf16.msra.mxu0 0
        %841 = vmatprep.subr.bf16.mxu0 0
        %842 = vmatpush1.bf16.msra.mxu0 0
        %843 = vmatprep.subr.bf16.mxu0 0
        %844 = vmatpush1.bf16.msra.mxu0 0
        %845 = vmatprep.mubr.bf16.mxu0 0
        %846 = vmatmul.mubr.bf16.gmra.mrb[0].mxu0 %v640
        %v847 = vpop.f32.mrb[0].mxu0
        %v848 = vadd.f32 %v632, %v847
        %v849 = vpop.f32.mrb[0].mxu0
        %v850 = vpop.f32.mrb[0].mxu0
        %v851 = vadd.f32 %v632, %v850
        %v852 = vpop.f32.mrb[0].mxu0
        %853 = vdwg.mxu0
        %v854 = vld [vmem:[#allocation5] sm:$0xff]
        %v855 = vld [vmem:[#allocation5 + $0x8] sm:$0xf]
        %v856 = vld [vmem:[#allocation5 + $0xc] sm:$0xff]
        %v857 = vld [vmem:[#allocation5 + $0x14] sm:$0xf]
        %v858 = vld [vmem:[#allocation5 + $0x18] sm:$0xff]
        %v859 = vld [vmem:[#allocation5 + $0x20] sm:$0xf]
        %v860 = vld [vmem:[#allocation5 + $0x24] sm:$0xff]
        %v861 = vld [vmem:[#allocation5 + $0x2c] sm:$0xf]
        %v862 = vld [vmem:[#allocation5 + $0x30] sm:$0xff]
        %v863 = vld [vmem:[#allocation5 + $0x38] sm:$0xf]
        %v864 = vld [vmem:[#allocation5 + $0x3c] sm:$0xff]
        %v865 = vld [vmem:[#allocation5 + $0x44] sm:$0xf]
        %v866 = vld [vmem:[#allocation5 + $0x48] sm:$0xff]
        %v867 = vld [vmem:[#allocation5 + $0x50] sm:$0xf]
        %v868 = vld [vmem:[#allocation5 + $0x54] sm:$0xff]
        %v869 = vld [vmem:[#allocation5 + $0x5c] sm:$0xf]
        %v870 = vld [vmem:[#allocation5 + $0x60] sm:$0xff]
        %v871 = vld [vmem:[#allocation5 + $0x68] sm:$0xf]
        %v872 = vld [vmem:[#allocation5 + $0x6c] sm:$0xff]
        %v873 = vld [vmem:[#allocation5 + $0x74] sm:$0xf]
        %v874 = vld [vmem:[#allocation5 + $0x78] sm:$0xff]
        %v875 = vld [vmem:[#allocation5 + $0x80] sm:$0xf]
        %v876 = vld [vmem:[#allocation5 + $0x84] sm:$0xff]
        %v877 = vld [vmem:[#allocation5 + $0x8c] sm:$0xf]
        %v878 = vld [vmem:[#allocation5 + $0x90] sm:$0xff]
        %v879 = vld [vmem:[#allocation5 + $0x98] sm:$0xf]
        %v880 = vld [vmem:[#allocation5 + $0x9c] sm:$0xff]
        %v881 = vld [vmem:[#allocation5 + $0xa4] sm:$0xf]
        %v882 = vld [vmem:[#allocation5 + $0xa8] sm:$0xff]
        %v883 = vld [vmem:[#allocation5 + $0xb0] sm:$0xf]
        %v884 = vld [vmem:[#allocation5 + $0xb4] sm:$0xff]
        %v885 = vld [vmem:[#allocation5 + $0xbc] sm:$0xf]
        %v886 = vld [vmem:[%s5] sm:$0x7]
        %v888 = vlaneseq
        %v889 = vshrl.u32 %v888, 7
        %v890 = vsub.s32 0, %v889
        %v891 = vrot.slane %v886, %v890
        %v892 = vlaneseq
        %v893 = vshrl.u32 %v892, 7
        %v894 = vsub.s32 1, %v893
        %v895 = vrot.slane %v886, %v894
        %v896 = vlaneseq
        %v897 = vshrl.u32 %v896, 7
        %v898 = vsub.s32 2, %v897
        %v899 = vrot.slane %v886, %v898
        %v905 = vunpack.c.l.b16 %v585
        %v906 = vunpack.c.l.b16 %v586
        %v907 = vpack.c.b16 %v906, %v905
        %v941 = vunpack.c.l.b16 %v854
        %v942 = vunpack.c.h.b16 %v854
        %v943 = vunpack.c.l.b16 %v855
        %v944 = vunpack.c.l.b16 %v856
        %v945 = vunpack.c.h.b16 %v856
        %v946 = vunpack.c.l.b16 %v857
        %v947 = vunpack.c.l.b16 %v858
        %v948 = vunpack.c.h.b16 %v858
        %v949 = vunpack.c.l.b16 %v859
        %v950 = vunpack.c.l.b16 %v860
        %v951 = vunpack.c.h.b16 %v860
        %v952 = vunpack.c.l.b16 %v861
        %v953 = vunpack.c.l.b16 %v862
        %v954 = vunpack.c.h.b16 %v862
        %v955 = vunpack.c.l.b16 %v863
        %v956 = vunpack.c.l.b16 %v864
        %v957 = vunpack.c.h.b16 %v864
        %v958 = vunpack.c.l.b16 %v865
        %v959 = vunpack.c.l.b16 %v866
        %v960 = vunpack.c.h.b16 %v866
        %v961 = vunpack.c.l.b16 %v867
        %v962 = vunpack.c.l.b16 %v868
        %v963 = vunpack.c.h.b16 %v868
        %v964 = vunpack.c.l.b16 %v869
        %v965 = vunpack.c.l.b16 %v870
        %v966 = vunpack.c.h.b16 %v870
        %v967 = vunpack.c.l.b16 %v871
        %v968 = vunpack.c.l.b16 %v872
        %v969 = vunpack.c.h.b16 %v872
        %v970 = vunpack.c.l.b16 %v873
        %v971 = vunpack.c.l.b16 %v874
        %v972 = vunpack.c.h.b16 %v874
        %v973 = vunpack.c.l.b16 %v875
        %v974 = vunpack.c.l.b16 %v876
        %v975 = vunpack.c.h.b16 %v876
        %v976 = vunpack.c.l.b16 %v877
        %v977 = vunpack.c.l.b16 %v878
        %v978 = vunpack.c.h.b16 %v878
        %v979 = vunpack.c.l.b16 %v879
        %v980 = vunpack.c.l.b16 %v880
        %v981 = vunpack.c.h.b16 %v880
        %v982 = vunpack.c.l.b16 %v881
        %v983 = vunpack.c.l.b16 %v882
        %v984 = vunpack.c.h.b16 %v882
        %v985 = vunpack.c.l.b16 %v883
        %v986 = vunpack.c.l.b16 %v884
        %v987 = vunpack.c.h.b16 %v884
        %v988 = vunpack.c.l.b16 %v885
        %v989 = vpack.c.b16 %v944, %v941
        %v990 = vpack.c.b16 %v945, %v942
        %v991 = vpack.c.b16 %v946, %v943
        %v992 = vpack.c.b16 %v950, %v947
        %v993 = vpack.c.b16 %v951, %v948
        %v994 = vpack.c.b16 %v952, %v949
        %v995 = vpack.c.b16 %v956, %v953
        %v996 = vpack.c.b16 %v957, %v954
        %v997 = vpack.c.b16 %v958, %v955
        %v998 = vpack.c.b16 %v962, %v959
        %v999 = vpack.c.b16 %v963, %v960
        %v1000 = vpack.c.b16 %v964, %v961
        %v1001 = vpack.c.b16 %v968, %v965
        %v1002 = vpack.c.b16 %v969, %v966
        %v1003 = vpack.c.b16 %v970, %v967
        %v1004 = vpack.c.b16 %v974, %v971
        %v1005 = vpack.c.b16 %v975, %v972
        %v1006 = vpack.c.b16 %v976, %v973
        %v1007 = vpack.c.b16 %v980, %v977
        %v1008 = vpack.c.b16 %v981, %v978
        %v1009 = vpack.c.b16 %v982, %v979
        %v1010 = vpack.c.b16 %v986, %v983
        %v1011 = vpack.c.b16 %v987, %v984
        %v1012 = vpack.c.b16 %v988, %v985
        %1037 = vmatprep.subr.bf16.mxu0 %v990
        %1038 = vmatpush1.bf16.msra.mxu0 %v989
        %1039 = vmatprep.subr.bf16.mxu0 %v993
        %1040 = vmatpush1.bf16.msra.mxu0 %v992
        %1041 = vmatprep.subr.bf16.mxu0 %v996
        %1042 = vmatpush1.bf16.msra.mxu0 %v995
        %1043 = vmatprep.subr.bf16.mxu0 %v999
        %1044 = vmatpush1.bf16.msra.mxu0 %v998
        %1045 = vmatprep.subr.bf16.mxu0 %v1002
        %1046 = vmatpush1.bf16.msra.mxu0 %v1001
        %1047 = vmatprep.subr.bf16.mxu0 %v1005
        %1048 = vmatpush1.bf16.msra.mxu0 %v1004
        %1049 = vmatprep.subr.bf16.mxu0 %v1008
        %1050 = vmatpush1.bf16.msra.mxu0 %v1007
        %1051 = vmatprep.subr.bf16.mxu0 %v1011
        %1052 = vmatpush1.bf16.msra.mxu0 %v1010
        %1053 = vmatprep.subr.bf16.mxu0 0
        %1054 = vmatpush1.bf16.msra.mxu0 0
        %1055 = vmatprep.subr.bf16.mxu0 0
        %1056 = vmatpush1.bf16.msra.mxu0 0
        %1057 = vmatprep.subr.bf16.mxu0 0
        %1058 = vmatpush1.bf16.msra.mxu0 0
        %1059 = vmatprep.subr.bf16.mxu0 0
        %1060 = vmatpush1.bf16.msra.mxu0 0
        %1061 = vmatprep.subr.bf16.mxu0 0
        %1062 = vmatpush1.bf16.msra.mxu0 0
        %1063 = vmatprep.subr.bf16.mxu0 0
        %1064 = vmatpush1.bf16.msra.mxu0 0
        %1065 = vmatprep.subr.bf16.mxu0 0
        %1066 = vmatpush1.bf16.msra.mxu0 0
        %1067 = vmatprep.subr.bf16.mxu0 0
        %1068 = vmatpush1.bf16.msra.mxu0 0
        %1069 = vmatprep.mubr.bf16.mxu0 0
        %1070 = vmatmul.mubr.bf16.gmra.mrb[0].mxu0 %v907
        %v1071 = vpop.f32.mrb[0].mxu0
        %v1072 = vadd.f32 %v891, %v1071
        %v1073 = vpop.f32.mrb[0].mxu0
        %v1074 = vadd.f32 %v895, %v1073
        %v1075 = vpop.f32.mrb[0].mxu0
        %v1076 = vadd.f32 %v891, %v1075
        %v1077 = vpop.f32.mrb[0].mxu0
        %v1078 = vadd.f32 %v895, %v1077
        %1079 = vdwg.mxu0
        %1080 = vmatprep.subr.bf16.mxu0 0
        %1081 = vmatpush1.bf16.msra.mxu0 %v991
        %1082 = vmatprep.subr.bf16.mxu0 0
        %1083 = vmatpush1.bf16.msra.mxu0 %v994
        %1084 = vmatprep.subr.bf16.mxu0 0
        %1085 = vmatpush1.bf16.msra.mxu0 %v997
        %1086 = vmatprep.subr.bf16.mxu0 0
        %1087 = vmatpush1.bf16.msra.mxu0 %v1000
        %1088 = vmatprep.subr.bf16.mxu0 0
        %1089 = vmatpush1.bf16.msra.mxu0 %v1003
        %1090 = vmatprep.subr.bf16.mxu0 0
        %1091 = vmatpush1.bf16.msra.mxu0 %v1006
        %1092 = vmatprep.subr.bf16.mxu0 0
        %1093 = vmatpush1.bf16.msra.mxu0 %v1009
        %1094 = vmatprep.subr.bf16.mxu0 0
        %1095 = vmatpush1.bf16.msra.mxu0 %v1012
        %1096 = vmatprep.subr.bf16.mxu0 0
        %1097 = vmatpush1.bf16.msra.mxu0 0
        %1098 = vmatprep.subr.bf16.mxu0 0
        %1099 = vmatpush1.bf16.msra.mxu0 0
        %1100 = vmatprep.subr.bf16.mxu0 0
        %1101 = vmatpush1.bf16.msra.mxu0 0
        %1102 = vmatprep.subr.bf16.mxu0 0
        %1103 = vmatpush1.bf16.msra.mxu0 0
        %1104 = vmatprep.subr.bf16.mxu0 0
        %1105 = vmatpush1.bf16.msra.mxu0 0
        %1106 = vmatprep.subr.bf16.mxu0 0
        %1107 = vmatpush1.bf16.msra.mxu0 0
        %1108 = vmatprep.subr.bf16.mxu0 0
        %1109 = vmatpush1.bf16.msra.mxu0 0
        %1110 = vmatprep.subr.bf16.mxu0 0
        %1111 = vmatpush1.bf16.msra.mxu0 0
        %1112 = vmatprep.mubr.bf16.mxu0 0
        %1113 = vmatmul.mubr.bf16.gmra.mrb[0].mxu0 %v907
        %v1114 = vpop.f32.mrb[0].mxu0
        %v1115 = vadd.f32 %v899, %v1114
        %v1116 = vpop.f32.mrb[0].mxu0
        %v1117 = vpop.f32.mrb[0].mxu0
        %v1118 = vadd.f32 %v899, %v1117
        %v1119 = vpop.f32.mrb[0].mxu0
        %1120 = vdwg.mxu0
        %1121 = vst [vmem:[#allocation2] sm:$0xff] %v805
        %1122 = vst [vmem:[#allocation2 + $0x8] sm:$0xff] %v807
        %1123 = vst [vmem:[#allocation2 + $0x10] sm:$0xff] %v848
        %1124 = vst [vmem:[#allocation2 + $0x18] sm:$0xff] %v809
        %1125 = vst [vmem:[#allocation2 + $0x20] sm:$0xff] %v811
        %1126 = vst [vmem:[#allocation2 + $0x28] sm:$0xff] %v851
        %1127 = vst [vmem:[#allocation3] sm:$0xff] %v1072
        %1128 = vst [vmem:[#allocation3 + $0x8] sm:$0xff] %v1074
        %1129 = vst [vmem:[#allocation3 + $0x10] sm:$0xff] %v1115
        %1130 = vst [vmem:[#allocation3 + $0x18] sm:$0xff] %v1076
        %1131 = vst [vmem:[#allocation3 + $0x20] sm:$0xff] %v1078
        %1132 = vst [vmem:[#allocation3 + $0x28] sm:$0xff] %v1118
        %v1133 = vld [vmem:[%s7] sm:$0x1]
        %v1135 = vlaneseq
        %v1136 = vshrl.u32 %v1135, 7
        %v1137 = vsub.s32 0, %v1136
        %v1138 = vrot.slane %v1133, %v1137
        %v1140 = vld [vmem:[%s8] sm:$0x1]
        %v1142 = vlaneseq
        %v1143 = vshrl.u32 %v1142, 7
        %v1144 = vsub.s32 0, %v1143
        %v1145 = vrot.slane %v1140, %v1144
        %v1147 = vld [vmem:[#allocation4] sm:$0xff]
        %v1148 = vld [vmem:[#allocation4 + $0x8] sm:$0xff]
        %v1149 = vld [vmem:[#allocation2] sm:$0xff]
        %v1150 = vld [vmem:[#allocation2 + $0x8] sm:$0xff]
        %v1151 = vld [vmem:[#allocation2 + $0x10] sm:$0xff]
        %s1152 = scalar_lea.vmem [#allocation3], 24
        %v1153 = vld [vmem:[%s1152] sm:$0xff]
        %v1154 = vld [vmem:[%s1152 + $0x8] sm:$0xff]
        %v1155 = vld [vmem:[%s1152 + $0x10] sm:$0xff]
        %v1156 = vpack.c.bf16 %v1147, %v1147
        %v1157 = vpack.c.bf16 %v1148, %v1148
        %v1158 = vld [vmem:[#allocation7] sm:$0xff]
        %v1159 = vld [vmem:[#allocation7 + $0x8] sm:$0xff]
        %v1160 = vld [vmem:[#allocation7 + $0x10] sm:$0xff]
        %v1161 = vld [vmem:[#allocation7 + $0x18] sm:$0xff]
        %v1162 = vld [vmem:[#allocation7 + $0x20] sm:$0xff]
        %v1163 = vld [vmem:[#allocation7 + $0x28] sm:$0xff]
        %v1164 = vld [vmem:[#allocation7 + $0x30] sm:$0xff]
        %v1165 = vld [vmem:[#allocation7 + $0x38] sm:$0xff]
        %v1166 = vld [vmem:[#allocation7 + $0x40] sm:$0xff]
        %v1167 = vld [vmem:[#allocation7 + $0x48] sm:$0xff]
        %v1168 = vld [vmem:[#allocation7 + $0x50] sm:$0xff]
        %v1169 = vld [vmem:[#allocation7 + $0x58] sm:$0xff]
        %v1170 = vld [vmem:[#allocation7 + $0x60] sm:$0xff]
        %v1171 = vld [vmem:[#allocation7 + $0x68] sm:$0xff]
        %v1172 = vld [vmem:[#allocation7 + $0x70] sm:$0xff]
        %v1173 = vld [vmem:[#allocation7 + $0x78] sm:$0xff]
        %v1174 = vld [vmem:[#allocation7 + $0x80] sm:$0xff]
        %v1175 = vld [vmem:[#allocation7 + $0x88] sm:$0xff]
        %v1176 = vld [vmem:[#allocation7 + $0x90] sm:$0xff]
        %v1177 = vld [vmem:[#allocation7 + $0x98] sm:$0xff]
        %v1178 = vld [vmem:[#allocation7 + $0xa0] sm:$0xff]
        %v1179 = vld [vmem:[#allocation7 + $0xa8] sm:$0xff]
        %v1180 = vld [vmem:[#allocation7 + $0xb0] sm:$0xff]
        %v1181 = vld [vmem:[#allocation7 + $0xb8] sm:$0xff]
        %v1182 = vld [vmem:[#allocation7 + $0xc0] sm:$0xff]
        %v1183 = vld [vmem:[#allocation7 + $0xc8] sm:$0xff]
        %v1184 = vld [vmem:[#allocation7 + $0xd0] sm:$0xff]
        %v1185 = vld [vmem:[#allocation7 + $0xd8] sm:$0xff]
        %v1186 = vld [vmem:[#allocation7 + $0xe0] sm:$0xff]
        %v1187 = vld [vmem:[#allocation7 + $0xe8] sm:$0xff]
        %v1188 = vld [vmem:[#allocation7 + $0xf0] sm:$0xff]
        %v1189 = vld [vmem:[#allocation7 + $0xf8] sm:$0xff]
        %v1190 = vld [vmem:[#allocation7 + $0x100] sm:$0xff]
        %v1191 = vld [vmem:[#allocation7 + $0x108] sm:$0xff]
        %v1192 = vld [vmem:[#allocation7 + $0x110] sm:$0xff]
        %v1193 = vld [vmem:[#allocation7 + $0x118] sm:$0xff]
        %v1194 = vld [vmem:[#allocation7 + $0x120] sm:$0xff]
        %v1195 = vld [vmem:[#allocation7 + $0x128] sm:$0xff]
        %v1196 = vld [vmem:[#allocation7 + $0x130] sm:$0xff]
        %v1197 = vld [vmem:[#allocation7 + $0x138] sm:$0xff]
        %v1198 = vld [vmem:[#allocation7 + $0x140] sm:$0xff]
        %v1199 = vld [vmem:[#allocation7 + $0x148] sm:$0xff]
        %v1200 = vld [vmem:[#allocation7 + $0x150] sm:$0xff]
        %v1201 = vld [vmem:[#allocation7 + $0x158] sm:$0xff]
        %v1202 = vld [vmem:[#allocation7 + $0x160] sm:$0xff]
        %v1203 = vld [vmem:[#allocation7 + $0x168] sm:$0xff]
        %v1204 = vld [vmem:[#allocation7 + $0x170] sm:$0xff]
        %v1205 = vld [vmem:[#allocation7 + $0x178] sm:$0xff]
        %v1206 = vld [vmem:[#allocation7 + $0x180] sm:$0xff]
        %v1207 = vld [vmem:[#allocation7 + $0x188] sm:$0xff]
        %v1208 = vld [vmem:[#allocation7 + $0x190] sm:$0xff]
        %v1209 = vld [vmem:[#allocation7 + $0x198] sm:$0xff]
        %v1210 = vld [vmem:[#allocation7 + $0x1a0] sm:$0xff]
        %v1211 = vld [vmem:[#allocation7 + $0x1a8] sm:$0xff]
        %v1212 = vld [vmem:[#allocation7 + $0x1b0] sm:$0xff]
        %v1213 = vld [vmem:[#allocation7 + $0x1b8] sm:$0xff]
        %v1214 = vld [vmem:[#allocation7 + $0x1c0] sm:$0xff]
        %v1215 = vld [vmem:[#allocation7 + $0x1c8] sm:$0xff]
        %v1216 = vld [vmem:[#allocation7 + $0x1d0] sm:$0xff]
        %v1217 = vld [vmem:[#allocation7 + $0x1d8] sm:$0xff]
        %v1218 = vld [vmem:[#allocation7 + $0x1e0] sm:$0xff]
        %v1219 = vld [vmem:[#allocation7 + $0x1e8] sm:$0xff]
        %v1220 = vld [vmem:[#allocation7 + $0x1f0] sm:$0xff]
        %v1221 = vld [vmem:[#allocation7 + $0x1f8] sm:$0xff]
        %v1222 = vld [vmem:[#allocation7 + $0x200] sm:$0xff]
        %v1223 = vld [vmem:[#allocation7 + $0x208] sm:$0xff]
        %v1224 = vld [vmem:[#allocation7 + $0x210] sm:$0xff]
        %v1225 = vld [vmem:[#allocation7 + $0x218] sm:$0xff]
        %v1226 = vld [vmem:[#allocation7 + $0x220] sm:$0xff]
        %v1227 = vld [vmem:[#allocation7 + $0x228] sm:$0xff]
        %v1228 = vld [vmem:[#allocation7 + $0x230] sm:$0xff]
        %v1229 = vld [vmem:[#allocation7 + $0x238] sm:$0xff]
        %v1230 = vld [vmem:[#allocation7 + $0x240] sm:$0xff]
        %v1231 = vld [vmem:[#allocation7 + $0x248] sm:$0xff]
        %v1232 = vld [vmem:[#allocation7 + $0x250] sm:$0xff]
        %v1233 = vld [vmem:[#allocation7 + $0x258] sm:$0xff]
        %v1234 = vld [vmem:[#allocation7 + $0x260] sm:$0xff]
        %v1235 = vld [vmem:[#allocation7 + $0x268] sm:$0xff]
        %v1236 = vld [vmem:[#allocation7 + $0x270] sm:$0xff]
        %v1237 = vld [vmem:[#allocation7 + $0x278] sm:$0xff]
        %v1238 = vld [vmem:[#allocation7 + $0x280] sm:$0xff]
        %v1239 = vld [vmem:[#allocation7 + $0x288] sm:$0xff]
        %v1240 = vld [vmem:[#allocation7 + $0x290] sm:$0xff]
        %v1241 = vld [vmem:[#allocation7 + $0x298] sm:$0xff]
        %v1242 = vld [vmem:[#allocation7 + $0x2a0] sm:$0xff]
        %v1243 = vld [vmem:[#allocation7 + $0x2a8] sm:$0xff]
        %v1244 = vld [vmem:[#allocation7 + $0x2b0] sm:$0xff]
        %v1245 = vld [vmem:[#allocation7 + $0x2b8] sm:$0xff]
        %v1246 = vld [vmem:[#allocation7 + $0x2c0] sm:$0xff]
        %v1247 = vld [vmem:[#allocation7 + $0x2c8] sm:$0xff]
        %v1248 = vld [vmem:[#allocation7 + $0x2d0] sm:$0xff]
        %v1249 = vld [vmem:[#allocation7 + $0x2d8] sm:$0xff]
        %v1250 = vld [vmem:[#allocation7 + $0x2e0] sm:$0xff]
        %v1251 = vld [vmem:[#allocation7 + $0x2e8] sm:$0xff]
        %v1252 = vld [vmem:[#allocation7 + $0x2f0] sm:$0xff]
        %v1253 = vld [vmem:[#allocation7 + $0x2f8] sm:$0xff]
        %v1350 = vunpack.c.l.b16 %v1158
        %v1351 = vunpack.c.h.b16 %v1158
        %v1352 = vunpack.c.l.b16 %v1159
        %v1353 = vunpack.c.h.b16 %v1159
        %v1354 = vunpack.c.l.b16 %v1160
        %v1355 = vunpack.c.h.b16 %v1160
        %v1356 = vunpack.c.l.b16 %v1161
        %v1357 = vunpack.c.h.b16 %v1161
        %v1358 = vunpack.c.l.b16 %v1162
        %v1359 = vunpack.c.h.b16 %v1162
        %v1360 = vunpack.c.l.b16 %v1163
        %v1361 = vunpack.c.h.b16 %v1163
        %v1362 = vunpack.c.l.b16 %v1164
        %v1363 = vunpack.c.h.b16 %v1164
        %v1364 = vunpack.c.l.b16 %v1165
        %v1365 = vunpack.c.h.b16 %v1165
        %v1366 = vunpack.c.l.b16 %v1166
        %v1367 = vunpack.c.h.b16 %v1166
        %v1368 = vunpack.c.l.b16 %v1167
        %v1369 = vunpack.c.h.b16 %v1167
        %v1370 = vunpack.c.l.b16 %v1168
        %v1371 = vunpack.c.h.b16 %v1168
        %v1372 = vunpack.c.l.b16 %v1169
        %v1373 = vunpack.c.h.b16 %v1169
        %v1374 = vunpack.c.l.b16 %v1170
        %v1375 = vunpack.c.h.b16 %v1170
        %v1376 = vunpack.c.l.b16 %v1171
        %v1377 = vunpack.c.h.b16 %v1171
        %v1378 = vunpack.c.l.b16 %v1172
        %v1379 = vunpack.c.h.b16 %v1172
        %v1380 = vunpack.c.l.b16 %v1173
        %v1381 = vunpack.c.h.b16 %v1173
        %v1382 = vunpack.c.l.b16 %v1174
        %v1383 = vunpack.c.h.b16 %v1174
        %v1384 = vunpack.c.l.b16 %v1175
        %v1385 = vunpack.c.h.b16 %v1175
        %v1386 = vunpack.c.l.b16 %v1176
        %v1387 = vunpack.c.h.b16 %v1176
        %v1388 = vunpack.c.l.b16 %v1177
        %v1389 = vunpack.c.h.b16 %v1177
        %v1390 = vunpack.c.l.b16 %v1178
        %v1391 = vunpack.c.h.b16 %v1178
        %v1392 = vunpack.c.l.b16 %v1179
        %v1393 = vunpack.c.h.b16 %v1179
        %v1394 = vunpack.c.l.b16 %v1180
        %v1395 = vunpack.c.h.b16 %v1180
        %v1396 = vunpack.c.l.b16 %v1181
        %v1397 = vunpack.c.h.b16 %v1181
        %v1398 = vunpack.c.l.b16 %v1182
        %v1399 = vunpack.c.h.b16 %v1182
        %v1400 = vunpack.c.l.b16 %v1183
        %v1401 = vunpack.c.h.b16 %v1183
        %v1402 = vunpack.c.l.b16 %v1184
        %v1403 = vunpack.c.h.b16 %v1184
        %v1404 = vunpack.c.l.b16 %v1185
        %v1405 = vunpack.c.h.b16 %v1185
        %v1406 = vunpack.c.l.b16 %v1186
        %v1407 = vunpack.c.h.b16 %v1186
        %v1408 = vunpack.c.l.b16 %v1187
        %v1409 = vunpack.c.h.b16 %v1187
        %v1410 = vunpack.c.l.b16 %v1188
        %v1411 = vunpack.c.h.b16 %v1188
        %v1412 = vunpack.c.l.b16 %v1189
        %v1413 = vunpack.c.h.b16 %v1189
        %v1414 = vunpack.c.l.b16 %v1190
        %v1415 = vunpack.c.h.b16 %v1190
        %v1416 = vunpack.c.l.b16 %v1191
        %v1417 = vunpack.c.h.b16 %v1191
        %v1418 = vunpack.c.l.b16 %v1192
        %v1419 = vunpack.c.h.b16 %v1192
        %v1420 = vunpack.c.l.b16 %v1193
        %v1421 = vunpack.c.h.b16 %v1193
        %v1422 = vunpack.c.l.b16 %v1194
        %v1423 = vunpack.c.h.b16 %v1194
        %v1424 = vunpack.c.l.b16 %v1195
        %v1425 = vunpack.c.h.b16 %v1195
        %v1426 = vunpack.c.l.b16 %v1196
        %v1427 = vunpack.c.h.b16 %v1196
        %v1428 = vunpack.c.l.b16 %v1197
        %v1429 = vunpack.c.h.b16 %v1197
        %v1430 = vunpack.c.l.b16 %v1198
        %v1431 = vunpack.c.h.b16 %v1198
        %v1432 = vunpack.c.l.b16 %v1199
        %v1433 = vunpack.c.h.b16 %v1199
        %v1434 = vunpack.c.l.b16 %v1200
        %v1435 = vunpack.c.h.b16 %v1200
        %v1436 = vunpack.c.l.b16 %v1201
        %v1437 = vunpack.c.h.b16 %v1201
        %v1438 = vunpack.c.l.b16 %v1202
        %v1439 = vunpack.c.h.b16 %v1202
        %v1440 = vunpack.c.l.b16 %v1203
        %v1441 = vunpack.c.h.b16 %v1203
        %v1442 = vunpack.c.l.b16 %v1204
        %v1443 = vunpack.c.h.b16 %v1204
        %v1444 = vunpack.c.l.b16 %v1205
        %v1445 = vunpack.c.h.b16 %v1205
        %v1446 = vunpack.c.l.b16 %v1206
        %v1447 = vunpack.c.h.b16 %v1206
        %v1448 = vunpack.c.l.b16 %v1207
        %v1449 = vunpack.c.h.b16 %v1207
        %v1450 = vunpack.c.l.b16 %v1208
        %v1451 = vunpack.c.h.b16 %v1208
        %v1452 = vunpack.c.l.b16 %v1209
        %v1453 = vunpack.c.h.b16 %v1209
        %v1454 = vunpack.c.l.b16 %v1210
        %v1455 = vunpack.c.h.b16 %v1210
        %v1456 = vunpack.c.l.b16 %v1211
        %v1457 = vunpack.c.h.b16 %v1211
        %v1458 = vunpack.c.l.b16 %v1212
        %v1459 = vunpack.c.h.b16 %v1212
        %v1460 = vunpack.c.l.b16 %v1213
        %v1461 = vunpack.c.h.b16 %v1213
        %v1462 = vunpack.c.l.b16 %v1214
        %v1463 = vunpack.c.h.b16 %v1214
        %v1464 = vunpack.c.l.b16 %v1215
        %v1465 = vunpack.c.h.b16 %v1215
        %v1466 = vunpack.c.l.b16 %v1216
        %v1467 = vunpack.c.h.b16 %v1216
        %v1468 = vunpack.c.l.b16 %v1217
        %v1469 = vunpack.c.h.b16 %v1217
        %v1470 = vunpack.c.l.b16 %v1218
        %v1471 = vunpack.c.h.b16 %v1218
        %v1472 = vunpack.c.l.b16 %v1219
        %v1473 = vunpack.c.h.b16 %v1219
        %v1474 = vunpack.c.l.b16 %v1220
        %v1475 = vunpack.c.h.b16 %v1220
        %v1476 = vunpack.c.l.b16 %v1221
        %v1477 = vunpack.c.h.b16 %v1221
        %v1478 = vunpack.c.l.b16 %v1222
        %v1479 = vunpack.c.h.b16 %v1222
        %v1480 = vunpack.c.l.b16 %v1223
        %v1481 = vunpack.c.h.b16 %v1223
        %v1482 = vunpack.c.l.b16 %v1224
        %v1483 = vunpack.c.h.b16 %v1224
        %v1484 = vunpack.c.l.b16 %v1225
        %v1485 = vunpack.c.h.b16 %v1225
        %v1486 = vunpack.c.l.b16 %v1226
        %v1487 = vunpack.c.h.b16 %v1226
        %v1488 = vunpack.c.l.b16 %v1227
        %v1489 = vunpack.c.h.b16 %v1227
        %v1490 = vunpack.c.l.b16 %v1228
        %v1491 = vunpack.c.h.b16 %v1228
        %v1492 = vunpack.c.l.b16 %v1229
        %v1493 = vunpack.c.h.b16 %v1229
        %v1494 = vunpack.c.l.b16 %v1230
        %v1495 = vunpack.c.h.b16 %v1230
        %v1496 = vunpack.c.l.b16 %v1231
        %v1497 = vunpack.c.h.b16 %v1231
        %v1498 = vunpack.c.l.b16 %v1232
        %v1499 = vunpack.c.h.b16 %v1232
        %v1500 = vunpack.c.l.b16 %v1233
        %v1501 = vunpack.c.h.b16 %v1233
        %v1502 = vunpack.c.l.b16 %v1234
        %v1503 = vunpack.c.h.b16 %v1234
        %v1504 = vunpack.c.l.b16 %v1235
        %v1505 = vunpack.c.h.b16 %v1235
        %v1506 = vunpack.c.l.b16 %v1236
        %v1507 = vunpack.c.h.b16 %v1236
        %v1508 = vunpack.c.l.b16 %v1237
        %v1509 = vunpack.c.h.b16 %v1237
        %v1510 = vunpack.c.l.b16 %v1238
        %v1511 = vunpack.c.h.b16 %v1238
        %v1512 = vunpack.c.l.b16 %v1239
        %v1513 = vunpack.c.h.b16 %v1239
        %v1514 = vunpack.c.l.b16 %v1240
        %v1515 = vunpack.c.h.b16 %v1240
        %v1516 = vunpack.c.l.b16 %v1241
        %v1517 = vunpack.c.h.b16 %v1241
        %v1518 = vunpack.c.l.b16 %v1242
        %v1519 = vunpack.c.h.b16 %v1242
        %v1520 = vunpack.c.l.b16 %v1243
        %v1521 = vunpack.c.h.b16 %v1243
        %v1522 = vunpack.c.l.b16 %v1244
        %v1523 = vunpack.c.h.b16 %v1244
        %v1524 = vunpack.c.l.b16 %v1245
        %v1525 = vunpack.c.h.b16 %v1245
        %v1526 = vunpack.c.l.b16 %v1246
        %v1527 = vunpack.c.h.b16 %v1246
        %v1528 = vunpack.c.l.b16 %v1247
        %v1529 = vunpack.c.h.b16 %v1247
        %v1530 = vunpack.c.l.b16 %v1248
        %v1531 = vunpack.c.h.b16 %v1248
        %v1532 = vunpack.c.l.b16 %v1249
        %v1533 = vunpack.c.h.b16 %v1249
        %v1534 = vunpack.c.l.b16 %v1250
        %v1535 = vunpack.c.h.b16 %v1250
        %v1536 = vunpack.c.l.b16 %v1251
        %v1537 = vunpack.c.h.b16 %v1251
        %v1538 = vunpack.c.l.b16 %v1252
        %v1539 = vunpack.c.h.b16 %v1252
        %v1540 = vunpack.c.l.b16 %v1253
        %v1541 = vunpack.c.h.b16 %v1253
        %v1542 = vpack.c.b16 %v1356, %v1350
        %v1543 = vpack.c.b16 %v1357, %v1351
        %v1544 = vpack.c.b16 %v1358, %v1352
        %v1545 = vpack.c.b16 %v1359, %v1353
        %v1546 = vpack.c.b16 %v1360, %v1354
        %v1547 = vpack.c.b16 %v1361, %v1355
        %v1548 = vpack.c.b16 %v1368, %v1362
        %v1549 = vpack.c.b16 %v1369, %v1363
        %v1550 = vpack.c.b16 %v1370, %v1364
        %v1551 = vpack.c.b16 %v1371, %v1365
        %v1552 = vpack.c.b16 %v1372, %v1366
        %v1553 = vpack.c.b16 %v1373, %v1367
        %v1554 = vpack.c.b16 %v1380, %v1374
        %v1555 = vpack.c.b16 %v1381, %v1375
        %v1556 = vpack.c.b16 %v1382, %v1376
        %v1557 = vpack.c.b16 %v1383, %v1377
        %v1558 = vpack.c.b16 %v1384, %v1378
        %v1559 = vpack.c.b16 %v1385, %v1379
        %v1560 = vpack.c.b16 %v1392, %v1386
        %v1561 = vpack.c.b16 %v1393, %v1387
        %v1562 = vpack.c.b16 %v1394, %v1388
        %v1563 = vpack.c.b16 %v1395, %v1389
        %v1564 = vpack.c.b16 %v1396, %v1390
        %v1565 = vpack.c.b16 %v1397, %v1391
        %v1566 = vpack.c.b16 %v1404, %v1398
        %v1567 = vpack.c.b16 %v1405, %v1399
        %v1568 = vpack.c.b16 %v1406, %v1400
        %v1569 = vpack.c.b16 %v1407, %v1401
        %v1570 = vpack.c.b16 %v1408, %v1402
        %v1571 = vpack.c.b16 %v1409, %v1403
        %v1572 = vpack.c.b16 %v1416, %v1410
        %v1573 = vpack.c.b16 %v1417, %v1411
        %v1574 = vpack.c.b16 %v1418, %v1412
        %v1575 = vpack.c.b16 %v1419, %v1413
        %v1576 = vpack.c.b16 %v1420, %v1414
        %v1577 = vpack.c.b16 %v1421, %v1415
        %v1578 = vpack.c.b16 %v1428, %v1422
        %v1579 = vpack.c.b16 %v1429, %v1423
        %v1580 = vpack.c.b16 %v1430, %v1424
        %v1581 = vpack.c.b16 %v1431, %v1425
        %v1582 = vpack.c.b16 %v1432, %v1426
        %v1583 = vpack.c.b16 %v1433, %v1427
        %v1584 = vpack.c.b16 %v1440, %v1434
        %v1585 = vpack.c.b16 %v1441, %v1435
        %v1586 = vpack.c.b16 %v1442, %v1436
        %v1587 = vpack.c.b16 %v1443, %v1437
        %v1588 = vpack.c.b16 %v1444, %v1438
        %v1589 = vpack.c.b16 %v1445, %v1439
        %v1590 = vpack.c.b16 %v1452, %v1446
        %v1591 = vpack.c.b16 %v1453, %v1447
        %v1592 = vpack.c.b16 %v1454, %v1448
        %v1593 = vpack.c.b16 %v1455, %v1449
        %v1594 = vpack.c.b16 %v1456, %v1450
        %v1595 = vpack.c.b16 %v1457, %v1451
        %v1596 = vpack.c.b16 %v1464, %v1458
        %v1597 = vpack.c.b16 %v1465, %v1459
        %v1598 = vpack.c.b16 %v1466, %v1460
        %v1599 = vpack.c.b16 %v1467, %v1461
        %v1600 = vpack.c.b16 %v1468, %v1462
        %v1601 = vpack.c.b16 %v1469, %v1463
        %v1602 = vpack.c.b16 %v1476, %v1470
        %v1603 = vpack.c.b16 %v1477, %v1471
        %v1604 = vpack.c.b16 %v1478, %v1472
        %v1605 = vpack.c.b16 %v1479, %v1473
        %v1606 = vpack.c.b16 %v1480, %v1474
        %v1607 = vpack.c.b16 %v1481, %v1475
        %v1608 = vpack.c.b16 %v1488, %v1482
        %v1609 = vpack.c.b16 %v1489, %v1483
        %v1610 = vpack.c.b16 %v1490, %v1484
        %v1611 = vpack.c.b16 %v1491, %v1485
        %v1612 = vpack.c.b16 %v1492, %v1486
        %v1613 = vpack.c.b16 %v1493, %v1487
        %v1614 = vpack.c.b16 %v1500, %v1494
        %v1615 = vpack.c.b16 %v1501, %v1495
        %v1616 = vpack.c.b16 %v1502, %v1496
        %v1617 = vpack.c.b16 %v1503, %v1497
        %v1618 = vpack.c.b16 %v1504, %v1498
        %v1619 = vpack.c.b16 %v1505, %v1499
        %v1620 = vpack.c.b16 %v1512, %v1506
        %v1621 = vpack.c.b16 %v1513, %v1507
        %v1622 = vpack.c.b16 %v1514, %v1508
        %v1623 = vpack.c.b16 %v1515, %v1509
        %v1624 = vpack.c.b16 %v1516, %v1510
        %v1625 = vpack.c.b16 %v1517, %v1511
        %v1626 = vpack.c.b16 %v1524, %v1518
        %v1627 = vpack.c.b16 %v1525, %v1519
        %v1628 = vpack.c.b16 %v1526, %v1520
        %v1629 = vpack.c.b16 %v1527, %v1521
        %v1630 = vpack.c.b16 %v1528, %v1522
        %v1631 = vpack.c.b16 %v1529, %v1523
        %v1632 = vpack.c.b16 %v1536, %v1530
        %v1633 = vpack.c.b16 %v1537, %v1531
        %v1634 = vpack.c.b16 %v1538, %v1532
        %v1635 = vpack.c.b16 %v1539, %v1533
        %v1636 = vpack.c.b16 %v1540, %v1534
        %v1637 = vpack.c.b16 %v1541, %v1535
        %1734 = vmatprep.subr.bf16.mxu0 %v1543
        %1735 = vmatpush1.bf16.msra.mxu0 %v1542
        %1736 = vmatprep.subr.bf16.mxu0 %v1549
        %1737 = vmatpush1.bf16.msra.mxu0 %v1548
        %1738 = vmatprep.subr.bf16.mxu0 %v1555
        %1739 = vmatpush1.bf16.msra.mxu0 %v1554
        %1740 = vmatprep.subr.bf16.mxu0 %v1561
        %1741 = vmatpush1.bf16.msra.mxu0 %v1560
        %1742 = vmatprep.subr.bf16.mxu0 %v1567
        %1743 = vmatpush1.bf16.msra.mxu0 %v1566
        %1744 = vmatprep.subr.bf16.mxu0 %v1573
        %1745 = vmatpush1.bf16.msra.mxu0 %v1572
        %1746 = vmatprep.subr.bf16.mxu0 %v1579
        %1747 = vmatpush1.bf16.msra.mxu0 %v1578
        %1748 = vmatprep.subr.bf16.mxu0 %v1585
        %1749 = vmatpush1.bf16.msra.mxu0 %v1584
        %1750 = vmatprep.subr.bf16.mxu0 %v1591
        %1751 = vmatpush1.bf16.msra.mxu0 %v1590
        %1752 = vmatprep.subr.bf16.mxu0 %v1597
        %1753 = vmatpush1.bf16.msra.mxu0 %v1596
        %1754 = vmatprep.subr.bf16.mxu0 %v1603
        %1755 = vmatpush1.bf16.msra.mxu0 %v1602
        %1756 = vmatprep.subr.bf16.mxu0 %v1609
        %1757 = vmatpush1.bf16.msra.mxu0 %v1608
        %1758 = vmatprep.subr.bf16.mxu0 %v1615
        %1759 = vmatpush1.bf16.msra.mxu0 %v1614
        %1760 = vmatprep.subr.bf16.mxu0 %v1621
        %1761 = vmatpush1.bf16.msra.mxu0 %v1620
        %1762 = vmatprep.subr.bf16.mxu0 %v1627
        %1763 = vmatpush1.bf16.msra.mxu0 %v1626
        %1764 = vmatprep.subr.bf16.mxu0 %v1633
        %1765 = vmatpush1.bf16.msra.mxu0 %v1632
        %1766 = vmatprep.mubr.bf16.mxu0 %v1157
        %1767 = vmatmul.mubr.bf16.gmra.mrb[0].mxu0 %v1156
        %v1768 = vpop.f32.mrb[0].mxu0
        %v1769 = vadd.f32 0.0, %v1768
        %v1770 = vpop.f32.mrb[0].mxu0
        %v1771 = vadd.f32 0.0, %v1770
        %v1772 = vpop.f32.mrb[0].mxu0
        %v1773 = vpop.f32.mrb[0].mxu0
        %1774 = vdwg.mxu0
        %1775 = vmatprep.subr.bf16.mxu0 %v1545
        %1776 = vmatpush1.bf16.msra.mxu0 %v1544
        %1777 = vmatprep.subr.bf16.mxu0 %v1551
        %1778 = vmatpush1.bf16.msra.mxu0 %v1550
        %1779 = vmatprep.subr.bf16.mxu0 %v1557
        %1780 = vmatpush1.bf16.msra.mxu0 %v1556
        %1781 = vmatprep.subr.bf16.mxu0 %v1563
        %1782 = vmatpush1.bf16.msra.mxu0 %v1562
        %1783 = vmatprep.subr.bf16.mxu0 %v1569
        %1784 = vmatpush1.bf16.msra.mxu0 %v1568
        %1785 = vmatprep.subr.bf16.mxu0 %v1575
        %1786 = vmatpush1.bf16.msra.mxu0 %v1574
        %1787 = vmatprep.subr.bf16.mxu0 %v1581
        %1788 = vmatpush1.bf16.msra.mxu0 %v1580
        %1789 = vmatprep.subr.bf16.mxu0 %v1587
        %1790 = vmatpush1.bf16.msra.mxu0 %v1586
        %1791 = vmatprep.subr.bf16.mxu0 %v1593
        %1792 = vmatpush1.bf16.msra.mxu0 %v1592
        %1793 = vmatprep.subr.bf16.mxu0 %v1599
        %1794 = vmatpush1.bf16.msra.mxu0 %v1598
        %1795 = vmatprep.subr.bf16.mxu0 %v1605
        %1796 = vmatpush1.bf16.msra.mxu0 %v1604
        %1797 = vmatprep.subr.bf16.mxu0 %v1611
        %1798 = vmatpush1.bf16.msra.mxu0 %v1610
        %1799 = vmatprep.subr.bf16.mxu0 %v1617
        %1800 = vmatpush1.bf16.msra.mxu0 %v1616
        %1801 = vmatprep.subr.bf16.mxu0 %v1623
        %1802 = vmatpush1.bf16.msra.mxu0 %v1622
        %1803 = vmatprep.subr.bf16.mxu0 %v1629
        %1804 = vmatpush1.bf16.msra.mxu0 %v1628
        %1805 = vmatprep.subr.bf16.mxu0 %v1635
        %1806 = vmatpush1.bf16.msra.mxu0 %v1634
        %1807 = vmatprep.mubr.bf16.mxu0 %v1157
        %1808 = vmatmul.mubr.bf16.gmra.mrb[0].mxu0 %v1156
        %v1809 = vpop.f32.mrb[0].mxu0
        %v1810 = vadd.f32 0.0, %v1809
        %v1811 = vpop.f32.mrb[0].mxu0
        %v1812 = vadd.f32 0.0, %v1811
        %v1813 = vpop.f32.mrb[0].mxu0
        %v1814 = vpop.f32.mrb[0].mxu0
        %1815 = vdwg.mxu0
        %1816 = vmatprep.subr.bf16.mxu0 %v1547
        %1817 = vmatpush1.bf16.msra.mxu0 %v1546
        %1818 = vmatprep.subr.bf16.mxu0 %v1553
        %1819 = vmatpush1.bf16.msra.mxu0 %v1552
        %1820 = vmatprep.subr.bf16.mxu0 %v1559
        %1821 = vmatpush1.bf16.msra.mxu0 %v1558
        %1822 = vmatprep.subr.bf16.mxu0 %v1565
        %1823 = vmatpush1.bf16.msra.mxu0 %v1564
        %1824 = vmatprep.subr.bf16.mxu0 %v1571
        %1825 = vmatpush1.bf16.msra.mxu0 %v1570
        %1826 = vmatprep.subr.bf16.mxu0 %v1577
        %1827 = vmatpush1.bf16.msra.mxu0 %v1576
        %1828 = vmatprep.subr.bf16.mxu0 %v1583
        %1829 = vmatpush1.bf16.msra.mxu0 %v1582
        %1830 = vmatprep.subr.bf16.mxu0 %v1589
        %1831 = vmatpush1.bf16.msra.mxu0 %v1588
        %1832 = vmatprep.subr.bf16.mxu0 %v1595
        %1833 = vmatpush1.bf16.msra.mxu0 %v1594
        %1834 = vmatprep.subr.bf16.mxu0 %v1601
        %1835 = vmatpush1.bf16.msra.mxu0 %v1600
        %1836 = vmatprep.subr.bf16.mxu0 %v1607
        %1837 = vmatpush1.bf16.msra.mxu0 %v1606
        %1838 = vmatprep.subr.bf16.mxu0 %v1613
        %1839 = vmatpush1.bf16.msra.mxu0 %v1612
        %1840 = vmatprep.subr.bf16.mxu0 %v1619
        %1841 = vmatpush1.bf16.msra.mxu0 %v1618
        %1842 = vmatprep.subr.bf16.mxu0 %v1625
        %1843 = vmatpush1.bf16.msra.mxu0 %v1624
        %1844 = vmatprep.subr.bf16.mxu0 %v1631
        %1845 = vmatpush1.bf16.msra.mxu0 %v1630
        %1846 = vmatprep.subr.bf16.mxu0 %v1637
        %1847 = vmatpush1.bf16.msra.mxu0 %v1636
        %1848 = vmatprep.mubr.bf16.mxu0 %v1157
        %1849 = vmatmul.mubr.bf16.gmra.mrb[0].mxu0 %v1156
        %v1850 = vpop.f32.mrb[0].mxu0
        %v1851 = vadd.f32 0.0, %v1850
        %v1852 = vpop.f32.mrb[0].mxu0
        %v1853 = vadd.f32 0.0, %v1852
        %v1854 = vpop.f32.mrb[0].mxu0
        %v1855 = vpop.f32.mrb[0].mxu0
        %1856 = vdwg.mxu0
        %v1857 = vadd.f32 %v1149, %v1769
        %v1858 = vadd.f32 %v1150, %v1771
        %v1859 = vxor.u32 %v1857, 2147483648
        %v1860 = vxor.u32 %v1858, 2147483648
        %v1861 = vmul.f32 %v1859, 1.442695
        %v1862 = vpow.pop %v1861
        %v1863 = vmul.f32 %v1860, 1.442695
        %v1864 = vpow.pop %v1863
        %v1865 = vadd.f32 %v1862, 1.0
        %v1866 = vadd.f32 %v1864, 1.0
        %v1867 = vrcp.pop %v1865
        %v1868 = vmul.f32 1.0, %v1867
        %v1869 = vrcp.pop %v1866
        %v1870 = vmul.f32 1.0, %v1869
        %v1871 = vadd.f32 %v1810, %v1138
        %v1872 = vmul.f32 %v1868, %v1871
        %v1873 = vadd.f32 %v1151, %v1872
        %v1874 = vtanh.pop %v1873
        %v1875 = vsub.f32 %v1147, %v1874
        %v1876 = vmul.f32 %v1870, %v1875
        %v1877 = vadd.f32 %v1874, %v1876
        %v1878 = vadd.f32 %v1153, %v1812
        %v1879 = vadd.f32 %v1154, %v1851
        %v1880 = vxor.u32 %v1878, 2147483648
        %v1881 = vxor.u32 %v1879, 2147483648
        %v1882 = vmul.f32 %v1880, 1.442695
        %v1883 = vpow.pop %v1882
        %v1884 = vmul.f32 %v1881, 1.442695
        %v1885 = vpow.pop %v1884
        %v1886 = vadd.f32 %v1883, 1.0
        %v1887 = vadd.f32 %v1885, 1.0
        %v1888 = vrcp.pop %v1886
        %v1889 = vmul.f32 1.0, %v1888
        %v1890 = vrcp.pop %v1887
        %v1891 = vmul.f32 1.0, %v1890
        %v1892 = vadd.f32 %v1853, %v1145
        %v1893 = vmul.f32 %v1889, %v1892
        %v1894 = vadd.f32 %v1155, %v1893
        %v1895 = vtanh.pop %v1894
        %v1896 = vsub.f32 %v1148, %v1895
        %v1897 = vmul.f32 %v1891, %v1896
        %v1898 = vadd.f32 %v1895, %v1897
        %1899 = vst [vmem:[%s565] sm:$0xff] %v1877
        %s1900 = scalar_lea.vmem %s572, 8
        %1901 = vst [vmem:[%s1900] sm:$0xff] %v1898
        %s1902 = scalar_lea.vmem [#allocation2], 24
        %v1903 = vld [vmem:[%s1902] sm:$0xff]
        %v1904 = vld [vmem:[%s1902 + $0x8] sm:$0xff]
        %v1905 = vld [vmem:[%s1902 + $0x10] sm:$0xff]
        %v1906 = vld [vmem:[#allocation3] sm:$0xff]
        %v1907 = vld [vmem:[#allocation3 + $0x8] sm:$0xff]
        %v1908 = vld [vmem:[#allocation3 + $0x10] sm:$0xff]
        %v1909 = vpack.c.bf16 %v1877, %v1877
        %v1910 = vpack.c.bf16 %v1898, %v1898
        %v1911 = vld [vmem:[#allocation7] sm:$0xff]
        %v1912 = vld [vmem:[#allocation7 + $0x8] sm:$0xff]
        %v1913 = vld [vmem:[#allocation7 + $0x10] sm:$0xff]
        %v1914 = vld [vmem:[#allocation7 + $0x18] sm:$0xff]
        %v1915 = vld [vmem:[#allocation7 + $0x20] sm:$0xff]
        %v1916 = vld [vmem:[#allocation7 + $0x28] sm:$0xff]
        %v1917 = vld [vmem:[#allocation7 + $0x30] sm:$0xff]
        %v1918 = vld [vmem:[#allocation7 + $0x38] sm:$0xff]
        %v1919 = vld [vmem:[#allocation7 + $0x40] sm:$0xff]
        %v1920 = vld [vmem:[#allocation7 + $0x48] sm:$0xff]
        %v1921 = vld [vmem:[#allocation7 + $0x50] sm:$0xff]
        %v1922 = vld [vmem:[#allocation7 + $0x58] sm:$0xff]
        %v1923 = vld [vmem:[#allocation7 + $0x60] sm:$0xff]
        %v1924 = vld [vmem:[#allocation7 + $0x68] sm:$0xff]
        %v1925 = vld [vmem:[#allocation7 + $0x70] sm:$0xff]
        %v1926 = vld [vmem:[#allocation7 + $0x78] sm:$0xff]
        %v1927 = vld [vmem:[#allocation7 + $0x80] sm:$0xff]
        %v1928 = vld [vmem:[#allocation7 + $0x88] sm:$0xff]
        %v1929 = vld [vmem:[#allocation7 + $0x90] sm:$0xff]
        %v1930 = vld [vmem:[#allocation7 + $0x98] sm:$0xff]
        %v1931 = vld [vmem:[#allocation7 + $0xa0] sm:$0xff]
        %v1932 = vld [vmem:[#allocation7 + $0xa8] sm:$0xff]
        %v1933 = vld [vmem:[#allocation7 + $0xb0] sm:$0xff]
        %v1934 = vld [vmem:[#allocation7 + $0xb8] sm:$0xff]
        %v1935 = vld [vmem:[#allocation7 + $0xc0] sm:$0xff]
        %v1936 = vld [vmem:[#allocation7 + $0xc8] sm:$0xff]
        %v1937 = vld [vmem:[#allocation7 + $0xd0] sm:$0xff]
        %v1938 = vld [vmem:[#allocation7 + $0xd8] sm:$0xff]
        %v1939 = vld [vmem:[#allocation7 + $0xe0] sm:$0xff]
        %v1940 = vld [vmem:[#allocation7 + $0xe8] sm:$0xff]
        %v1941 = vld [vmem:[#allocation7 + $0xf0] sm:$0xff]
        %v1942 = vld [vmem:[#allocation7 + $0xf8] sm:$0xff]
        %v1943 = vld [vmem:[#allocation7 + $0x100] sm:$0xff]
        %v1944 = vld [vmem:[#allocation7 + $0x108] sm:$0xff]
        %v1945 = vld [vmem:[#allocation7 + $0x110] sm:$0xff]
        %v1946 = vld [vmem:[#allocation7 + $0x118] sm:$0xff]
        %v1947 = vld [vmem:[#allocation7 + $0x120] sm:$0xff]
        %v1948 = vld [vmem:[#allocation7 + $0x128] sm:$0xff]
        %v1949 = vld [vmem:[#allocation7 + $0x130] sm:$0xff]
        %v1950 = vld [vmem:[#allocation7 + $0x138] sm:$0xff]
        %v1951 = vld [vmem:[#allocation7 + $0x140] sm:$0xff]
        %v1952 = vld [vmem:[#allocation7 + $0x148] sm:$0xff]
        %v1953 = vld [vmem:[#allocation7 + $0x150] sm:$0xff]
        %v1954 = vld [vmem:[#allocation7 + $0x158] sm:$0xff]
        %v1955 = vld [vmem:[#allocation7 + $0x160] sm:$0xff]
        %v1956 = vld [vmem:[#allocation7 + $0x168] sm:$0xff]
        %v1957 = vld [vmem:[#allocation7 + $0x170] sm:$0xff]
        %v1958 = vld [vmem:[#allocation7 + $0x178] sm:$0xff]
        %v1959 = vld [vmem:[#allocation7 + $0x180] sm:$0xff]
        %v1960 = vld [vmem:[#allocation7 + $0x188] sm:$0xff]
        %v1961 = vld [vmem:[#allocation7 + $0x190] sm:$0xff]
        %v1962 = vld [vmem:[#allocation7 + $0x198] sm:$0xff]
        %v1963 = vld [vmem:[#allocation7 + $0x1a0] sm:$0xff]
        %v1964 = vld [vmem:[#allocation7 + $0x1a8] sm:$0xff]
        %v1965 = vld [vmem:[#allocation7 + $0x1b0] sm:$0xff]
        %v1966 = vld [vmem:[#allocation7 + $0x1b8] sm:$0xff]
        %v1967 = vld [vmem:[#allocation7 + $0x1c0] sm:$0xff]
        %v1968 = vld [vmem:[#allocation7 + $0x1c8] sm:$0xff]
        %v1969 = vld [vmem:[#allocation7 + $0x1d0] sm:$0xff]
        %v1970 = vld [vmem:[#allocation7 + $0x1d8] sm:$0xff]
        %v1971 = vld [vmem:[#allocation7 + $0x1e0] sm:$0xff]
        %v1972 = vld [vmem:[#allocation7 + $0x1e8] sm:$0xff]
        %v1973 = vld [vmem:[#allocation7 + $0x1f0] sm:$0xff]
        %v1974 = vld [vmem:[#allocation7 + $0x1f8] sm:$0xff]
        %v1975 = vld [vmem:[#allocation7 + $0x200] sm:$0xff]
        %v1976 = vld [vmem:[#allocation7 + $0x208] sm:$0xff]
        %v1977 = vld [vmem:[#allocation7 + $0x210] sm:$0xff]
        %v1978 = vld [vmem:[#allocation7 + $0x218] sm:$0xff]
        %v1979 = vld [vmem:[#allocation7 + $0x220] sm:$0xff]
        %v1980 = vld [vmem:[#allocation7 + $0x228] sm:$0xff]
        %v1981 = vld [vmem:[#allocation7 + $0x230] sm:$0xff]
        %v1982 = vld [vmem:[#allocation7 + $0x238] sm:$0xff]
        %v1983 = vld [vmem:[#allocation7 + $0x240] sm:$0xff]
        %v1984 = vld [vmem:[#allocation7 + $0x248] sm:$0xff]
        %v1985 = vld [vmem:[#allocation7 + $0x250] sm:$0xff]
        %v1986 = vld [vmem:[#allocation7 + $0x258] sm:$0xff]
        %v1987 = vld [vmem:[#allocation7 + $0x260] sm:$0xff]
        %v1988 = vld [vmem:[#allocation7 + $0x268] sm:$0xff]
        %v1989 = vld [vmem:[#allocation7 + $0x270] sm:$0xff]
        %v1990 = vld [vmem:[#allocation7 + $0x278] sm:$0xff]
        %v1991 = vld [vmem:[#allocation7 + $0x280] sm:$0xff]
        %v1992 = vld [vmem:[#allocation7 + $0x288] sm:$0xff]
        %v1993 = vld [vmem:[#allocation7 + $0x290] sm:$0xff]
        %v1994 = vld [vmem:[#allocation7 + $0x298] sm:$0xff]
        %v1995 = vld [vmem:[#allocation7 + $0x2a0] sm:$0xff]
        %v1996 = vld [vmem:[#allocation7 + $0x2a8] sm:$0xff]
        %v1997 = vld [vmem:[#allocation7 + $0x2b0] sm:$0xff]
        %v1998 = vld [vmem:[#allocation7 + $0x2b8] sm:$0xff]
        %v1999 = vld [vmem:[#allocation7 + $0x2c0] sm:$0xff]
        %v2000 = vld [vmem:[#allocation7 + $0x2c8] sm:$0xff]
        %v2001 = vld [vmem:[#allocation7 + $0x2d0] sm:$0xff]
        %v2002 = vld [vmem:[#allocation7 + $0x2d8] sm:$0xff]
        %v2003 = vld [vmem:[#allocation7 + $0x2e0] sm:$0xff]
        %v2004 = vld [vmem:[#allocation7 + $0x2e8] sm:$0xff]
        %v2005 = vld [vmem:[#allocation7 + $0x2f0] sm:$0xff]
        %v2006 = vld [vmem:[#allocation7 + $0x2f8] sm:$0xff]
        %v2103 = vunpack.c.l.b16 %v1911
        %v2104 = vunpack.c.h.b16 %v1911
        %v2105 = vunpack.c.l.b16 %v1912
        %v2106 = vunpack.c.h.b16 %v1912
        %v2107 = vunpack.c.l.b16 %v1913
        %v2108 = vunpack.c.h.b16 %v1913
        %v2109 = vunpack.c.l.b16 %v1914
        %v2110 = vunpack.c.h.b16 %v1914
        %v2111 = vunpack.c.l.b16 %v1915
        %v2112 = vunpack.c.h.b16 %v1915
        %v2113 = vunpack.c.l.b16 %v1916
        %v2114 = vunpack.c.h.b16 %v1916
        %v2115 = vunpack.c.l.b16 %v1917
        %v2116 = vunpack.c.h.b16 %v1917
        %v2117 = vunpack.c.l.b16 %v1918
        %v2118 = vunpack.c.h.b16 %v1918
        %v2119 = vunpack.c.l.b16 %v1919
        %v2120 = vunpack.c.h.b16 %v1919
        %v2121 = vunpack.c.l.b16 %v1920
        %v2122 = vunpack.c.h.b16 %v1920
        %v2123 = vunpack.c.l.b16 %v1921
        %v2124 = vunpack.c.h.b16 %v1921
        %v2125 = vunpack.c.l.b16 %v1922
        %v2126 = vunpack.c.h.b16 %v1922
        %v2127 = vunpack.c.l.b16 %v1923
        %v2128 = vunpack.c.h.b16 %v1923
        %v2129 = vunpack.c.l.b16 %v1924
        %v2130 = vunpack.c.h.b16 %v1924
        %v2131 = vunpack.c.l.b16 %v1925
        %v2132 = vunpack.c.h.b16 %v1925
        %v2133 = vunpack.c.l.b16 %v1926
        %v2134 = vunpack.c.h.b16 %v1926
        %v2135 = vunpack.c.l.b16 %v1927
        %v2136 = vunpack.c.h.b16 %v1927
        %v2137 = vunpack.c.l.b16 %v1928
        %v2138 = vunpack.c.h.b16 %v1928
        %v2139 = vunpack.c.l.b16 %v1929
        %v2140 = vunpack.c.h.b16 %v1929
        %v2141 = vunpack.c.l.b16 %v1930
        %v2142 = vunpack.c.h.b16 %v1930
        %v2143 = vunpack.c.l.b16 %v1931
        %v2144 = vunpack.c.h.b16 %v1931
        %v2145 = vunpack.c.l.b16 %v1932
        %v2146 = vunpack.c.h.b16 %v1932
        %v2147 = vunpack.c.l.b16 %v1933
        %v2148 = vunpack.c.h.b16 %v1933
        %v2149 = vunpack.c.l.b16 %v1934
        %v2150 = vunpack.c.h.b16 %v1934
        %v2151 = vunpack.c.l.b16 %v1935
        %v2152 = vunpack.c.h.b16 %v1935
        %v2153 = vunpack.c.l.b16 %v1936
        %v2154 = vunpack.c.h.b16 %v1936
        %v2155 = vunpack.c.l.b16 %v1937
        %v2156 = vunpack.c.h.b16 %v1937
        %v2157 = vunpack.c.l.b16 %v1938
        %v2158 = vunpack.c.h.b16 %v1938
        %v2159 = vunpack.c.l.b16 %v1939
        %v2160 = vunpack.c.h.b16 %v1939
        %v2161 = vunpack.c.l.b16 %v1940
        %v2162 = vunpack.c.h.b16 %v1940
        %v2163 = vunpack.c.l.b16 %v1941
        %v2164 = vunpack.c.h.b16 %v1941
        %v2165 = vunpack.c.l.b16 %v1942
        %v2166 = vunpack.c.h.b16 %v1942
        %v2167 = vunpack.c.l.b16 %v1943
        %v2168 = vunpack.c.h.b16 %v1943
        %v2169 = vunpack.c.l.b16 %v1944
        %v2170 = vunpack.c.h.b16 %v1944
        %v2171 = vunpack.c.l.b16 %v1945
        %v2172 = vunpack.c.h.b16 %v1945
        %v2173 = vunpack.c.l.b16 %v1946
        %v2174 = vunpack.c.h.b16 %v1946
        %v2175 = vunpack.c.l.b16 %v1947
        %v2176 = vunpack.c.h.b16 %v1947
        %v2177 = vunpack.c.l.b16 %v1948
        %v2178 = vunpack.c.h.b16 %v1948
        %v2179 = vunpack.c.l.b16 %v1949
        %v2180 = vunpack.c.h.b16 %v1949
        %v2181 = vunpack.c.l.b16 %v1950
        %v2182 = vunpack.c.h.b16 %v1950
        %v2183 = vunpack.c.l.b16 %v1951
        %v2184 = vunpack.c.h.b16 %v1951
        %v2185 = vunpack.c.l.b16 %v1952
        %v2186 = vunpack.c.h.b16 %v1952
        %v2187 = vunpack.c.l.b16 %v1953
        %v2188 = vunpack.c.h.b16 %v1953
        %v2189 = vunpack.c.l.b16 %v1954
        %v2190 = vunpack.c.h.b16 %v1954
        %v2191 = vunpack.c.l.b16 %v1955
        %v2192 = vunpack.c.h.b16 %v1955
        %v2193 = vunpack.c.l.b16 %v1956
        %v2194 = vunpack.c.h.b16 %v1956
        %v2195 = vunpack.c.l.b16 %v1957
        %v2196 = vunpack.c.h.b16 %v1957
        %v2197 = vunpack.c.l.b16 %v1958
        %v2198 = vunpack.c.h.b16 %v1958
        %v2199 = vunpack.c.l.b16 %v1959
        %v2200 = vunpack.c.h.b16 %v1959
        %v2201 = vunpack.c.l.b16 %v1960
        %v2202 = vunpack.c.h.b16 %v1960
        %v2203 = vunpack.c.l.b16 %v1961
        %v2204 = vunpack.c.h.b16 %v1961
        %v2205 = vunpack.c.l.b16 %v1962
        %v2206 = vunpack.c.h.b16 %v1962
        %v2207 = vunpack.c.l.b16 %v1963
        %v2208 = vunpack.c.h.b16 %v1963
        %v2209 = vunpack.c.l.b16 %v1964
        %v2210 = vunpack.c.h.b16 %v1964
        %v2211 = vunpack.c.l.b16 %v1965
        %v2212 = vunpack.c.h.b16 %v1965
        %v2213 = vunpack.c.l.b16 %v1966
        %v2214 = vunpack.c.h.b16 %v1966
        %v2215 = vunpack.c.l.b16 %v1967
        %v2216 = vunpack.c.h.b16 %v1967
        %v2217 = vunpack.c.l.b16 %v1968
        %v2218 = vunpack.c.h.b16 %v1968
        %v2219 = vunpack.c.l.b16 %v1969
        %v2220 = vunpack.c.h.b16 %v1969
        %v2221 = vunpack.c.l.b16 %v1970
        %v2222 = vunpack.c.h.b16 %v1970
        %v2223 = vunpack.c.l.b16 %v1971
        %v2224 = vunpack.c.h.b16 %v1971
        %v2225 = vunpack.c.l.b16 %v1972
        %v2226 = vunpack.c.h.b16 %v1972
        %v2227 = vunpack.c.l.b16 %v1973
        %v2228 = vunpack.c.h.b16 %v1973
        %v2229 = vunpack.c.l.b16 %v1974
        %v2230 = vunpack.c.h.b16 %v1974
        %v2231 = vunpack.c.l.b16 %v1975
        %v2232 = vunpack.c.h.b16 %v1975
        %v2233 = vunpack.c.l.b16 %v1976
        %v2234 = vunpack.c.h.b16 %v1976
        %v2235 = vunpack.c.l.b16 %v1977
        %v2236 = vunpack.c.h.b16 %v1977
        %v2237 = vunpack.c.l.b16 %v1978
        %v2238 = vunpack.c.h.b16 %v1978
        %v2239 = vunpack.c.l.b16 %v1979
        %v2240 = vunpack.c.h.b16 %v1979
        %v2241 = vunpack.c.l.b16 %v1980
        %v2242 = vunpack.c.h.b16 %v1980
        %v2243 = vunpack.c.l.b16 %v1981
        %v2244 = vunpack.c.h.b16 %v1981
        %v2245 = vunpack.c.l.b16 %v1982
        %v2246 = vunpack.c.h.b16 %v1982
        %v2247 = vunpack.c.l.b16 %v1983
        %v2248 = vunpack.c.h.b16 %v1983
        %v2249 = vunpack.c.l.b16 %v1984
        %v2250 = vunpack.c.h.b16 %v1984
        %v2251 = vunpack.c.l.b16 %v1985
        %v2252 = vunpack.c.h.b16 %v1985
        %v2253 = vunpack.c.l.b16 %v1986
        %v2254 = vunpack.c.h.b16 %v1986
        %v2255 = vunpack.c.l.b16 %v1987
        %v2256 = vunpack.c.h.b16 %v1987
        %v2257 = vunpack.c.l.b16 %v1988
        %v2258 = vunpack.c.h.b16 %v1988
        %v2259 = vunpack.c.l.b16 %v1989
        %v2260 = vunpack.c.h.b16 %v1989
        %v2261 = vunpack.c.l.b16 %v1990
        %v2262 = vunpack.c.h.b16 %v1990
        %v2263 = vunpack.c.l.b16 %v1991
        %v2264 = vunpack.c.h.b16 %v1991
        %v2265 = vunpack.c.l.b16 %v1992
        %v2266 = vunpack.c.h.b16 %v1992
        %v2267 = vunpack.c.l.b16 %v1993
        %v2268 = vunpack.c.h.b16 %v1993
        %v2269 = vunpack.c.l.b16 %v1994
        %v2270 = vunpack.c.h.b16 %v1994
        %v2271 = vunpack.c.l.b16 %v1995
        %v2272 = vunpack.c.h.b16 %v1995
        %v2273 = vunpack.c.l.b16 %v1996
        %v2274 = vunpack.c.h.b16 %v1996
        %v2275 = vunpack.c.l.b16 %v1997
        %v2276 = vunpack.c.h.b16 %v1997
        %v2277 = vunpack.c.l.b16 %v1998
        %v2278 = vunpack.c.h.b16 %v1998
        %v2279 = vunpack.c.l.b16 %v1999
        %v2280 = vunpack.c.h.b16 %v1999
        %v2281 = vunpack.c.l.b16 %v2000
        %v2282 = vunpack.c.h.b16 %v2000
        %v2283 = vunpack.c.l.b16 %v2001
        %v2284 = vunpack.c.h.b16 %v2001
        %v2285 = vunpack.c.l.b16 %v2002
        %v2286 = vunpack.c.h.b16 %v2002
        %v2287 = vunpack.c.l.b16 %v2003
        %v2288 = vunpack.c.h.b16 %v2003
        %v2289 = vunpack.c.l.b16 %v2004
        %v2290 = vunpack.c.h.b16 %v2004
        %v2291 = vunpack.c.l.b16 %v2005
        %v2292 = vunpack.c.h.b16 %v2005
        %v2293 = vunpack.c.l.b16 %v2006
        %v2294 = vunpack.c.h.b16 %v2006
        %v2295 = vpack.c.b16 %v2109, %v2103
        %v2296 = vpack.c.b16 %v2110, %v2104
        %v2297 = vpack.c.b16 %v2111, %v2105
        %v2298 = vpack.c.b16 %v2112, %v2106
        %v2299 = vpack.c.b16 %v2113, %v2107
        %v2300 = vpack.c.b16 %v2114, %v2108
        %v2301 = vpack.c.b16 %v2121, %v2115
        %v2302 = vpack.c.b16 %v2122, %v2116
        %v2303 = vpack.c.b16 %v2123, %v2117
        %v2304 = vpack.c.b16 %v2124, %v2118
        %v2305 = vpack.c.b16 %v2125, %v2119
        %v2306 = vpack.c.b16 %v2126, %v2120
        %v2307 = vpack.c.b16 %v2133, %v2127
        %v2308 = vpack.c.b16 %v2134, %v2128
        %v2309 = vpack.c.b16 %v2135, %v2129
        %v2310 = vpack.c.b16 %v2136, %v2130
        %v2311 = vpack.c.b16 %v2137, %v2131
        %v2312 = vpack.c.b16 %v2138, %v2132
        %v2313 = vpack.c.b16 %v2145, %v2139
        %v2314 = vpack.c.b16 %v2146, %v2140
        %v2315 = vpack.c.b16 %v2147, %v2141
        %v2316 = vpack.c.b16 %v2148, %v2142
        %v2317 = vpack.c.b16 %v2149, %v2143
        %v2318 = vpack.c.b16 %v2150, %v2144
        %v2319 = vpack.c.b16 %v2157, %v2151
        %v2320 = vpack.c.b16 %v2158, %v2152
        %v2321 = vpack.c.b16 %v2159, %v2153
        %v2322 = vpack.c.b16 %v2160, %v2154
        %v2323 = vpack.c.b16 %v2161, %v2155
        %v2324 = vpack.c.b16 %v2162, %v2156
        %v2325 = vpack.c.b16 %v2169, %v2163
        %v2326 = vpack.c.b16 %v2170, %v2164
        %v2327 = vpack.c.b16 %v2171, %v2165
        %v2328 = vpack.c.b16 %v2172, %v2166
        %v2329 = vpack.c.b16 %v2173, %v2167
        %v2330 = vpack.c.b16 %v2174, %v2168
        %v2331 = vpack.c.b16 %v2181, %v2175
        %v2332 = vpack.c.b16 %v2182, %v2176
        %v2333 = vpack.c.b16 %v2183, %v2177
        %v2334 = vpack.c.b16 %v2184, %v2178
        %v2335 = vpack.c.b16 %v2185, %v2179
        %v2336 = vpack.c.b16 %v2186, %v2180
        %v2337 = vpack.c.b16 %v2193, %v2187
        %v2338 = vpack.c.b16 %v2194, %v2188
        %v2339 = vpack.c.b16 %v2195, %v2189
        %v2340 = vpack.c.b16 %v2196, %v2190
        %v2341 = vpack.c.b16 %v2197, %v2191
        %v2342 = vpack.c.b16 %v2198, %v2192
        %v2343 = vpack.c.b16 %v2205, %v2199
        %v2344 = vpack.c.b16 %v2206, %v2200
        %v2345 = vpack.c.b16 %v2207, %v2201
        %v2346 = vpack.c.b16 %v2208, %v2202
        %v2347 = vpack.c.b16 %v2209, %v2203
        %v2348 = vpack.c.b16 %v2210, %v2204
        %v2349 = vpack.c.b16 %v2217, %v2211
        %v2350 = vpack.c.b16 %v2218, %v2212
        %v2351 = vpack.c.b16 %v2219, %v2213
        %v2352 = vpack.c.b16 %v2220, %v2214
        %v2353 = vpack.c.b16 %v2221, %v2215
        %v2354 = vpack.c.b16 %v2222, %v2216
        %v2355 = vpack.c.b16 %v2229, %v2223
        %v2356 = vpack.c.b16 %v2230, %v2224
        %v2357 = vpack.c.b16 %v2231, %v2225
        %v2358 = vpack.c.b16 %v2232, %v2226
        %v2359 = vpack.c.b16 %v2233, %v2227
        %v2360 = vpack.c.b16 %v2234, %v2228
        %v2361 = vpack.c.b16 %v2241, %v2235
        %v2362 = vpack.c.b16 %v2242, %v2236
        %v2363 = vpack.c.b16 %v2243, %v2237
        %v2364 = vpack.c.b16 %v2244, %v2238
        %v2365 = vpack.c.b16 %v2245, %v2239
        %v2366 = vpack.c.b16 %v2246, %v2240
        %v2367 = vpack.c.b16 %v2253, %v2247
        %v2368 = vpack.c.b16 %v2254, %v2248
        %v2369 = vpack.c.b16 %v2255, %v2249
        %v2370 = vpack.c.b16 %v2256, %v2250
        %v2371 = vpack.c.b16 %v2257, %v2251
        %v2372 = vpack.c.b16 %v2258, %v2252
        %v2373 = vpack.c.b16 %v2265, %v2259
        %v2374 = vpack.c.b16 %v2266, %v2260
        %v2375 = vpack.c.b16 %v2267, %v2261
        %v2376 = vpack.c.b16 %v2268, %v2262
        %v2377 = vpack.c.b16 %v2269, %v2263
        %v2378 = vpack.c.b16 %v2270, %v2264
        %v2379 = vpack.c.b16 %v2277, %v2271
        %v2380 = vpack.c.b16 %v2278, %v2272
        %v2381 = vpack.c.b16 %v2279, %v2273
        %v2382 = vpack.c.b16 %v2280, %v2274
        %v2383 = vpack.c.b16 %v2281, %v2275
        %v2384 = vpack.c.b16 %v2282, %v2276
        %v2385 = vpack.c.b16 %v2289, %v2283
        %v2386 = vpack.c.b16 %v2290, %v2284
        %v2387 = vpack.c.b16 %v2291, %v2285
        %v2388 = vpack.c.b16 %v2292, %v2286
        %v2389 = vpack.c.b16 %v2293, %v2287
        %v2390 = vpack.c.b16 %v2294, %v2288
        %2487 = vmatprep.subr.bf16.mxu0 %v2296
        %2488 = vmatpush1.bf16.msra.mxu0 %v2295
        %2489 = vmatprep.subr.bf16.mxu0 %v2302
        %2490 = vmatpush1.bf16.msra.mxu0 %v2301
        %2491 = vmatprep.subr.bf16.mxu0 %v2308
        %2492 = vmatpush1.bf16.msra.mxu0 %v2307
        %2493 = vmatprep.subr.bf16.mxu0 %v2314
        %2494 = vmatpush1.bf16.msra.mxu0 %v2313
        %2495 = vmatprep.subr.bf16.mxu0 %v2320
        %2496 = vmatpush1.bf16.msra.mxu0 %v2319
        %2497 = vmatprep.subr.bf16.mxu0 %v2326
        %2498 = vmatpush1.bf16.msra.mxu0 %v2325
        %2499 = vmatprep.subr.bf16.mxu0 %v2332
        %2500 = vmatpush1.bf16.msra.mxu0 %v2331
        %2501 = vmatprep.subr.bf16.mxu0 %v2338
        %2502 = vmatpush1.bf16.msra.mxu0 %v2337
        %2503 = vmatprep.subr.bf16.mxu0 %v2344
        %2504 = vmatpush1.bf16.msra.mxu0 %v2343
        %2505 = vmatprep.subr.bf16.mxu0 %v2350
        %2506 = vmatpush1.bf16.msra.mxu0 %v2349
        %2507 = vmatprep.subr.bf16.mxu0 %v2356
        %2508 = vmatpush1.bf16.msra.mxu0 %v2355
        %2509 = vmatprep.subr.bf16.mxu0 %v2362
        %2510 = vmatpush1.bf16.msra.mxu0 %v2361
        %2511 = vmatprep.subr.bf16.mxu0 %v2368
        %2512 = vmatpush1.bf16.msra.mxu0 %v2367
        %2513 = vmatprep.subr.bf16.mxu0 %v2374
        %2514 = vmatpush1.bf16.msra.mxu0 %v2373
        %2515 = vmatprep.subr.bf16.mxu0 %v2380
        %2516 = vmatpush1.bf16.msra.mxu0 %v2379
        %2517 = vmatprep.subr.bf16.mxu0 %v2386
        %2518 = vmatpush1.bf16.msra.mxu0 %v2385
        %2519 = vmatprep.mubr.bf16.mxu0 %v1910
        %2520 = vmatmul.mubr.bf16.gmra.mrb[0].mxu0 %v1909
        %v2521 = vpop.f32.mrb[0].mxu0
        %v2522 = vadd.f32 0.0, %v2521
        %v2523 = vpop.f32.mrb[0].mxu0
        %v2524 = vadd.f32 0.0, %v2523
        %v2525 = vpop.f32.mrb[0].mxu0
        %v2526 = vpop.f32.mrb[0].mxu0
        %2527 = vdwg.mxu0
        %2528 = vmatprep.subr.bf16.mxu0 %v2298
        %2529 = vmatpush1.bf16.msra.mxu0 %v2297
        %2530 = vmatprep.subr.bf16.mxu0 %v2304
        %2531 = vmatpush1.bf16.msra.mxu0 %v2303
        %2532 = vmatprep.subr.bf16.mxu0 %v2310
        %2533 = vmatpush1.bf16.msra.mxu0 %v2309
        %2534 = vmatprep.subr.bf16.mxu0 %v2316
        %2535 = vmatpush1.bf16.msra.mxu0 %v2315
        %2536 = vmatprep.subr.bf16.mxu0 %v2322
        %2537 = vmatpush1.bf16.msra.mxu0 %v2321
        %2538 = vmatprep.subr.bf16.mxu0 %v2328
        %2539 = vmatpush1.bf16.msra.mxu0 %v2327
        %2540 = vmatprep.subr.bf16.mxu0 %v2334
        %2541 = vmatpush1.bf16.msra.mxu0 %v2333
        %2542 = vmatprep.subr.bf16.mxu0 %v2340
        %2543 = vmatpush1.bf16.msra.mxu0 %v2339
        %2544 = vmatprep.subr.bf16.mxu0 %v2346
        %2545 = vmatpush1.bf16.msra.mxu0 %v2345
        %2546 = vmatprep.subr.bf16.mxu0 %v2352
        %2547 = vmatpush1.bf16.msra.mxu0 %v2351
        %2548 = vmatprep.subr.bf16.mxu0 %v2358
        %2549 = vmatpush1.bf16.msra.mxu0 %v2357
        %2550 = vmatprep.subr.bf16.mxu0 %v2364
        %2551 = vmatpush1.bf16.msra.mxu0 %v2363
        %2552 = vmatprep.subr.bf16.mxu0 %v2370
        %2553 = vmatpush1.bf16.msra.mxu0 %v2369
        %2554 = vmatprep.subr.bf16.mxu0 %v2376
        %2555 = vmatpush1.bf16.msra.mxu0 %v2375
        %2556 = vmatprep.subr.bf16.mxu0 %v2382
        %2557 = vmatpush1.bf16.msra.mxu0 %v2381
        %2558 = vmatprep.subr.bf16.mxu0 %v2388
        %2559 = vmatpush1.bf16.msra.mxu0 %v2387
        %2560 = vmatprep.mubr.bf16.mxu0 %v1910
        %2561 = vmatmul.mubr.bf16.gmra.mrb[0].mxu0 %v1909
        %v2562 = vpop.f32.mrb[0].mxu0
        %v2563 = vadd.f32 0.0, %v2562
        %v2564 = vpop.f32.mrb[0].mxu0
        %v2565 = vadd.f32 0.0, %v2564
        %v2566 = vpop.f32.mrb[0].mxu0
        %v2567 = vpop.f32.mrb[0].mxu0
        %2568 = vdwg.mxu0
        %2569 = vmatprep.subr.bf16.mxu0 %v2300
        %2570 = vmatpush1.bf16.msra.mxu0 %v2299
        %2571 = vmatprep.subr.bf16.mxu0 %v2306
        %2572 = vmatpush1.bf16.msra.mxu0 %v2305
        %2573 = vmatprep.subr.bf16.mxu0 %v2312
        %2574 = vmatpush1.bf16.msra.mxu0 %v2311
        %2575 = vmatprep.subr.bf16.mxu0 %v2318
        %2576 = vmatpush1.bf16.msra.mxu0 %v2317
        %2577 = vmatprep.subr.bf16.mxu0 %v2324
        %2578 = vmatpush1.bf16.msra.mxu0 %v2323
        %2579 = vmatprep.subr.bf16.mxu0 %v2330
        %2580 = vmatpush1.bf16.msra.mxu0 %v2329
        %2581 = vmatprep.subr.bf16.mxu0 %v2336
        %2582 = vmatpush1.bf16.msra.mxu0 %v2335
        %2583 = vmatprep.subr.bf16.mxu0 %v2342
        %2584 = vmatpush1.bf16.msra.mxu0 %v2341
        %2585 = vmatprep.subr.bf16.mxu0 %v2348
        %2586 = vmatpush1.bf16.msra.mxu0 %v2347
        %2587 = vmatprep.subr.bf16.mxu0 %v2354
        %2588 = vmatpush1.bf16.msra.mxu0 %v2353
        %2589 = vmatprep.subr.bf16.mxu0 %v2360
        %2590 = vmatpush1.bf16.msra.mxu0 %v2359
        %2591 = vmatprep.subr.bf16.mxu0 %v2366
        %2592 = vmatpush1.bf16.msra.mxu0 %v2365
        %2593 = vmatprep.subr.bf16.mxu0 %v2372
        %2594 = vmatpush1.bf16.msra.mxu0 %v2371
        %2595 = vmatprep.subr.bf16.mxu0 %v2378
        %2596 = vmatpush1.bf16.msra.mxu0 %v2377
        %2597 = vmatprep.subr.bf16.mxu0 %v2384
        %2598 = vmatpush1.bf16.msra.mxu0 %v2383
        %2599 = vmatprep.subr.bf16.mxu0 %v2390
        %2600 = vmatpush1.bf16.msra.mxu0 %v2389
        %2601 = vmatprep.mubr.bf16.mxu0 %v1910
        %2602 = vmatmul.mubr.bf16.gmra.mrb[0].mxu0 %v1909
        %v2603 = vpop.f32.mrb[0].mxu0
        %v2604 = vadd.f32 0.0, %v2603
        %v2605 = vpop.f32.mrb[0].mxu0
        %v2606 = vadd.f32 0.0, %v2605
        %v2607 = vpop.f32.mrb[0].mxu0
        %v2608 = vpop.f32.mrb[0].mxu0
        %2609 = vdwg.mxu0
        %v2610 = vadd.f32 %v1903, %v2522
        %v2611 = vadd.f32 %v1904, %v2524
        %v2612 = vxor.u32 %v2610, 2147483648
        %v2613 = vxor.u32 %v2611, 2147483648
        %v2614 = vmul.f32 %v2612, 1.442695
        %v2615 = vpow.pop %v2614
        %v2616 = vmul.f32 %v2613, 1.442695
        %v2617 = vpow.pop %v2616
        %v2618 = vadd.f32 %v2615, 1.0
        %v2619 = vadd.f32 %v2617, 1.0
        %v2620 = vrcp.pop %v2618
        %v2621 = vmul.f32 1.0, %v2620
        %v2622 = vrcp.pop %v2619
        %v2623 = vmul.f32 1.0, %v2622
        %v2624 = vadd.f32 %v2563, %v1138
        %v2625 = vmul.f32 %v2621, %v2624
        %v2626 = vadd.f32 %v1905, %v2625
        %v2627 = vtanh.pop %v2626
        %v2628 = vsub.f32 %v1877, %v2627
        %v2629 = vmul.f32 %v2623, %v2628
        %v2630 = vadd.f32 %v2627, %v2629
        %v2631 = vadd.f32 %v1906, %v2565
        %v2632 = vadd.f32 %v1907, %v2604
        %v2633 = vxor.u32 %v2631, 2147483648
        %v2634 = vxor.u32 %v2632, 2147483648
        %v2635 = vmul.f32 %v2633, 1.442695
        %v2636 = vpow.pop %v2635
        %v2637 = vmul.f32 %v2634, 1.442695
        %v2638 = vpow.pop %v2637
        %v2639 = vadd.f32 %v2636, 1.0
        %v2640 = vadd.f32 %v2638, 1.0
        %v2641 = vrcp.pop %v2639
        %v2642 = vmul.f32 1.0, %v2641
        %v2643 = vrcp.pop %v2640
        %v2644 = vmul.f32 1.0, %v2643
        %v2645 = vadd.f32 %v2606, %v1145
        %v2646 = vmul.f32 %v2642, %v2645
        %v2647 = vadd.f32 %v1908, %v2646
        %v2648 = vtanh.pop %v2647
        %v2649 = vsub.f32 %v1898, %v2648
        %v2650 = vmul.f32 %v2644, %v2649
        %v2651 = vadd.f32 %v2648, %v2650
        %s2652 = scalar_lea.vmem %s565, 8
        %2653 = vst [vmem:[%s2652] sm:$0xff] %v2630
        %2654 = vst [vmem:[%s572] sm:$0xff] %v2651
        %2655 = vst [vmem:[#allocation4] sm:$0xff] %v2630
        %2656 = vst [vmem:[#allocation4 + $0x8] sm:$0xff] %v2651
        %p2657 = scmp.eq.s32.totalorder %s29, 3
        // Predicated region
        $region89: #{encoder_forward.1} parent=67 // pred_check
          %p2658 = pneg %p2657
        $region90: #{encoder_forward.1} parent=67 // pred_check_branch
          %2660 = sbr.rel (%p2658) target = $region92
        $region91: #{encoder_forward.1} parent=67 // pred_region
          %v2661 = vpack.c.bf16 %v2630, %v2630
          %v2662 = vld [vmem:[#allocation9] sm:$0xf]
          %v2663 = vld [vmem:[#allocation9 + $0x4] sm:$0xf]
          %v2664 = vld [vmem:[#allocation9 + $0x8] sm:$0xf]
          %v2665 = vld [vmem:[#allocation9 + $0xc] sm:$0xf]
          %v2666 = vld [vmem:[#allocation9 + $0x10] sm:$0xf]
          %v2667 = vld [vmem:[#allocation9 + $0x14] sm:$0xf]
          %v2668 = vld [vmem:[#allocation9 + $0x18] sm:$0xf]
          %v2669 = vld [vmem:[#allocation9 + $0x1c] sm:$0xf]
          %v2670 = vld [vmem:[#allocation9 + $0x20] sm:$0xf]
          %v2671 = vld [vmem:[#allocation9 + $0x24] sm:$0xf]
          %v2672 = vld [vmem:[#allocation9 + $0x28] sm:$0xf]
          %v2673 = vld [vmem:[#allocation9 + $0x2c] sm:$0xf]
          %v2674 = vld [vmem:[#allocation9 + $0x30] sm:$0xf]
          %v2675 = vld [vmem:[#allocation9 + $0x34] sm:$0xf]
          %v2676 = vld [vmem:[#allocation9 + $0x38] sm:$0xf]
          %v2677 = vld [vmem:[#allocation9 + $0x3c] sm:$0xf]
          %v2678 = vpack.c.bf16 %v2651, %v2651
          %v2679 = vld [vmem:[#allocation10] sm:$0xf]
          %v2680 = vld [vmem:[#allocation10 + $0x4] sm:$0xf]
          %v2681 = vld [vmem:[#allocation10 + $0x8] sm:$0xf]
          %v2682 = vld [vmem:[#allocation10 + $0xc] sm:$0xf]
          %v2683 = vld [vmem:[#allocation10 + $0x10] sm:$0xf]
          %v2684 = vld [vmem:[#allocation10 + $0x14] sm:$0xf]
          %v2685 = vld [vmem:[#allocation10 + $0x18] sm:$0xf]
          %v2686 = vld [vmem:[#allocation10 + $0x1c] sm:$0xf]
          %v2687 = vld [vmem:[#allocation10 + $0x20] sm:$0xf]
          %v2688 = vld [vmem:[#allocation10 + $0x24] sm:$0xf]
          %v2689 = vld [vmem:[#allocation10 + $0x28] sm:$0xf]
          %v2690 = vld [vmem:[#allocation10 + $0x2c] sm:$0xf]
          %v2691 = vld [vmem:[#allocation10 + $0x30] sm:$0xf]
          %v2692 = vld [vmem:[#allocation10 + $0x34] sm:$0xf]
          %v2693 = vld [vmem:[#allocation10 + $0x38] sm:$0xf]
          %v2694 = vld [vmem:[#allocation10 + $0x3c] sm:$0xf]
          %v2711 = vunpack.c.l.b16 %v2679
          %v2712 = vunpack.c.l.b16 %v2680
          %v2713 = vunpack.c.l.b16 %v2681
          %v2714 = vunpack.c.l.b16 %v2682
          %v2715 = vunpack.c.l.b16 %v2683
          %v2716 = vunpack.c.l.b16 %v2684
          %v2717 = vunpack.c.l.b16 %v2685
          %v2718 = vunpack.c.l.b16 %v2686
          %v2719 = vunpack.c.l.b16 %v2687
          %v2720 = vunpack.c.l.b16 %v2688
          %v2721 = vunpack.c.l.b16 %v2689
          %v2722 = vunpack.c.l.b16 %v2690
          %v2723 = vunpack.c.l.b16 %v2691
          %v2724 = vunpack.c.l.b16 %v2692
          %v2725 = vunpack.c.l.b16 %v2693
          %v2726 = vunpack.c.l.b16 %v2694
          %v2727 = vpack.c.b16 %v2712, %v2711
          %v2728 = vpack.c.b16 %v2714, %v2713
          %v2729 = vpack.c.b16 %v2716, %v2715
          %v2730 = vpack.c.b16 %v2718, %v2717
          %v2731 = vpack.c.b16 %v2720, %v2719
          %v2732 = vpack.c.b16 %v2722, %v2721
          %v2733 = vpack.c.b16 %v2724, %v2723
          %v2734 = vpack.c.b16 %v2726, %v2725
          %2743 = vmatprep.subr.bf16.mxu0 0
          %2744 = vmatpush1.bf16.msra.mxu0 %v2727
          %2745 = vmatprep.subr.bf16.mxu0 0
          %2746 = vmatpush1.bf16.msra.mxu0 %v2728
          %2747 = vmatprep.subr.bf16.mxu0 0
          %2748 = vmatpush1.bf16.msra.mxu0 %v2729
          %2749 = vmatprep.subr.bf16.mxu0 0
          %2750 = vmatpush1.bf16.msra.mxu0 %v2730
          %2751 = vmatprep.subr.bf16.mxu0 0
          %2752 = vmatpush1.bf16.msra.mxu0 %v2731
          %2753 = vmatprep.subr.bf16.mxu0 0
          %2754 = vmatpush1.bf16.msra.mxu0 %v2732
          %2755 = vmatprep.subr.bf16.mxu0 0
          %2756 = vmatpush1.bf16.msra.mxu0 %v2733
          %2757 = vmatprep.subr.bf16.mxu0 0
          %2758 = vmatpush1.bf16.msra.mxu0 %v2734
          %2759 = vmatprep.subr.bf16.mxu0 0
          %2760 = vmatpush1.bf16.msra.mxu0 0
          %2761 = vmatprep.subr.bf16.mxu0 0
          %2762 = vmatpush1.bf16.msra.mxu0 0
          %2763 = vmatprep.subr.bf16.mxu0 0
          %2764 = vmatpush1.bf16.msra.mxu0 0
          %2765 = vmatprep.subr.bf16.mxu0 0
          %2766 = vmatpush1.bf16.msra.mxu0 0
          %2767 = vmatprep.subr.bf16.mxu0 0
          %2768 = vmatpush1.bf16.msra.mxu0 0
          %2769 = vmatprep.subr.bf16.mxu0 0
          %2770 = vmatpush1.bf16.msra.mxu0 0
          %2771 = vmatprep.subr.bf16.mxu0 0
          %2772 = vmatpush1.bf16.msra.mxu0 0
          %2773 = vmatprep.subr.bf16.mxu0 0
          %2774 = vmatpush1.bf16.msra.mxu0 0
          %2775 = vmatprep.mubr.bf16.mxu0 0
          %2776 = vmatmul.mubr.bf16.gmra.mrb[0].mxu0 %v2678
          %v2777 = vpop.f32.mrb[0].mxu0
          %v2778 = vadd.f32 0.0, %v2777
          %v2779 = vpop.f32.mrb[0].mxu0
          %v2780 = vpop.f32.mrb[0].mxu0
          %v2781 = vpop.f32.mrb[0].mxu0
          %2782 = vdwg.mxu0
          %v2799 = vunpack.c.l.b16 %v2662
          %v2800 = vunpack.c.l.b16 %v2663
          %v2801 = vunpack.c.l.b16 %v2664
          %v2802 = vunpack.c.l.b16 %v2665
          %v2803 = vunpack.c.l.b16 %v2666
          %v2804 = vunpack.c.l.b16 %v2667
          %v2805 = vunpack.c.l.b16 %v2668
          %v2806 = vunpack.c.l.b16 %v2669
          %v2807 = vunpack.c.l.b16 %v2670
          %v2808 = vunpack.c.l.b16 %v2671
          %v2809 = vunpack.c.l.b16 %v2672
          %v2810 = vunpack.c.l.b16 %v2673
          %v2811 = vunpack.c.l.b16 %v2674
          %v2812 = vunpack.c.l.b16 %v2675
          %v2813 = vunpack.c.l.b16 %v2676
          %v2814 = vunpack.c.l.b16 %v2677
          %v2815 = vpack.c.b16 %v2800, %v2799
          %v2816 = vpack.c.b16 %v2802, %v2801
          %v2817 = vpack.c.b16 %v2804, %v2803
          %v2818 = vpack.c.b16 %v2806, %v2805
          %v2819 = vpack.c.b16 %v2808, %v2807
          %v2820 = vpack.c.b16 %v2810, %v2809
          %v2821 = vpack.c.b16 %v2812, %v2811
          %v2822 = vpack.c.b16 %v2814, %v2813
          %2831 = vmatprep.subr.bf16.mxu0 0
          %2832 = vmatpush1.bf16.msra.mxu0 %v2815
          %2833 = vmatprep.subr.bf16.mxu0 0
          %2834 = vmatpush1.bf16.msra.mxu0 %v2816
          %2835 = vmatprep.subr.bf16.mxu0 0
          %2836 = vmatpush1.bf16.msra.mxu0 %v2817
          %2837 = vmatprep.subr.bf16.mxu0 0
          %2838 = vmatpush1.bf16.msra.mxu0 %v2818
          %2839 = vmatprep.subr.bf16.mxu0 0
          %2840 = vmatpush1.bf16.msra.mxu0 %v2819
          %2841 = vmatprep.subr.bf16.mxu0 0
          %2842 = vmatpush1.bf16.msra.mxu0 %v2820
          %2843 = vmatprep.subr.bf16.mxu0 0
          %2844 = vmatpush1.bf16.msra.mxu0 %v2821
          %2845 = vmatprep.subr.bf16.mxu0 0
          %2846 = vmatpush1.bf16.msra.mxu0 %v2822
          %2847 = vmatprep.subr.bf16.mxu0 0
          %2848 = vmatpush1.bf16.msra.mxu0 0
          %2849 = vmatprep.subr.bf16.mxu0 0
          %2850 = vmatpush1.bf16.msra.mxu0 0
          %2851 = vmatprep.subr.bf16.mxu0 0
          %2852 = vmatpush1.bf16.msra.mxu0 0
          %2853 = vmatprep.subr.bf16.mxu0 0
          %2854 = vmatpush1.bf16.msra.mxu0 0
          %2855 = vmatprep.subr.bf16.mxu0 0
          %2856 = vmatpush1.bf16.msra.mxu0 0
          %2857 = vmatprep.subr.bf16.mxu0 0
          %2858 = vmatpush1.bf16.msra.mxu0 0
          %2859 = vmatprep.subr.bf16.mxu0 0
          %2860 = vmatpush1.bf16.msra.mxu0 0
          %2861 = vmatprep.subr.bf16.mxu0 0
          %2862 = vmatpush1.bf16.msra.mxu0 0
          %2863 = vmatprep.mubr.bf16.mxu0 0
          %2864 = vmatmul.mubr.bf16.gmra.mrb[0].mxu0 %v2661
          %v2865 = vpop.f32.mrb[0].mxu0
          %v2866 = vadd.f32 %v2778, %v2865
          %v2867 = vpop.f32.mrb[0].mxu0
          %v2868 = vpop.f32.mrb[0].mxu0
          %v2869 = vpop.f32.mrb[0].mxu0
          %2870 = vdwg.mxu0
          %v2871 = vld [vmem:[%s11] sm:$0x1]
          %v2873 = vlaneseq
          %v2874 = vshrl.u32 %v2873, 7
          %v2875 = vsub.s32 0, %v2874
          %v2876 = vrot.slane %v2871, %v2875
          %v2878 = vadd.f32 %v2866, %v2876
          %v2879 = vtanh.pop %v2878
          %2880 = vst [vmem:[%s14] sm:$0xff] %v2879
        $region92: #{encoder_forward.1} parent=67 // pred_fallthru
          _
        %s2881 = smul.u32 2, %s29
        %p2882 = scmp.lt.s32.totalorder %s2881, 7
        %s2883 = scalar_select %p2882, %s2881, 7
        %s2884 = smul.addr %s2883, 8
        %s2885 = scalar_lea.vmem %s12, %s2884
        %s2886 = ssub.s32 3, %s29
        %s2887 = smul.u32 2, %s2886
        %p2888 = scmp.lt.s32.totalorder %s2887, 7
        %s2889 = scalar_select %p2888, %s2887, 7
        %s2890 = smul.addr %s2889, 8
        %s2891 = scalar_lea.vmem %s13, %s2890
        // Predicated region
        $region93: #{encoder_forward.1} parent=67 // pred_check
          %p2892 = pneg %p311
        $region94: #{encoder_forward.1} parent=67 // pred_check_branch
          %2894 = sbr.rel (%p2892) target = $region96
        $region95: #{encoder_forward.1} parent=67 // pred_region
          %s2895 = smul.u32 2, %s29
        $region96: #{encoder_forward.1} parent=67 // pred_fallthru
          _
        // Predicated region
        $region97: #{encoder_forward.1} parent=67 // pred_check
          %p2896 = pneg %p339
        $region98: #{encoder_forward.1} parent=67 // pred_check_branch
          %2898 = sbr.rel (%p2896) target = $region100
        $region99: #{encoder_forward.1} parent=67 // pred_region
          %s2899 = ssub.s32 3, %s29
          %s2900 = smul.u32 2, %s2899
        $region100: #{encoder_forward.1} parent=67 // pred_fallthru
          _
        // Predicated region
        $region101: #{encoder_forward.1} parent=67 // pred_check
          %p2901 = pneg %p360
        $region102: #{encoder_forward.1} parent=67 // pred_check_branch
          %2903 = sbr.rel (%p2901) target = $region104
        $region103: #{encoder_forward.1} parent=67 // pred_region
          _
        $region104: #{encoder_forward.1} parent=67 // pred_fallthru
          _
        // Predicated region
        $region105: #{encoder_forward.1} parent=67 // pred_check
          %p2904 = pneg %p360
        $region106: #{encoder_forward.1} parent=67 // pred_check_branch
          %2906 = sbr.rel (%p2904) target = $region108
        $region107: #{encoder_forward.1} parent=67 // pred_region
          _
        $region108: #{encoder_forward.1} parent=67 // pred_fallthru
          _
      $region68: #{encoder_forward.1} parent=5 // pred_fallthru
        _
      %p2907 = scmp.le.s32.totalorder 2, %s24
      // Predicated region
      $region109: #{encoder_forward.1} parent=5 // pred_check
        %p2908 = pneg %p2907
      $region110: #{encoder_forward.1} parent=5 // pred_check_branch
        %2910 = sbr.rel (%p2908) target = $region112
      $region111: #{encoder_forward.1} parent=5 // pred_region
        %s2911 = ssub.s32 %s24, 2
        // Predicated region
        $region113: #{encoder_forward.1} parent=111 // pred_check
          %p2912 = pneg %p317
        $region114: #{encoder_forward.1} parent=111 // pred_check_branch
          %2914 = sbr.rel (%p2912) target = $region116
        $region115: #{encoder_forward.1} parent=111 // pred_region
          %s2915 = smul.u32 2, %s30
          %p2916 = scmp.lt.s32.totalorder %s2915, 7
          %s2917 = scalar_select %p2916, %s2915, 7
          %s2918 = smul.addr %s2917, 8
          %s2919 = scalar_lea.vmem %s12, %s2918
        $region116: #{encoder_forward.1} parent=111 // pred_fallthru
          _
        // Predicated region
        $region117: #{encoder_forward.1} parent=111 // pred_check
          %p2920 = pneg %p345
        $region118: #{encoder_forward.1} parent=111 // pred_check_branch
          %2922 = sbr.rel (%p2920) target = $region120
        $region119: #{encoder_forward.1} parent=111 // pred_region
          %s2923 = ssub.s32 3, %s30
          %s2924 = smul.u32 2, %s2923
          %p2925 = scmp.lt.s32.totalorder %s2924, 7
          %s2926 = scalar_select %p2925, %s2924, 7
          %s2927 = smul.addr %s2926, 8
          %s2928 = scalar_lea.vmem %s13, %s2927
        $region120: #{encoder_forward.1} parent=111 // pred_fallthru
          _
      $region112: #{encoder_forward.1} parent=5 // pred_fallthru
        _
    $region6: #{encoder_forward.1} parent=1 // loop_footer
      %s28 = sadd.s32 1, %s24
    $region7: #{encoder_forward.1} parent=1 // loop_footer_branch
      %23 = sbr.rel target = $region3
    $region8: #{encoder_forward.1} parent=1 // loop_exit
      _
    %2929 = vsyncpa [#allocation6], 1
    %s2930 = scalar_lea.sflag [#allocation6], 1
    %2931 = vsyncpa %s2930, 1
    %2932 = vsyncpa [#allocation8], 1
    %2933 = vsyncpa [#allocation11], 1

</llo_original>
